<compile_context>
chip_gen: v7x
topology: tpu7x:2x2x1
jax: 0.10.0
libtpu: 0.0.40
codegen_flags: <defaults>
</compile_context>

<pallas_src>
import functools

import jax
import jax.numpy as jnp
from jax import lax
from jax.experimental import pallas as pl
from jax.experimental.pallas import tpu as pltpu

EMBEDDING_SIZE = 64
RNN_EMBEDDING_SIZE = 32
NUM_GRU_LAYERS = 2
GATE_STRIDE = 128          # each GRU gate (width H=32) gets its own 128-lane block


# ----------------------------- Pallas kernel --------------------------------
def _gru_q_kernel(
    x2d_ref,      # (T*BP, I)                time-major, tile-padded inputs
    h0_ref,       # (2, B, H)                initial hidden state
    wa_ref,       # (rows_emb + E, 3G)       [w_emb (I,E) | 0 ; wih0 gate-padded]
    wb_ref,       # (H, 9G + O)              [wih1_gp | whh0_gp | whh1_gp | wq]
    bias_ref,     # (8, 6G)                  rows: b_emb, bih0_gp, [bih1_gp|bhh0_gp], bhh1_gp, bq
    q_ref,        # (T*BP, O)                Q values (padded rows sliced host-side)
    hn_ref,       # (2, B, H)                final hidden state
    gi0_ref,      # VMEM scratch (T*BP, 3G)  layer-0 input gates, all timesteps
    ys_ref,       # VMEM scratch (T*BP, H)   h2 history (Q-head LHS)
    *, T, B, BP, H, E, I, O, G, rows_emb,
):
    G3 = 3 * G

    # ---------- batched prologue: all recurrence-independent work -------------
    x2d = x2d_ref[...]                                                  # (T*BP, I)
    emb = jnp.maximum(
        jnp.dot(x2d, wa_ref[0:I, 0:E], preferred_element_type=jnp.float32)
        + bias_ref[0:1, 0:E],
        0.0,
    )                                                                   # (T*BP, E)
    # layer-0 input gates for every timestep (gate blocks 128-lane padded) [R5]
    gi0_ref[...] = (
        jnp.dot(emb, wa_ref[rows_emb:rows_emb + E, :],
                preferred_element_type=jnp.float32)
        + bias_ref[1:2, 0:G3]
    )                                                                   # (T*BP, 3G)

    # small per-step biases, read once
    b_fused = bias_ref[2:3, 0:2 * G3]          # [bih1 | bhh0]
    b_hh1 = bias_ref[3:4, 0:G3]

    h1 = h0_ref[0]                              # (B, H)
    h2 = h0_ref[1]                              # (B, H)

    # gh0 for step 0; every later gh0 arrives fused with the previous step's gi1 [R3]
    gh0 = (jnp.dot(h1, wb_ref[:, G3:2 * G3], preferred_element_type=jnp.float32)
           + bias_ref[2:3, G3:2 * G3])          # (B, 3G)

    def cell(gi, gh, h):
        # merged r/z sigmoid over the first two gate blocks [R4]; all gate slices
        # start at lane offsets 0 / 128 / 256 -> no cross-lane rotates [R5]
        sig = jax.nn.sigmoid(gi[:, :2 * G] + gh[:, :2 * G])
        r = sig[:, 0:H]
        z = sig[:, G:G + H]
        n = jnp.tanh(gi[:, 2 * G:2 * G + H] + r * gh[:, 2 * G:2 * G + H])
        return (1.0 - z) * n + z * h

    ys_ref[...] = jnp.zeros_like(ys_ref)

    # ---------- serial recurrence, fully unrolled (T static & tiny) -----------
    for t in range(T):
        row = t * BP
        gi0 = gi0_ref[row:row + B, :]            # tile-aligned (B, 3G) read [R7]

        # gh1 depends only on h2_{t-1} -> off the h1 critical chain [R2]
        gh1 = (jnp.dot(h2, wb_ref[:, 2 * G3:3 * G3],
                       preferred_element_type=jnp.float32) + b_hh1)

        # GRU layer 0 (no matmul on this dependency edge: gi0 & gh0 precomputed)
        h1 = cell(gi0, gh0, h1)

        # one fused MXU push: this step's gi1 AND next step's gh0 [R3]
        fused = (jnp.dot(h1, wb_ref[:, 0:2 * G3],
                         preferred_element_type=jnp.float32) + b_fused)
        gi1 = fused[:, 0:G3]
        gh0 = fused[:, G3:2 * G3]

        # GRU layer 1
        h2 = cell(gi1, gh1, h2)
        ys_ref[row:row + B, :] = h2              # tile-aligned store, bounds live range [R6]

    # ---------- batched Q head: one matmul over the whole h2-history slab -----
    q = (jnp.dot(ys_ref[...], wb_ref[:, 3 * G3:3 * G3 + O],
                 preferred_element_type=jnp.float32) + bias_ref[4:5, 0:O])
    q_ref[...] = q.astype(q_ref.dtype)           # O=4 -> masked store; off critical path [R10]

    hn_ref[0] = h1
    hn_ref[1] = h2


# --------------------------- host-side packing [R1] ---------------------------
def _gate_pad(w):
    """(K, 3H) with gate order [r|z|n] -> (K, 3*G): each gate at a 128-lane block start."""
    K, threeH = w.shape
    H = threeH // 3
    G = GATE_STRIDE
    out = jnp.zeros((K, 3 * G), jnp.float32)
    for g in range(3):
        out = out.at[:, g * G:g * G + H].set(w[:, g * H:(g + 1) * H])
    return out


def pack_params(params):
    H, E, G = RNN_EMBEDDING_SIZE, EMBEDDING_SIZE, GATE_STRIDE
    G3 = 3 * G
    I = params["w_emb"].shape[0]
    O = params["wq"].shape[1]
    rows_emb = -(-I // 8) * 8                      # round I up to a sublane tile

    # Slab A: prologue weights  [w_emb ; wih0 (gate padded)]
    wa = jnp.zeros((rows_emb + E, G3), jnp.float32)
    wa = wa.at[0:I, 0:E].set(params["w_emb"])
    wa = wa.at[rows_emb:rows_emb + E, :].set(_gate_pad(params["wih0"]))

    # Slab B: recurrent weights (all K = H)  [wih1 | whh0 | whh1 | wq]
    wb = jnp.concatenate(
        [_gate_pad(params["wih1"]), _gate_pad(params["whh0"]),
         _gate_pad(params["whh1"]), params["wq"].astype(jnp.float32)], axis=1)

    # Bias slab: one (8, 6G) tile, one row per bias group
    bias = jnp.zeros((8, 2 * G3), jnp.float32)
    bias = bias.at[0:1, 0:E].set(params["b_emb"])
    bias = bias.at[1:2, 0:G3].set(_gate_pad(params["bih0"]))
    bias = bias.at[2:3, 0:G3].set(_gate_pad(params["bih1"]))
    bias = bias.at[2:3, G3:2 * G3].set(_gate_pad(params["bhh0"]))
    bias = bias.at[3:4, 0:G3].set(_gate_pad(params["bhh1"]))
    bias = bias.at[4:5, 0:O].set(params["bq"])

    return {"wa": wa, "wb": wb, "bias": bias}


# --------------------------------- wrapper ------------------------------------
def gru_q_net_forward(x, h0, packed):
    """x: (B, T, input_size) f32, h0: (2, B, H) f32. Returns (q (B,T,O), h_n (2,B,H))."""
    B, T, I = x.shape
    H, E, G = RNN_EMBEDDING_SIZE, EMBEDDING_SIZE, GATE_STRIDE
    wa, wb, bias = packed["wa"], packed["wb"], packed["bias"]
    O = wb.shape[1] - 9 * G
    rows_emb = wa.shape[0] - E
    BP = -(-B // 8) * 8                            # pad batch rows to a sublane tile [R7]

    # time-major rows, timestep t occupies rows [t*BP, t*BP+B)
    x_tm = jnp.swapaxes(x, 0, 1)                   # (T, B, I)
    x_tm = jnp.pad(x_tm, ((0, 0), (0, BP - B), (0, 0)))
    x2d = x_tm.reshape(T * BP, I)

    kernel = functools.partial(_gru_q_kernel, T=T, B=B, BP=BP, H=H, E=E, I=I,
                               O=O, G=G, rows_emb=rows_emb)

    q2d, h_n = pl.pallas_call(
        kernel,
        out_shape=(
            jax.ShapeDtypeStruct((T * BP, O), jnp.float32),
            jax.ShapeDtypeStruct((NUM_GRU_LAYERS, B, H), jnp.float32),
        ),
        scratch_shapes=[
            pltpu.VMEM((T * BP, 3 * G), jnp.float32),   # gi0 for all timesteps
            pltpu.VMEM((T * BP, H), jnp.float32),       # h2 history (Q-head LHS)
        ],
    )(x2d, h0, wa, wb, bias)

    q = jnp.swapaxes(q2d.reshape(T, BP, O)[:, :B, :], 0, 1)   # (B, T, O)
    return q, h_n


# --------------------------- pure-JAX reference ------------------------------
def gru_q_net_ref(x, h0, params):
    H = RNN_EMBEDDING_SIZE
    emb = jax.nn.relu(x @ params["w_emb"] + params["b_emb"])      # (B, T, E)

    def cell(xt, h, wih, whh, bih, bhh):
        gi = xt @ wih + bih
        gh = h @ whh + bhh
        r = jax.nn.sigmoid(gi[:, :H] + gh[:, :H])
        z = jax.nn.sigmoid(gi[:, H:2 * H] + gh[:, H:2 * H])
        n = jnp.tanh(gi[:, 2 * H:] + r * gh[:, 2 * H:])
        return (1.0 - z) * n + z * h

    def step(carry, xt):
        h1, h2 = carry
        h1 = cell(xt, h1, params["wih0"], params["whh0"], params["bih0"], params["bhh0"])
        h2 = cell(h1, h2, params["wih1"], params["whh1"], params["bih1"], params["bhh1"])
        return (h1, h2), h2

    xs = jnp.swapaxes(emb, 0, 1)                                  # (T, B, E)
    (h1, h2), ys = lax.scan(step, (h0[0], h0[1]), xs)
    q = jnp.swapaxes(ys, 0, 1) @ params["wq"] + params["bq"]
    return q, jnp.stack([h1, h2])


# --------------------------------- main --------------------------------------
def make_params(key, input_size, output_size):
    H, E = RNN_EMBEDDING_SIZE, EMBEDDING_SIZE
    keys = jax.random.split(key, 16)
    n = lambda k, shape: (0.1 * jax.random.normal(k, shape)).astype(jnp.float32)
    return {
        "w_emb": n(keys[0], (input_size, E)),
        "b_emb": n(keys[1], (1, E)),
        "wih0": n(keys[2], (E, 3 * H)),
        "whh0": n(keys[3], (H, 3 * H)),
        "bih0": n(keys[4], (1, 3 * H)),
        "bhh0": n(keys[5], (1, 3 * H)),
        "wih1": n(keys[6], (H, 3 * H)),
        "whh1": n(keys[7], (H, 3 * H)),
        "bih1": n(keys[8], (1, 3 * H)),
        "bhh1": n(keys[9], (1, 3 * H)),
        "wq": n(keys[10], (H, output_size)),
        "bq": n(keys[11], (1, output_size)),
    }


if __name__ == "__main__":
    B, T, INPUT_SIZE, OUTPUT_SIZE = 2, 8, 16, 4

    key = jax.random.PRNGKey(0)
    k_x, k_h, k_p = jax.random.split(key, 3)

    x = jax.random.normal(k_x, (B, T, INPUT_SIZE), dtype=jnp.float32)
    h0 = jax.random.normal(k_h, (NUM_GRU_LAYERS, B, RNN_EMBEDDING_SIZE), dtype=jnp.float32)
    params = make_params(k_p, INPUT_SIZE, OUTPUT_SIZE)

    packed = pack_params(params)          # one-time operand packing [R1]
    q, h_n = jax.jit(gru_q_net_forward)(x, h0, packed)
    jax.block_until_ready((q, h_n))

    q_ref, h_n_ref = gru_q_net_ref(x, h0, params)
    assert q.shape == (B, T, OUTPUT_SIZE)
    assert h_n.shape == (NUM_GRU_LAYERS, B, RNN_EMBEDDING_SIZE)
    assert jnp.allclose(q, q_ref, atol=1e-4, rtol=1e-4)
    assert jnp.allclose(h_n, h_n_ref, atol=1e-4, rtol=1e-4)

    print("KERNEL_OK")
</pallas_src>

<mosaic_0001>
module attributes {stable_mosaic.version = 11 : i64} {
  func.func @_gru_q_kernel(%arg0: memref<64x16xf32, #tpu.memory_space<vmem>>, %arg1: memref<2x2x32xf32, #tpu.memory_space<vmem>>, %arg2: memref<80x384xf32, #tpu.memory_space<vmem>>, %arg3: memref<32x1156xf32, #tpu.memory_space<vmem>>, %arg4: memref<8x768xf32, #tpu.memory_space<vmem>>, %arg5: memref<64x4xf32, #tpu.memory_space<vmem>>, %arg6: memref<2x2x32xf32, #tpu.memory_space<vmem>>, %arg7: memref<64x384xf32, #tpu.memory_space<vmem>>, %arg8: memref<64x32xf32, #tpu.memory_space<vmem>>) attributes {dimension_semantics = [], scalar_prefetch = 0 : i64, scratch_operands = 2 : i64, tpu.core_type = #tpu.core_type<tc>} {
    %c0 = arith.constant 0 : index
    %c0_0 = arith.constant 0 : index
    %0 = vector.load %arg0[%c0, %c0_0] : memref<64x16xf32, #tpu.memory_space<vmem>>, vector<64x16xf32>
    %c0_1 = arith.constant 0 : index
    %c0_2 = arith.constant 0 : index
    %1 = vector.load %arg2[%c0_1, %c0_2] : memref<80x384xf32, #tpu.memory_space<vmem>>, vector<16x64xf32>
    %cst = arith.constant dense<0.000000e+00> : vector<64x64xf32>
    %2 = tpu.matmul %0, %1, %cst {dimension_numbers = #tpu.dot_dimension_numbers<[1], [0], [0], [1], [0, 0, 1, 1], [], []>} : vector<64x16xf32>, vector<16x64xf32>, vector<64x64xf32> -> vector<64x64xf32>
    %c0_3 = arith.constant 0 : index
    %c0_4 = arith.constant 0 : index
    %3 = vector.load %arg4[%c0_3, %c0_4] : memref<8x768xf32, #tpu.memory_space<vmem>>, vector<1x64xf32>
    %4 = vector.broadcast %3 : vector<1x64xf32> to vector<64x64xf32>
    %5 = arith.addf %2, %4 : vector<64x64xf32>
    %cst_5 = arith.constant 0.000000e+00 : f32
    %6 = vector.broadcast %cst_5 : f32 to vector<64x64xf32>
    %7 = arith.maximumf %5, %6 : vector<64x64xf32>
    %c16 = arith.constant 16 : index
    %c0_6 = arith.constant 0 : index
    %8 = vector.load %arg2[%c16, %c0_6] : memref<80x384xf32, #tpu.memory_space<vmem>>, vector<64x384xf32>
    %cst_7 = arith.constant dense<0.000000e+00> : vector<64x384xf32>
    %9 = tpu.matmul %7, %8, %cst_7 {dimension_numbers = #tpu.dot_dimension_numbers<[1], [0], [0], [1], [0, 0, 1, 1], [], []>} : vector<64x64xf32>, vector<64x384xf32>, vector<64x384xf32> -> vector<64x384xf32>
    %c1 = arith.constant 1 : index
    %c0_8 = arith.constant 0 : index
    %10 = vector.load %arg4[%c1, %c0_8] : memref<8x768xf32, #tpu.memory_space<vmem>>, vector<1x384xf32>
    %11 = vector.broadcast %10 : vector<1x384xf32> to vector<64x384xf32>
    %12 = arith.addf %9, %11 : vector<64x384xf32>
    %c0_9 = arith.constant 0 : index
    %c0_10 = arith.constant 0 : index
    %13 = vector.load %arg7[%c0_9, %c0_10] : memref<64x384xf32, #tpu.memory_space<vmem>>, vector<64x384xf32>
    tpu.vector_store %arg7[%c0_9, %c0_10], %12 {strides = array<i32>} : memref<64x384xf32, #tpu.memory_space<vmem>>, vector<64x384xf32>,
    %c2 = arith.constant 2 : index
    %c0_11 = arith.constant 0 : index
    %14 = vector.load %arg4[%c2, %c0_11] : memref<8x768xf32, #tpu.memory_space<vmem>>, vector<1x768xf32>
    %c3 = arith.constant 3 : index
    %c0_12 = arith.constant 0 : index
    %15 = vector.load %arg4[%c3, %c0_12] : memref<8x768xf32, #tpu.memory_space<vmem>>, vector<1x384xf32>
    %c0_13 = arith.constant 0 : index
    %c0_14 = arith.constant 0 : index
    %c0_15 = arith.constant 0 : index
    %16 = vector.load %arg1[%c0_13, %c0_14, %c0_15] : memref<2x2x32xf32, #tpu.memory_space<vmem>>, vector<1x2x32xf32>
    %17 = vector.shape_cast %16 : vector<1x2x32xf32> to vector<2x32xf32>
    %c1_16 = arith.constant 1 : index
    %c0_17 = arith.constant 0 : index
    %c0_18 = arith.constant 0 : index
    %18 = vector.load %arg1[%c1_16, %c0_17, %c0_18] : memref<2x2x32xf32, #tpu.memory_space<vmem>>, vector<1x2x32xf32>
    %19 = vector.shape_cast %18 : vector<1x2x32xf32> to vector<2x32xf32>
    %c0_19 = arith.constant 0 : index
    %c384 = arith.constant 384 : index
    %20 = vector.load %arg3[%c0_19, %c384] : memref<32x1156xf32, #tpu.memory_space<vmem>>, vector<32x384xf32>
    %cst_20 = arith.constant dense<0.000000e+00> : vector<2x384xf32>
    %21 = tpu.matmul %17, %20, %cst_20 {dimension_numbers = #tpu.dot_dimension_numbers<[1], [0], [0], [1], [0, 0, 1, 1], [], []>} : vector<2x32xf32>, vector<32x384xf32>, vector<2x384xf32> -> vector<2x384xf32>
    %c2_21 = arith.constant 2 : index
    %c384_22 = arith.constant 384 : index
    %22 = vector.load %arg4[%c2_21, %c384_22] : memref<8x768xf32, #tpu.memory_space<vmem>>, vector<1x384xf32>
    %23 = vector.broadcast %22 : vector<1x384xf32> to vector<2x384xf32>
    %24 = arith.addf %21, %23 : vector<2x384xf32>
    %cst_23 = arith.constant 0.000000e+00 : f32
    %25 = vector.broadcast %cst_23 : f32 to vector<64x32xf32>
    %c0_24 = arith.constant 0 : index
    %c0_25 = arith.constant 0 : index
    %26 = vector.load %arg8[%c0_24, %c0_25] : memref<64x32xf32, #tpu.memory_space<vmem>>, vector<64x32xf32>
    tpu.vector_store %arg8[%c0_24, %c0_25], %25 {strides = array<i32>} : memref<64x32xf32, #tpu.memory_space<vmem>>, vector<64x32xf32>,
    %c0_26 = arith.constant 0 : index
    %c0_27 = arith.constant 0 : index
    %27 = vector.load %arg7[%c0_26, %c0_27] : memref<64x384xf32, #tpu.memory_space<vmem>>, vector<2x384xf32>
    %c0_28 = arith.constant 0 : index
    %c768 = arith.constant 768 : index
    %28 = vector.load %arg3[%c0_28, %c768] : memref<32x1156xf32, #tpu.memory_space<vmem>>, vector<32x384xf32>
    %cst_29 = arith.constant dense<0.000000e+00> : vector<2x384xf32>
    %29 = tpu.matmul %19, %28, %cst_29 {dimension_numbers = #tpu.dot_dimension_numbers<[1], [0], [0], [1], [0, 0, 1, 1], [], []>} : vector<2x32xf32>, vector<32x384xf32>, vector<2x384xf32> -> vector<2x384xf32>
    %30 = vector.broadcast %15 : vector<1x384xf32> to vector<2x384xf32>
    %31 = arith.addf %29, %30 : vector<2x384xf32>
    %32 = vector.extract_strided_slice %27 {offsets = [0, 0], sizes = [2, 256], strides = [1, 1]} : vector<2x384xf32> to vector<2x256xf32>
    %33 = vector.extract_strided_slice %24 {offsets = [0, 0], sizes = [2, 256], strides = [1, 1]} : vector<2x384xf32> to vector<2x256xf32>
    %34 = arith.addf %32, %33 : vector<2x256xf32>
    %35 = arith.negf %34 : vector<2x256xf32>
    %36 = math.exp %35 : vector<2x256xf32>
    %cst_30 = arith.constant 1.000000e+00 : f32
    %37 = vector.broadcast %cst_30 : f32 to vector<2x256xf32>
    %38 = arith.addf %37, %36 : vector<2x256xf32>
    %39 = arith.divf %37, %38 : vector<2x256xf32>
    %40 = vector.extract_strided_slice %39 {offsets = [0, 0], sizes = [2, 32], strides = [1, 1]} : vector<2x256xf32> to vector<2x32xf32>
    %41 = vector.extract_strided_slice %39 {offsets = [0, 128], sizes = [2, 32], strides = [1, 1]} : vector<2x256xf32> to vector<2x32xf32>
    %42 = vector.extract_strided_slice %27 {offsets = [0, 256], sizes = [2, 32], strides = [1, 1]} : vector<2x384xf32> to vector<2x32xf32>
    %43 = vector.extract_strided_slice %24 {offsets = [0, 256], sizes = [2, 32], strides = [1, 1]} : vector<2x384xf32> to vector<2x32xf32>
    %44 = arith.mulf %40, %43 : vector<2x32xf32>
    %45 = arith.addf %42, %44 : vector<2x32xf32>
    %46 = math.tanh %45 : vector<2x32xf32>
    %cst_31 = arith.constant 1.000000e+00 : f32
    %47 = vector.broadcast %cst_31 : f32 to vector<2x32xf32>
    %48 = arith.subf %47, %41 : vector<2x32xf32>
    %49 = arith.mulf %48, %46 : vector<2x32xf32>
    %50 = arith.mulf %41, %17 : vector<2x32xf32>
    %51 = arith.addf %49, %50 : vector<2x32xf32>
    %c0_32 = arith.constant 0 : index
    %c0_33 = arith.constant 0 : index
    %52 = vector.load %arg3[%c0_32, %c0_33] : memref<32x1156xf32, #tpu.memory_space<vmem>>, vector<32x768xf32>
    %cst_34 = arith.constant dense<0.000000e+00> : vector<2x768xf32>
    %53 = tpu.matmul %51, %52, %cst_34 {dimension_numbers = #tpu.dot_dimension_numbers<[1], [0], [0], [1], [0, 0, 1, 1], [], []>} : vector<2x32xf32>, vector<32x768xf32>, vector<2x768xf32> -> vector<2x768xf32>
    %54 = vector.broadcast %14 : vector<1x768xf32> to vector<2x768xf32>
    %55 = arith.addf %53, %54 : vector<2x768xf32>
    %56 = vector.extract_strided_slice %55 {offsets = [0, 0], sizes = [2, 384], strides = [1, 1]} : vector<2x768xf32> to vector<2x384xf32>
    %57 = vector.extract_strided_slice %55 {offsets = [0, 384], sizes = [2, 384], strides = [1, 1]} : vector<2x768xf32> to vector<2x384xf32>
    %58 = vector.extract_strided_slice %56 {offsets = [0, 0], sizes = [2, 256], strides = [1, 1]} : vector<2x384xf32> to vector<2x256xf32>
    %59 = vector.extract_strided_slice %31 {offsets = [0, 0], sizes = [2, 256], strides = [1, 1]} : vector<2x384xf32> to vector<2x256xf32>
    %60 = arith.addf %58, %59 : vector<2x256xf32>
    %61 = arith.negf %60 : vector<2x256xf32>
    %62 = math.exp %61 : vector<2x256xf32>
    %cst_35 = arith.constant 1.000000e+00 : f32
    %63 = vector.broadcast %cst_35 : f32 to vector<2x256xf32>
    %64 = arith.addf %63, %62 : vector<2x256xf32>
    %65 = arith.divf %63, %64 : vector<2x256xf32>
    %66 = vector.extract_strided_slice %65 {offsets = [0, 0], sizes = [2, 32], strides = [1, 1]} : vector<2x256xf32> to vector<2x32xf32>
    %67 = vector.extract_strided_slice %65 {offsets = [0, 128], sizes = [2, 32], strides = [1, 1]} : vector<2x256xf32> to vector<2x32xf32>
    %68 = vector.extract_strided_slice %56 {offsets = [0, 256], sizes = [2, 32], strides = [1, 1]} : vector<2x384xf32> to vector<2x32xf32>
    %69 = vector.extract_strided_slice %31 {offsets = [0, 256], sizes = [2, 32], strides = [1, 1]} : vector<2x384xf32> to vector<2x32xf32>
    %70 = arith.mulf %66, %69 : vector<2x32xf32>
    %71 = arith.addf %68, %70 : vector<2x32xf32>
    %72 = math.tanh %71 : vector<2x32xf32>
    %cst_36 = arith.constant 1.000000e+00 : f32
    %73 = vector.broadcast %cst_36 : f32 to vector<2x32xf32>
    %74 = arith.subf %73, %67 : vector<2x32xf32>
    %75 = arith.mulf %74, %72 : vector<2x32xf32>
    %76 = arith.mulf %67, %19 : vector<2x32xf32>
    %77 = arith.addf %75, %76 : vector<2x32xf32>
    %c0_37 = arith.constant 0 : index
    %c0_38 = arith.constant 0 : index
    %78 = vector.load %arg8[%c0_37, %c0_38] : memref<64x32xf32, #tpu.memory_space<vmem>>, vector<2x32xf32>
    tpu.vector_store %arg8[%c0_37, %c0_38], %77 {strides = array<i32>} : memref<64x32xf32, #tpu.memory_space<vmem>>, vector<2x32xf32>,
    %c8 = arith.constant 8 : index
    %c0_39 = arith.constant 0 : index
    %79 = vector.load %arg7[%c8, %c0_39] : memref<64x384xf32, #tpu.memory_space<vmem>>, vector<2x384xf32>
    %c0_40 = arith.constant 0 : index
    %c768_41 = arith.constant 768 : index
    %80 = vector.load %arg3[%c0_40, %c768_41] : memref<32x1156xf32, #tpu.memory_space<vmem>>, vector<32x384xf32>
    %cst_42 = arith.constant dense<0.000000e+00> : vector<2x384xf32>
    %81 = tpu.matmul %77, %80, %cst_42 {dimension_numbers = #tpu.dot_dimension_numbers<[1], [0], [0], [1], [0, 0, 1, 1], [], []>} : vector<2x32xf32>, vector<32x384xf32>, vector<2x384xf32> -> vector<2x384xf32>
    %82 = vector.broadcast %15 : vector<1x384xf32> to vector<2x384xf32>
    %83 = arith.addf %81, %82 : vector<2x384xf32>
    %84 = vector.extract_strided_slice %79 {offsets = [0, 0], sizes = [2, 256], strides = [1, 1]} : vector<2x384xf32> to vector<2x256xf32>
    %85 = vector.extract_strided_slice %57 {offsets = [0, 0], sizes = [2, 256], strides = [1, 1]} : vector<2x384xf32> to vector<2x256xf32>
    %86 = arith.addf %84, %85 : vector<2x256xf32>
    %87 = arith.negf %86 : vector<2x256xf32>
    %88 = math.exp %87 : vector<2x256xf32>
    %cst_43 = arith.constant 1.000000e+00 : f32
    %89 = vector.broadcast %cst_43 : f32 to vector<2x256xf32>
    %90 = arith.addf %89, %88 : vector<2x256xf32>
    %91 = arith.divf %89, %90 : vector<2x256xf32>
    %92 = vector.extract_strided_slice %91 {offsets = [0, 0], sizes = [2, 32], strides = [1, 1]} : vector<2x256xf32> to vector<2x32xf32>
    %93 = vector.extract_strided_slice %91 {offsets = [0, 128], sizes = [2, 32], strides = [1, 1]} : vector<2x256xf32> to vector<2x32xf32>
    %94 = vector.extract_strided_slice %79 {offsets = [0, 256], sizes = [2, 32], strides = [1, 1]} : vector<2x384xf32> to vector<2x32xf32>
    %95 = vector.extract_strided_slice %57 {offsets = [0, 256], sizes = [2, 32], strides = [1, 1]} : vector<2x384xf32> to vector<2x32xf32>
    %96 = arith.mulf %92, %95 : vector<2x32xf32>
    %97 = arith.addf %94, %96 : vector<2x32xf32>
    %98 = math.tanh %97 : vector<2x32xf32>
    %cst_44 = arith.constant 1.000000e+00 : f32
    %99 = vector.broadcast %cst_44 : f32 to vector<2x32xf32>
    %100 = arith.subf %99, %93 : vector<2x32xf32>
    %101 = arith.mulf %100, %98 : vector<2x32xf32>
    %102 = arith.mulf %93, %51 : vector<2x32xf32>
    %103 = arith.addf %101, %102 : vector<2x32xf32>
    %c0_45 = arith.constant 0 : index
    %c0_46 = arith.constant 0 : index
    %104 = vector.load %arg3[%c0_45, %c0_46] : memref<32x1156xf32, #tpu.memory_space<vmem>>, vector<32x768xf32>
    %cst_47 = arith.constant dense<0.000000e+00> : vector<2x768xf32>
    %105 = tpu.matmul %103, %104, %cst_47 {dimension_numbers = #tpu.dot_dimension_numbers<[1], [0], [0], [1], [0, 0, 1, 1], [], []>} : vector<2x32xf32>, vector<32x768xf32>, vector<2x768xf32> -> vector<2x768xf32>
    %106 = vector.broadcast %14 : vector<1x768xf32> to vector<2x768xf32>
    %107 = arith.addf %105, %106 : vector<2x768xf32>
    %108 = vector.extract_strided_slice %107 {offsets = [0, 0], sizes = [2, 384], strides = [1, 1]} : vector<2x768xf32> to vector<2x384xf32>
    %109 = vector.extract_strided_slice %107 {offsets = [0, 384], sizes = [2, 384], strides = [1, 1]} : vector<2x768xf32> to vector<2x384xf32>
    %110 = vector.extract_strided_slice %108 {offsets = [0, 0], sizes = [2, 256], strides = [1, 1]} : vector<2x384xf32> to vector<2x256xf32>
    %111 = vector.extract_strided_slice %83 {offsets = [0, 0], sizes = [2, 256], strides = [1, 1]} : vector<2x384xf32> to vector<2x256xf32>
    %112 = arith.addf %110, %111 : vector<2x256xf32>
    %113 = arith.negf %112 : vector<2x256xf32>
    %114 = math.exp %113 : vector<2x256xf32>
    %cst_48 = arith.constant 1.000000e+00 : f32
    %115 = vector.broadcast %cst_48 : f32 to vector<2x256xf32>
    %116 = arith.addf %115, %114 : vector<2x256xf32>
    %117 = arith.divf %115, %116 : vector<2x256xf32>
    %118 = vector.extract_strided_slice %117 {offsets = [0, 0], sizes = [2, 32], strides = [1, 1]} : vector<2x256xf32> to vector<2x32xf32>
    %119 = vector.extract_strided_slice %117 {offsets = [0, 128], sizes = [2, 32], strides = [1, 1]} : vector<2x256xf32> to vector<2x32xf32>
    %120 = vector.extract_strided_slice %108 {offsets = [0, 256], sizes = [2, 32], strides = [1, 1]} : vector<2x384xf32> to vector<2x32xf32>
    %121 = vector.extract_strided_slice %83 {offsets = [0, 256], sizes = [2, 32], strides = [1, 1]} : vector<2x384xf32> to vector<2x32xf32>
    %122 = arith.mulf %118, %121 : vector<2x32xf32>
    %123 = arith.addf %120, %122 : vector<2x32xf32>
    %124 = math.tanh %123 : vector<2x32xf32>
    %cst_49 = arith.constant 1.000000e+00 : f32
    %125 = vector.broadcast %cst_49 : f32 to vector<2x32xf32>
    %126 = arith.subf %125, %119 : vector<2x32xf32>
    %127 = arith.mulf %126, %124 : vector<2x32xf32>
    %128 = arith.mulf %119, %77 : vector<2x32xf32>
    %129 = arith.addf %127, %128 : vector<2x32xf32>
    %c8_50 = arith.constant 8 : index
    %c0_51 = arith.constant 0 : index
    %130 = vector.load %arg8[%c8_50, %c0_51] : memref<64x32xf32, #tpu.memory_space<vmem>>, vector<2x32xf32>
    tpu.vector_store %arg8[%c8_50, %c0_51], %129 {strides = array<i32>} : memref<64x32xf32, #tpu.memory_space<vmem>>, vector<2x32xf32>,
    %c16_52 = arith.constant 16 : index
    %c0_53 = arith.constant 0 : index
    %131 = vector.load %arg7[%c16_52, %c0_53] : memref<64x384xf32, #tpu.memory_space<vmem>>, vector<2x384xf32>
    %c0_54 = arith.constant 0 : index
    %c768_55 = arith.constant 768 : index
    %132 = vector.load %arg3[%c0_54, %c768_55] : memref<32x1156xf32, #tpu.memory_space<vmem>>, vector<32x384xf32>
    %cst_56 = arith.constant dense<0.000000e+00> : vector<2x384xf32>
    %133 = tpu.matmul %129, %132, %cst_56 {dimension_numbers = #tpu.dot_dimension_numbers<[1], [0], [0], [1], [0, 0, 1, 1], [], []>} : vector<2x32xf32>, vector<32x384xf32>, vector<2x384xf32> -> vector<2x384xf32>
    %134 = vector.broadcast %15 : vector<1x384xf32> to vector<2x384xf32>
    %135 = arith.addf %133, %134 : vector<2x384xf32>
    %136 = vector.extract_strided_slice %131 {offsets = [0, 0], sizes = [2, 256], strides = [1, 1]} : vector<2x384xf32> to vector<2x256xf32>
    %137 = vector.extract_strided_slice %109 {offsets = [0, 0], sizes = [2, 256], strides = [1, 1]} : vector<2x384xf32> to vector<2x256xf32>
    %138 = arith.addf %136, %137 : vector<2x256xf32>
    %139 = arith.negf %138 : vector<2x256xf32>
    %140 = math.exp %139 : vector<2x256xf32>
    %cst_57 = arith.constant 1.000000e+00 : f32
    %141 = vector.broadcast %cst_57 : f32 to vector<2x256xf32>
    %142 = arith.addf %141, %140 : vector<2x256xf32>
    %143 = arith.divf %141, %142 : vector<2x256xf32>
    %144 = vector.extract_strided_slice %143 {offsets = [0, 0], sizes = [2, 32], strides = [1, 1]} : vector<2x256xf32> to vector<2x32xf32>
    %145 = vector.extract_strided_slice %143 {offsets = [0, 128], sizes = [2, 32], strides = [1, 1]} : vector<2x256xf32> to vector<2x32xf32>
    %146 = vector.extract_strided_slice %131 {offsets = [0, 256], sizes = [2, 32], strides = [1, 1]} : vector<2x384xf32> to vector<2x32xf32>
    %147 = vector.extract_strided_slice %109 {offsets = [0, 256], sizes = [2, 32], strides = [1, 1]} : vector<2x384xf32> to vector<2x32xf32>
    %148 = arith.mulf %144, %147 : vector<2x32xf32>
    %149 = arith.addf %146, %148 : vector<2x32xf32>
    %150 = math.tanh %149 : vector<2x32xf32>
    %cst_58 = arith.constant 1.000000e+00 : f32
    %151 = vector.broadcast %cst_58 : f32 to vector<2x32xf32>
    %152 = arith.subf %151, %145 : vector<2x32xf32>
    %153 = arith.mulf %152, %150 : vector<2x32xf32>
    %154 = arith.mulf %145, %103 : vector<2x32xf32>
    %155 = arith.addf %153, %154 : vector<2x32xf32>
    %c0_59 = arith.constant 0 : index
    %c0_60 = arith.constant 0 : index
    %156 = vector.load %arg3[%c0_59, %c0_60] : memref<32x1156xf32, #tpu.memory_space<vmem>>, vector<32x768xf32>
    %cst_61 = arith.constant dense<0.000000e+00> : vector<2x768xf32>
    %157 = tpu.matmul %155, %156, %cst_61 {dimension_numbers = #tpu.dot_dimension_numbers<[1], [0], [0], [1], [0, 0, 1, 1], [], []>} : vector<2x32xf32>, vector<32x768xf32>, vector<2x768xf32> -> vector<2x768xf32>
    %158 = vector.broadcast %14 : vector<1x768xf32> to vector<2x768xf32>
    %159 = arith.addf %157, %158 : vector<2x768xf32>
    %160 = vector.extract_strided_slice %159 {offsets = [0, 0], sizes = [2, 384], strides = [1, 1]} : vector<2x768xf32> to vector<2x384xf32>
    %161 = vector.extract_strided_slice %159 {offsets = [0, 384], sizes = [2, 384], strides = [1, 1]} : vector<2x768xf32> to vector<2x384xf32>
    %162 = vector.extract_strided_slice %160 {offsets = [0, 0], sizes = [2, 256], strides = [1, 1]} : vector<2x384xf32> to vector<2x256xf32>
    %163 = vector.extract_strided_slice %135 {offsets = [0, 0], sizes = [2, 256], strides = [1, 1]} : vector<2x384xf32> to vector<2x256xf32>
    %164 = arith.addf %162, %163 : vector<2x256xf32>
    %165 = arith.negf %164 : vector<2x256xf32>
    %166 = math.exp %165 : vector<2x256xf32>
    %cst_62 = arith.constant 1.000000e+00 : f32
    %167 = vector.broadcast %cst_62 : f32 to vector<2x256xf32>
    %168 = arith.addf %167, %166 : vector<2x256xf32>
    %169 = arith.divf %167, %168 : vector<2x256xf32>
    %170 = vector.extract_strided_slice %169 {offsets = [0, 0], sizes = [2, 32], strides = [1, 1]} : vector<2x256xf32> to vector<2x32xf32>
    %171 = vector.extract_strided_slice %169 {offsets = [0, 128], sizes = [2, 32], strides = [1, 1]} : vector<2x256xf32> to vector<2x32xf32>
    %172 = vector.extract_strided_slice %160 {offsets = [0, 256], sizes = [2, 32], strides = [1, 1]} : vector<2x384xf32> to vector<2x32xf32>
    %173 = vector.extract_strided_slice %135 {offsets = [0, 256], sizes = [2, 32], strides = [1, 1]} : vector<2x384xf32> to vector<2x32xf32>
    %174 = arith.mulf %170, %173 : vector<2x32xf32>
    %175 = arith.addf %172, %174 : vector<2x32xf32>
    %176 = math.tanh %175 : vector<2x32xf32>
    %cst_63 = arith.constant 1.000000e+00 : f32
    %177 = vector.broadcast %cst_63 : f32 to vector<2x32xf32>
    %178 = arith.subf %177, %171 : vector<2x32xf32>
    %179 = arith.mulf %178, %176 : vector<2x32xf32>
    %180 = arith.mulf %171, %129 : vector<2x32xf32>
    %181 = arith.addf %179, %180 : vector<2x32xf32>
    %c16_64 = arith.constant 16 : index
    %c0_65 = arith.constant 0 : index
    %182 = vector.load %arg8[%c16_64, %c0_65] : memref<64x32xf32, #tpu.memory_space<vmem>>, vector<2x32xf32>
    tpu.vector_store %arg8[%c16_64, %c0_65], %181 {strides = array<i32>} : memref<64x32xf32, #tpu.memory_space<vmem>>, vector<2x32xf32>,
    %c24 = arith.constant 24 : index
    %c0_66 = arith.constant 0 : index
    %183 = vector.load %arg7[%c24, %c0_66] : memref<64x384xf32, #tpu.memory_space<vmem>>, vector<2x384xf32>
    %c0_67 = arith.constant 0 : index
    %c768_68 = arith.constant 768 : index
    %184 = vector.load %arg3[%c0_67, %c768_68] : memref<32x1156xf32, #tpu.memory_space<vmem>>, vector<32x384xf32>
    %cst_69 = arith.constant dense<0.000000e+00> : vector<2x384xf32>
    %185 = tpu.matmul %181, %184, %cst_69 {dimension_numbers = #tpu.dot_dimension_numbers<[1], [0], [0], [1], [0, 0, 1, 1], [], []>} : vector<2x32xf32>, vector<32x384xf32>, vector<2x384xf32> -> vector<2x384xf32>
    %186 = vector.broadcast %15 : vector<1x384xf32> to vector<2x384xf32>
    %187 = arith.addf %185, %186 : vector<2x384xf32>
    %188 = vector.extract_strided_slice %183 {offsets = [0, 0], sizes = [2, 256], strides = [1, 1]} : vector<2x384xf32> to vector<2x256xf32>
    %189 = vector.extract_strided_slice %161 {offsets = [0, 0], sizes = [2, 256], strides = [1, 1]} : vector<2x384xf32> to vector<2x256xf32>
    %190 = arith.addf %188, %189 : vector<2x256xf32>
    %191 = arith.negf %190 : vector<2x256xf32>
    %192 = math.exp %191 : vector<2x256xf32>
    %cst_70 = arith.constant 1.000000e+00 : f32
    %193 = vector.broadcast %cst_70 : f32 to vector<2x256xf32>
    %194 = arith.addf %193, %192 : vector<2x256xf32>
    %195 = arith.divf %193, %194 : vector<2x256xf32>
    %196 = vector.extract_strided_slice %195 {offsets = [0, 0], sizes = [2, 32], strides = [1, 1]} : vector<2x256xf32> to vector<2x32xf32>
    %197 = vector.extract_strided_slice %195 {offsets = [0, 128], sizes = [2, 32], strides = [1, 1]} : vector<2x256xf32> to vector<2x32xf32>
    %198 = vector.extract_strided_slice %183 {offsets = [0, 256], sizes = [2, 32], strides = [1, 1]} : vector<2x384xf32> to vector<2x32xf32>
    %199 = vector.extract_strided_slice %161 {offsets = [0, 256], sizes = [2, 32], strides = [1, 1]} : vector<2x384xf32> to vector<2x32xf32>
    %200 = arith.mulf %196, %199 : vector<2x32xf32>
    %201 = arith.addf %198, %200 : vector<2x32xf32>
    %202 = math.tanh %201 : vector<2x32xf32>
    %cst_71 = arith.constant 1.000000e+00 : f32
    %203 = vector.broadcast %cst_71 : f32 to vector<2x32xf32>
    %204 = arith.subf %203, %197 : vector<2x32xf32>
    %205 = arith.mulf %204, %202 : vector<2x32xf32>
    %206 = arith.mulf %197, %155 : vector<2x32xf32>
    %207 = arith.addf %205, %206 : vector<2x32xf32>
    %c0_72 = arith.constant 0 : index
    %c0_73 = arith.constant 0 : index
    %208 = vector.load %arg3[%c0_72, %c0_73] : memref<32x1156xf32, #tpu.memory_space<vmem>>, vector<32x768xf32>
    %cst_74 = arith.constant dense<0.000000e+00> : vector<2x768xf32>
    %209 = tpu.matmul %207, %208, %cst_74 {dimension_numbers = #tpu.dot_dimension_numbers<[1], [0], [0], [1], [0, 0, 1, 1], [], []>} : vector<2x32xf32>, vector<32x768xf32>, vector<2x768xf32> -> vector<2x768xf32>
    %210 = vector.broadcast %14 : vector<1x768xf32> to vector<2x768xf32>
    %211 = arith.addf %209, %210 : vector<2x768xf32>
    %212 = vector.extract_strided_slice %211 {offsets = [0, 0], sizes = [2, 384], strides = [1, 1]} : vector<2x768xf32> to vector<2x384xf32>
    %213 = vector.extract_strided_slice %211 {offsets = [0, 384], sizes = [2, 384], strides = [1, 1]} : vector<2x768xf32> to vector<2x384xf32>
    %214 = vector.extract_strided_slice %212 {offsets = [0, 0], sizes = [2, 256], strides = [1, 1]} : vector<2x384xf32> to vector<2x256xf32>
    %215 = vector.extract_strided_slice %187 {offsets = [0, 0], sizes = [2, 256], strides = [1, 1]} : vector<2x384xf32> to vector<2x256xf32>
    %216 = arith.addf %214, %215 : vector<2x256xf32>
    %217 = arith.negf %216 : vector<2x256xf32>
    %218 = math.exp %217 : vector<2x256xf32>
    %cst_75 = arith.constant 1.000000e+00 : f32
    %219 = vector.broadcast %cst_75 : f32 to vector<2x256xf32>
    %220 = arith.addf %219, %218 : vector<2x256xf32>
    %221 = arith.divf %219, %220 : vector<2x256xf32>
    %222 = vector.extract_strided_slice %221 {offsets = [0, 0], sizes = [2, 32], strides = [1, 1]} : vector<2x256xf32> to vector<2x32xf32>
    %223 = vector.extract_strided_slice %221 {offsets = [0, 128], sizes = [2, 32], strides = [1, 1]} : vector<2x256xf32> to vector<2x32xf32>
    %224 = vector.extract_strided_slice %212 {offsets = [0, 256], sizes = [2, 32], strides = [1, 1]} : vector<2x384xf32> to vector<2x32xf32>
    %225 = vector.extract_strided_slice %187 {offsets = [0, 256], sizes = [2, 32], strides = [1, 1]} : vector<2x384xf32> to vector<2x32xf32>
    %226 = arith.mulf %222, %225 : vector<2x32xf32>
    %227 = arith.addf %224, %226 : vector<2x32xf32>
    %228 = math.tanh %227 : vector<2x32xf32>
    %cst_76 = arith.constant 1.000000e+00 : f32
    %229 = vector.broadcast %cst_76 : f32 to vector<2x32xf32>
    %230 = arith.subf %229, %223 : vector<2x32xf32>
    %231 = arith.mulf %230, %228 : vector<2x32xf32>
    %232 = arith.mulf %223, %181 : vector<2x32xf32>
    %233 = arith.addf %231, %232 : vector<2x32xf32>
    %c24_77 = arith.constant 24 : index
    %c0_78 = arith.constant 0 : index
    %234 = vector.load %arg8[%c24_77, %c0_78] : memref<64x32xf32, #tpu.memory_space<vmem>>, vector<2x32xf32>
    tpu.vector_store %arg8[%c24_77, %c0_78], %233 {strides = array<i32>} : memref<64x32xf32, #tpu.memory_space<vmem>>, vector<2x32xf32>,
    %c32 = arith.constant 32 : index
    %c0_79 = arith.constant 0 : index
    %235 = vector.load %arg7[%c32, %c0_79] : memref<64x384xf32, #tpu.memory_space<vmem>>, vector<2x384xf32>
    %c0_80 = arith.constant 0 : index
    %c768_81 = arith.constant 768 : index
    %236 = vector.load %arg3[%c0_80, %c768_81] : memref<32x1156xf32, #tpu.memory_space<vmem>>, vector<32x384xf32>
    %cst_82 = arith.constant dense<0.000000e+00> : vector<2x384xf32>
    %237 = tpu.matmul %233, %236, %cst_82 {dimension_numbers = #tpu.dot_dimension_numbers<[1], [0], [0], [1], [0, 0, 1, 1], [], []>} : vector<2x32xf32>, vector<32x384xf32>, vector<2x384xf32> -> vector<2x384xf32>
    %238 = vector.broadcast %15 : vector<1x384xf32> to vector<2x384xf32>
    %239 = arith.addf %237, %238 : vector<2x384xf32>
    %240 = vector.extract_strided_slice %235 {offsets = [0, 0], sizes = [2, 256], strides = [1, 1]} : vector<2x384xf32> to vector<2x256xf32>
    %241 = vector.extract_strided_slice %213 {offsets = [0, 0], sizes = [2, 256], strides = [1, 1]} : vector<2x384xf32> to vector<2x256xf32>
    %242 = arith.addf %240, %241 : vector<2x256xf32>
    %243 = arith.negf %242 : vector<2x256xf32>
    %244 = math.exp %243 : vector<2x256xf32>
    %cst_83 = arith.constant 1.000000e+00 : f32
    %245 = vector.broadcast %cst_83 : f32 to vector<2x256xf32>
    %246 = arith.addf %245, %244 : vector<2x256xf32>
    %247 = arith.divf %245, %246 : vector<2x256xf32>
    %248 = vector.extract_strided_slice %247 {offsets = [0, 0], sizes = [2, 32], strides = [1, 1]} : vector<2x256xf32> to vector<2x32xf32>
    %249 = vector.extract_strided_slice %247 {offsets = [0, 128], sizes = [2, 32], strides = [1, 1]} : vector<2x256xf32> to vector<2x32xf32>
    %250 = vector.extract_strided_slice %235 {offsets = [0, 256], sizes = [2, 32], strides = [1, 1]} : vector<2x384xf32> to vector<2x32xf32>
    %251 = vector.extract_strided_slice %213 {offsets = [0, 256], sizes = [2, 32], strides = [1, 1]} : vector<2x384xf32> to vector<2x32xf32>
    %252 = arith.mulf %248, %251 : vector<2x32xf32>
    %253 = arith.addf %250, %252 : vector<2x32xf32>
    %254 = math.tanh %253 : vector<2x32xf32>
    %cst_84 = arith.constant 1.000000e+00 : f32
    %255 = vector.broadcast %cst_84 : f32 to vector<2x32xf32>
    %256 = arith.subf %255, %249 : vector<2x32xf32>
    %257 = arith.mulf %256, %254 : vector<2x32xf32>
    %258 = arith.mulf %249, %207 : vector<2x32xf32>
    %259 = arith.addf %257, %258 : vector<2x32xf32>
    %c0_85 = arith.constant 0 : index
    %c0_86 = arith.constant 0 : index
    %260 = vector.load %arg3[%c0_85, %c0_86] : memref<32x1156xf32, #tpu.memory_space<vmem>>, vector<32x768xf32>
    %cst_87 = arith.constant dense<0.000000e+00> : vector<2x768xf32>
    %261 = tpu.matmul %259, %260, %cst_87 {dimension_numbers = #tpu.dot_dimension_numbers<[1], [0], [0], [1], [0, 0, 1, 1], [], []>} : vector<2x32xf32>, vector<32x768xf32>, vector<2x768xf32> -> vector<2x768xf32>
    %262 = vector.broadcast %14 : vector<1x768xf32> to vector<2x768xf32>
    %263 = arith.addf %261, %262 : vector<2x768xf32>
    %264 = vector.extract_strided_slice %263 {offsets = [0, 0], sizes = [2, 384], strides = [1, 1]} : vector<2x768xf32> to vector<2x384xf32>
    %265 = vector.extract_strided_slice %263 {offsets = [0, 384], sizes = [2, 384], strides = [1, 1]} : vector<2x768xf32> to vector<2x384xf32>
    %266 = vector.extract_strided_slice %264 {offsets = [0, 0], sizes = [2, 256], strides = [1, 1]} : vector<2x384xf32> to vector<2x256xf32>
    %267 = vector.extract_strided_slice %239 {offsets = [0, 0], sizes = [2, 256], strides = [1, 1]} : vector<2x384xf32> to vector<2x256xf32>
    %268 = arith.addf %266, %267 : vector<2x256xf32>
    %269 = arith.negf %268 : vector<2x256xf32>
    %270 = math.exp %269 : vector<2x256xf32>
    %cst_88 = arith.constant 1.000000e+00 : f32
    %271 = vector.broadcast %cst_88 : f32 to vector<2x256xf32>
    %272 = arith.addf %271, %270 : vector<2x256xf32>
    %273 = arith.divf %271, %272 : vector<2x256xf32>
    %274 = vector.extract_strided_slice %273 {offsets = [0, 0], sizes = [2, 32], strides = [1, 1]} : vector<2x256xf32> to vector<2x32xf32>
    %275 = vector.extract_strided_slice %273 {offsets = [0, 128], sizes = [2, 32], strides = [1, 1]} : vector<2x256xf32> to vector<2x32xf32>
    %276 = vector.extract_strided_slice %264 {offsets = [0, 256], sizes = [2, 32], strides = [1, 1]} : vector<2x384xf32> to vector<2x32xf32>
    %277 = vector.extract_strided_slice %239 {offsets = [0, 256], sizes = [2, 32], strides = [1, 1]} : vector<2x384xf32> to vector<2x32xf32>
    %278 = arith.mulf %274, %277 : vector<2x32xf32>
    %279 = arith.addf %276, %278 : vector<2x32xf32>
    %280 = math.tanh %279 : vector<2x32xf32>
    %cst_89 = arith.constant 1.000000e+00 : f32
    %281 = vector.broadcast %cst_89 : f32 to vector<2x32xf32>
    %282 = arith.subf %281, %275 : vector<2x32xf32>
    %283 = arith.mulf %282, %280 : vector<2x32xf32>
    %284 = arith.mulf %275, %233 : vector<2x32xf32>
    %285 = arith.addf %283, %284 : vector<2x32xf32>
    %c32_90 = arith.constant 32 : index
    %c0_91 = arith.constant 0 : index
    %286 = vector.load %arg8[%c32_90, %c0_91] : memref<64x32xf32, #tpu.memory_space<vmem>>, vector<2x32xf32>
    tpu.vector_store %arg8[%c32_90, %c0_91], %285 {strides = array<i32>} : memref<64x32xf32, #tpu.memory_space<vmem>>, vector<2x32xf32>,
    %c40 = arith.constant 40 : index
    %c0_92 = arith.constant 0 : index
    %287 = vector.load %arg7[%c40, %c0_92] : memref<64x384xf32, #tpu.memory_space<vmem>>, vector<2x384xf32>
    %c0_93 = arith.constant 0 : index
    %c768_94 = arith.constant 768 : index
    %288 = vector.load %arg3[%c0_93, %c768_94] : memref<32x1156xf32, #tpu.memory_space<vmem>>, vector<32x384xf32>
    %cst_95 = arith.constant dense<0.000000e+00> : vector<2x384xf32>
    %289 = tpu.matmul %285, %288, %cst_95 {dimension_numbers = #tpu.dot_dimension_numbers<[1], [0], [0], [1], [0, 0, 1, 1], [], []>} : vector<2x32xf32>, vector<32x384xf32>, vector<2x384xf32> -> vector<2x384xf32>
    %290 = vector.broadcast %15 : vector<1x384xf32> to vector<2x384xf32>
    %291 = arith.addf %289, %290 : vector<2x384xf32>
    %292 = vector.extract_strided_slice %287 {offsets = [0, 0], sizes = [2, 256], strides = [1, 1]} : vector<2x384xf32> to vector<2x256xf32>
    %293 = vector.extract_strided_slice %265 {offsets = [0, 0], sizes = [2, 256], strides = [1, 1]} : vector<2x384xf32> to vector<2x256xf32>
    %294 = arith.addf %292, %293 : vector<2x256xf32>
    %295 = arith.negf %294 : vector<2x256xf32>
    %296 = math.exp %295 : vector<2x256xf32>
    %cst_96 = arith.constant 1.000000e+00 : f32
    %297 = vector.broadcast %cst_96 : f32 to vector<2x256xf32>
    %298 = arith.addf %297, %296 : vector<2x256xf32>
    %299 = arith.divf %297, %298 : vector<2x256xf32>
    %300 = vector.extract_strided_slice %299 {offsets = [0, 0], sizes = [2, 32], strides = [1, 1]} : vector<2x256xf32> to vector<2x32xf32>
    %301 = vector.extract_strided_slice %299 {offsets = [0, 128], sizes = [2, 32], strides = [1, 1]} : vector<2x256xf32> to vector<2x32xf32>
    %302 = vector.extract_strided_slice %287 {offsets = [0, 256], sizes = [2, 32], strides = [1, 1]} : vector<2x384xf32> to vector<2x32xf32>
    %303 = vector.extract_strided_slice %265 {offsets = [0, 256], sizes = [2, 32], strides = [1, 1]} : vector<2x384xf32> to vector<2x32xf32>
    %304 = arith.mulf %300, %303 : vector<2x32xf32>
    %305 = arith.addf %302, %304 : vector<2x32xf32>
    %306 = math.tanh %305 : vector<2x32xf32>
    %cst_97 = arith.constant 1.000000e+00 : f32
    %307 = vector.broadcast %cst_97 : f32 to vector<2x32xf32>
    %308 = arith.subf %307, %301 : vector<2x32xf32>
    %309 = arith.mulf %308, %306 : vector<2x32xf32>
    %310 = arith.mulf %301, %259 : vector<2x32xf32>
    %311 = arith.addf %309, %310 : vector<2x32xf32>
    %c0_98 = arith.constant 0 : index
    %c0_99 = arith.constant 0 : index
    %312 = vector.load %arg3[%c0_98, %c0_99] : memref<32x1156xf32, #tpu.memory_space<vmem>>, vector<32x768xf32>
    %cst_100 = arith.constant dense<0.000000e+00> : vector<2x768xf32>
    %313 = tpu.matmul %311, %312, %cst_100 {dimension_numbers = #tpu.dot_dimension_numbers<[1], [0], [0], [1], [0, 0, 1, 1], [], []>} : vector<2x32xf32>, vector<32x768xf32>, vector<2x768xf32> -> vector<2x768xf32>
    %314 = vector.broadcast %14 : vector<1x768xf32> to vector<2x768xf32>
    %315 = arith.addf %313, %314 : vector<2x768xf32>
    %316 = vector.extract_strided_slice %315 {offsets = [0, 0], sizes = [2, 384], strides = [1, 1]} : vector<2x768xf32> to vector<2x384xf32>
    %317 = vector.extract_strided_slice %315 {offsets = [0, 384], sizes = [2, 384], strides = [1, 1]} : vector<2x768xf32> to vector<2x384xf32>
    %318 = vector.extract_strided_slice %316 {offsets = [0, 0], sizes = [2, 256], strides = [1, 1]} : vector<2x384xf32> to vector<2x256xf32>
    %319 = vector.extract_strided_slice %291 {offsets = [0, 0], sizes = [2, 256], strides = [1, 1]} : vector<2x384xf32> to vector<2x256xf32>
    %320 = arith.addf %318, %319 : vector<2x256xf32>
    %321 = arith.negf %320 : vector<2x256xf32>
    %322 = math.exp %321 : vector<2x256xf32>
    %cst_101 = arith.constant 1.000000e+00 : f32
    %323 = vector.broadcast %cst_101 : f32 to vector<2x256xf32>
    %324 = arith.addf %323, %322 : vector<2x256xf32>
    %325 = arith.divf %323, %324 : vector<2x256xf32>
    %326 = vector.extract_strided_slice %325 {offsets = [0, 0], sizes = [2, 32], strides = [1, 1]} : vector<2x256xf32> to vector<2x32xf32>
    %327 = vector.extract_strided_slice %325 {offsets = [0, 128], sizes = [2, 32], strides = [1, 1]} : vector<2x256xf32> to vector<2x32xf32>
    %328 = vector.extract_strided_slice %316 {offsets = [0, 256], sizes = [2, 32], strides = [1, 1]} : vector<2x384xf32> to vector<2x32xf32>
    %329 = vector.extract_strided_slice %291 {offsets = [0, 256], sizes = [2, 32], strides = [1, 1]} : vector<2x384xf32> to vector<2x32xf32>
    %330 = arith.mulf %326, %329 : vector<2x32xf32>
    %331 = arith.addf %328, %330 : vector<2x32xf32>
    %332 = math.tanh %331 : vector<2x32xf32>
    %cst_102 = arith.constant 1.000000e+00 : f32
    %333 = vector.broadcast %cst_102 : f32 to vector<2x32xf32>
    %334 = arith.subf %333, %327 : vector<2x32xf32>
    %335 = arith.mulf %334, %332 : vector<2x32xf32>
    %336 = arith.mulf %327, %285 : vector<2x32xf32>
    %337 = arith.addf %335, %336 : vector<2x32xf32>
    %c40_103 = arith.constant 40 : index
    %c0_104 = arith.constant 0 : index
    %338 = vector.load %arg8[%c40_103, %c0_104] : memref<64x32xf32, #tpu.memory_space<vmem>>, vector<2x32xf32>
    tpu.vector_store %arg8[%c40_103, %c0_104], %337 {strides = array<i32>} : memref<64x32xf32, #tpu.memory_space<vmem>>, vector<2x32xf32>,
    %c48 = arith.constant 48 : index
    %c0_105 = arith.constant 0 : index
    %339 = vector.load %arg7[%c48, %c0_105] : memref<64x384xf32, #tpu.memory_space<vmem>>, vector<2x384xf32>
    %c0_106 = arith.constant 0 : index
    %c768_107 = arith.constant 768 : index
    %340 = vector.load %arg3[%c0_106, %c768_107] : memref<32x1156xf32, #tpu.memory_space<vmem>>, vector<32x384xf32>
    %cst_108 = arith.constant dense<0.000000e+00> : vector<2x384xf32>
    %341 = tpu.matmul %337, %340, %cst_108 {dimension_numbers = #tpu.dot_dimension_numbers<[1], [0], [0], [1], [0, 0, 1, 1], [], []>} : vector<2x32xf32>, vector<32x384xf32>, vector<2x384xf32> -> vector<2x384xf32>
    %342 = vector.broadcast %15 : vector<1x384xf32> to vector<2x384xf32>
    %343 = arith.addf %341, %342 : vector<2x384xf32>
    %344 = vector.extract_strided_slice %339 {offsets = [0, 0], sizes = [2, 256], strides = [1, 1]} : vector<2x384xf32> to vector<2x256xf32>
    %345 = vector.extract_strided_slice %317 {offsets = [0, 0], sizes = [2, 256], strides = [1, 1]} : vector<2x384xf32> to vector<2x256xf32>
    %346 = arith.addf %344, %345 : vector<2x256xf32>
    %347 = arith.negf %346 : vector<2x256xf32>
    %348 = math.exp %347 : vector<2x256xf32>
    %cst_109 = arith.constant 1.000000e+00 : f32
    %349 = vector.broadcast %cst_109 : f32 to vector<2x256xf32>
    %350 = arith.addf %349, %348 : vector<2x256xf32>
    %351 = arith.divf %349, %350 : vector<2x256xf32>
    %352 = vector.extract_strided_slice %351 {offsets = [0, 0], sizes = [2, 32], strides = [1, 1]} : vector<2x256xf32> to vector<2x32xf32>
    %353 = vector.extract_strided_slice %351 {offsets = [0, 128], sizes = [2, 32], strides = [1, 1]} : vector<2x256xf32> to vector<2x32xf32>
    %354 = vector.extract_strided_slice %339 {offsets = [0, 256], sizes = [2, 32], strides = [1, 1]} : vector<2x384xf32> to vector<2x32xf32>
    %355 = vector.extract_strided_slice %317 {offsets = [0, 256], sizes = [2, 32], strides = [1, 1]} : vector<2x384xf32> to vector<2x32xf32>
    %356 = arith.mulf %352, %355 : vector<2x32xf32>
    %357 = arith.addf %354, %356 : vector<2x32xf32>
    %358 = math.tanh %357 : vector<2x32xf32>
    %cst_110 = arith.constant 1.000000e+00 : f32
    %359 = vector.broadcast %cst_110 : f32 to vector<2x32xf32>
    %360 = arith.subf %359, %353 : vector<2x32xf32>
    %361 = arith.mulf %360, %358 : vector<2x32xf32>
    %362 = arith.mulf %353, %311 : vector<2x32xf32>
    %363 = arith.addf %361, %362 : vector<2x32xf32>
    %c0_111 = arith.constant 0 : index
    %c0_112 = arith.constant 0 : index
    %364 = vector.load %arg3[%c0_111, %c0_112] : memref<32x1156xf32, #tpu.memory_space<vmem>>, vector<32x768xf32>
    %cst_113 = arith.constant dense<0.000000e+00> : vector<2x768xf32>
    %365 = tpu.matmul %363, %364, %cst_113 {dimension_numbers = #tpu.dot_dimension_numbers<[1], [0], [0], [1], [0, 0, 1, 1], [], []>} : vector<2x32xf32>, vector<32x768xf32>, vector<2x768xf32> -> vector<2x768xf32>
    %366 = vector.broadcast %14 : vector<1x768xf32> to vector<2x768xf32>
    %367 = arith.addf %365, %366 : vector<2x768xf32>
    %368 = vector.extract_strided_slice %367 {offsets = [0, 0], sizes = [2, 384], strides = [1, 1]} : vector<2x768xf32> to vector<2x384xf32>
    %369 = vector.extract_strided_slice %367 {offsets = [0, 384], sizes = [2, 384], strides = [1, 1]} : vector<2x768xf32> to vector<2x384xf32>
    %370 = vector.extract_strided_slice %368 {offsets = [0, 0], sizes = [2, 256], strides = [1, 1]} : vector<2x384xf32> to vector<2x256xf32>
    %371 = vector.extract_strided_slice %343 {offsets = [0, 0], sizes = [2, 256], strides = [1, 1]} : vector<2x384xf32> to vector<2x256xf32>
    %372 = arith.addf %370, %371 : vector<2x256xf32>
    %373 = arith.negf %372 : vector<2x256xf32>
    %374 = math.exp %373 : vector<2x256xf32>
    %cst_114 = arith.constant 1.000000e+00 : f32
    %375 = vector.broadcast %cst_114 : f32 to vector<2x256xf32>
    %376 = arith.addf %375, %374 : vector<2x256xf32>
    %377 = arith.divf %375, %376 : vector<2x256xf32>
    %378 = vector.extract_strided_slice %377 {offsets = [0, 0], sizes = [2, 32], strides = [1, 1]} : vector<2x256xf32> to vector<2x32xf32>
    %379 = vector.extract_strided_slice %377 {offsets = [0, 128], sizes = [2, 32], strides = [1, 1]} : vector<2x256xf32> to vector<2x32xf32>
    %380 = vector.extract_strided_slice %368 {offsets = [0, 256], sizes = [2, 32], strides = [1, 1]} : vector<2x384xf32> to vector<2x32xf32>
    %381 = vector.extract_strided_slice %343 {offsets = [0, 256], sizes = [2, 32], strides = [1, 1]} : vector<2x384xf32> to vector<2x32xf32>
    %382 = arith.mulf %378, %381 : vector<2x32xf32>
    %383 = arith.addf %380, %382 : vector<2x32xf32>
    %384 = math.tanh %383 : vector<2x32xf32>
    %cst_115 = arith.constant 1.000000e+00 : f32
    %385 = vector.broadcast %cst_115 : f32 to vector<2x32xf32>
    %386 = arith.subf %385, %379 : vector<2x32xf32>
    %387 = arith.mulf %386, %384 : vector<2x32xf32>
    %388 = arith.mulf %379, %337 : vector<2x32xf32>
    %389 = arith.addf %387, %388 : vector<2x32xf32>
    %c48_116 = arith.constant 48 : index
    %c0_117 = arith.constant 0 : index
    %390 = vector.load %arg8[%c48_116, %c0_117] : memref<64x32xf32, #tpu.memory_space<vmem>>, vector<2x32xf32>
    tpu.vector_store %arg8[%c48_116, %c0_117], %389 {strides = array<i32>} : memref<64x32xf32, #tpu.memory_space<vmem>>, vector<2x32xf32>,
    %c56 = arith.constant 56 : index
    %c0_118 = arith.constant 0 : index
    %391 = vector.load %arg7[%c56, %c0_118] : memref<64x384xf32, #tpu.memory_space<vmem>>, vector<2x384xf32>
    %c0_119 = arith.constant 0 : index
    %c768_120 = arith.constant 768 : index
    %392 = vector.load %arg3[%c0_119, %c768_120] : memref<32x1156xf32, #tpu.memory_space<vmem>>, vector<32x384xf32>
    %cst_121 = arith.constant dense<0.000000e+00> : vector<2x384xf32>
    %393 = tpu.matmul %389, %392, %cst_121 {dimension_numbers = #tpu.dot_dimension_numbers<[1], [0], [0], [1], [0, 0, 1, 1], [], []>} : vector<2x32xf32>, vector<32x384xf32>, vector<2x384xf32> -> vector<2x384xf32>
    %394 = vector.broadcast %15 : vector<1x384xf32> to vector<2x384xf32>
    %395 = arith.addf %393, %394 : vector<2x384xf32>
    %396 = vector.extract_strided_slice %391 {offsets = [0, 0], sizes = [2, 256], strides = [1, 1]} : vector<2x384xf32> to vector<2x256xf32>
    %397 = vector.extract_strided_slice %369 {offsets = [0, 0], sizes = [2, 256], strides = [1, 1]} : vector<2x384xf32> to vector<2x256xf32>
    %398 = arith.addf %396, %397 : vector<2x256xf32>
    %399 = arith.negf %398 : vector<2x256xf32>
    %400 = math.exp %399 : vector<2x256xf32>
    %cst_122 = arith.constant 1.000000e+00 : f32
    %401 = vector.broadcast %cst_122 : f32 to vector<2x256xf32>
    %402 = arith.addf %401, %400 : vector<2x256xf32>
    %403 = arith.divf %401, %402 : vector<2x256xf32>
    %404 = vector.extract_strided_slice %403 {offsets = [0, 0], sizes = [2, 32], strides = [1, 1]} : vector<2x256xf32> to vector<2x32xf32>
    %405 = vector.extract_strided_slice %403 {offsets = [0, 128], sizes = [2, 32], strides = [1, 1]} : vector<2x256xf32> to vector<2x32xf32>
    %406 = vector.extract_strided_slice %391 {offsets = [0, 256], sizes = [2, 32], strides = [1, 1]} : vector<2x384xf32> to vector<2x32xf32>
    %407 = vector.extract_strided_slice %369 {offsets = [0, 256], sizes = [2, 32], strides = [1, 1]} : vector<2x384xf32> to vector<2x32xf32>
    %408 = arith.mulf %404, %407 : vector<2x32xf32>
    %409 = arith.addf %406, %408 : vector<2x32xf32>
    %410 = math.tanh %409 : vector<2x32xf32>
    %cst_123 = arith.constant 1.000000e+00 : f32
    %411 = vector.broadcast %cst_123 : f32 to vector<2x32xf32>
    %412 = arith.subf %411, %405 : vector<2x32xf32>
    %413 = arith.mulf %412, %410 : vector<2x32xf32>
    %414 = arith.mulf %405, %363 : vector<2x32xf32>
    %415 = arith.addf %413, %414 : vector<2x32xf32>
    %c0_124 = arith.constant 0 : index
    %c0_125 = arith.constant 0 : index
    %416 = vector.load %arg3[%c0_124, %c0_125] : memref<32x1156xf32, #tpu.memory_space<vmem>>, vector<32x768xf32>
    %cst_126 = arith.constant dense<0.000000e+00> : vector<2x768xf32>
    %417 = tpu.matmul %415, %416, %cst_126 {dimension_numbers = #tpu.dot_dimension_numbers<[1], [0], [0], [1], [0, 0, 1, 1], [], []>} : vector<2x32xf32>, vector<32x768xf32>, vector<2x768xf32> -> vector<2x768xf32>
    %418 = vector.broadcast %14 : vector<1x768xf32> to vector<2x768xf32>
    %419 = arith.addf %417, %418 : vector<2x768xf32>
    %420 = vector.extract_strided_slice %419 {offsets = [0, 0], sizes = [2, 384], strides = [1, 1]} : vector<2x768xf32> to vector<2x384xf32>
    %421 = vector.extract_strided_slice %420 {offsets = [0, 0], sizes = [2, 256], strides = [1, 1]} : vector<2x384xf32> to vector<2x256xf32>
    %422 = vector.extract_strided_slice %395 {offsets = [0, 0], sizes = [2, 256], strides = [1, 1]} : vector<2x384xf32> to vector<2x256xf32>
    %423 = arith.addf %421, %422 : vector<2x256xf32>
    %424 = arith.negf %423 : vector<2x256xf32>
    %425 = math.exp %424 : vector<2x256xf32>
    %cst_127 = arith.constant 1.000000e+00 : f32
    %426 = vector.broadcast %cst_127 : f32 to vector<2x256xf32>
    %427 = arith.addf %426, %425 : vector<2x256xf32>
    %428 = arith.divf %426, %427 : vector<2x256xf32>
    %429 = vector.extract_strided_slice %428 {offsets = [0, 0], sizes = [2, 32], strides = [1, 1]} : vector<2x256xf32> to vector<2x32xf32>
    %430 = vector.extract_strided_slice %428 {offsets = [0, 128], sizes = [2, 32], strides = [1, 1]} : vector<2x256xf32> to vector<2x32xf32>
    %431 = vector.extract_strided_slice %420 {offsets = [0, 256], sizes = [2, 32], strides = [1, 1]} : vector<2x384xf32> to vector<2x32xf32>
    %432 = vector.extract_strided_slice %395 {offsets = [0, 256], sizes = [2, 32], strides = [1, 1]} : vector<2x384xf32> to vector<2x32xf32>
    %433 = arith.mulf %429, %432 : vector<2x32xf32>
    %434 = arith.addf %431, %433 : vector<2x32xf32>
    %435 = math.tanh %434 : vector<2x32xf32>
    %cst_128 = arith.constant 1.000000e+00 : f32
    %436 = vector.broadcast %cst_128 : f32 to vector<2x32xf32>
    %437 = arith.subf %436, %430 : vector<2x32xf32>
    %438 = arith.mulf %437, %435 : vector<2x32xf32>
    %439 = arith.mulf %430, %389 : vector<2x32xf32>
    %440 = arith.addf %438, %439 : vector<2x32xf32>
    %c56_129 = arith.constant 56 : index
    %c0_130 = arith.constant 0 : index
    %441 = vector.load %arg8[%c56_129, %c0_130] : memref<64x32xf32, #tpu.memory_space<vmem>>, vector<2x32xf32>
    tpu.vector_store %arg8[%c56_129, %c0_130], %440 {strides = array<i32>} : memref<64x32xf32, #tpu.memory_space<vmem>>, vector<2x32xf32>,
    %c0_131 = arith.constant 0 : index
    %c0_132 = arith.constant 0 : index
    %442 = vector.load %arg8[%c0_131, %c0_132] : memref<64x32xf32, #tpu.memory_space<vmem>>, vector<64x32xf32>
    %c0_133 = arith.constant 0 : index
    %c1152 = arith.constant 1152 : index
    %443 = vector.load %arg3[%c0_133, %c1152] : memref<32x1156xf32, #tpu.memory_space<vmem>>, vector<32x4xf32>
    %cst_134 = arith.constant dense<0.000000e+00> : vector<64x4xf32>
    %444 = tpu.matmul %442, %443, %cst_134 {dimension_numbers = #tpu.dot_dimension_numbers<[1], [0], [0], [1], [0, 0, 1, 1], [], []>} : vector<64x32xf32>, vector<32x4xf32>, vector<64x4xf32> -> vector<64x4xf32>
    %c4 = arith.constant 4 : index
    %c0_135 = arith.constant 0 : index
    %445 = vector.load %arg4[%c4, %c0_135] : memref<8x768xf32, #tpu.memory_space<vmem>>, vector<1x4xf32>
    %446 = vector.broadcast %445 : vector<1x4xf32> to vector<64x4xf32>
    %447 = arith.addf %444, %446 : vector<64x4xf32>
    %c0_136 = arith.constant 0 : index
    %c0_137 = arith.constant 0 : index
    %448 = vector.load %arg5[%c0_136, %c0_137] : memref<64x4xf32, #tpu.memory_space<vmem>>, vector<64x4xf32>
    tpu.vector_store %arg5[%c0_136, %c0_137], %447 {strides = array<i32>} : memref<64x4xf32, #tpu.memory_space<vmem>>, vector<64x4xf32>,
    %c0_138 = arith.constant 0 : index
    %c0_139 = arith.constant 0 : index
    %c0_140 = arith.constant 0 : index
    %449 = vector.load %arg6[%c0_138, %c0_139, %c0_140] : memref<2x2x32xf32, #tpu.memory_space<vmem>>, vector<1x2x32xf32>
    %450 = vector.shape_cast %449 : vector<1x2x32xf32> to vector<2x32xf32>
    %451 = vector.shape_cast %415 : vector<2x32xf32> to vector<1x2x32xf32>
    tpu.vector_store %arg6[%c0_138, %c0_139, %c0_140], %451 {strides = array<i32>} : memref<2x2x32xf32, #tpu.memory_space<vmem>>, vector<1x2x32xf32>,
    %c1_141 = arith.constant 1 : index
    %c0_142 = arith.constant 0 : index
    %c0_143 = arith.constant 0 : index
    %452 = vector.load %arg6[%c1_141, %c0_142, %c0_143] : memref<2x2x32xf32, #tpu.memory_space<vmem>>, vector<1x2x32xf32>
    %453 = vector.shape_cast %452 : vector<1x2x32xf32> to vector<2x32xf32>
    %454 = vector.shape_cast %440 : vector<2x32xf32> to vector<1x2x32xf32>
    tpu.vector_store %arg6[%c1_141, %c0_142, %c0_143], %454 {strides = array<i32>} : memref<2x2x32xf32, #tpu.memory_space<vmem>>, vector<1x2x32xf32>,
    return
  }
}

</mosaic_0001>

<llo_original>
// kernel: gru_q_net_forward.1
$region0: #{gru_q_net_forward.1}
  #allocation0 [shape = 'u32[]', space=smem, size = 0x4, offset = 0x4, fixed_abs, tag = 'smem constant byte address 0x4 - core index']
  #allocation1 [shape = 'u32[144,128]{1,0:T(1,128)}', space=vmem, size = 0x12000, scoped, tag = 'internal scratch']
  #allocation2 [shape = 'f32[64,384]{1,0:T(8,128)}', space=vmem, size = 0x18000, scoped, tag = 'scratch operand']
  #allocation3 [shape = 'f32[64,32]{1,0:T(8,128)}', space=vmem, size = 0x8000, scoped, tag = 'scratch operand']
  %s0 = inlined_call_operand.vmem [shape: f32[64,16], index: 0, kind: input, shape index: {}]
  %s1 = inlined_call_operand.vmem [shape: f32[2,2,32], index: 1, kind: input, shape index: {}]
  %s2 = inlined_call_operand.hbm [shape: f32[80,384], index: 2, kind: input, shape index: {}]
  %s3 = inlined_call_operand.hbm [shape: f32[32,1156], index: 3, kind: input, shape index: {}]
  %s4 = inlined_call_operand.vmem [shape: f32[8,768], index: 4, kind: input, shape index: {}]
  %s5 = inlined_call_operand.vmem [shape: f32[64,4], index: 5, kind: output, shape index: {0}]
  %s6 = inlined_call_operand.hbm [shape: f32[2,2,32], index: 6, kind: output, shape index: {1}]
  %7 = xla_tuple %s5, %s6
  %s8 = sld [smem:[#allocation0]]
  $region46: #{gru_q_net_forward.1} parent=0
    _
  %s10 = ssub.s32 1, %s8
  %s11 = scalar_select 0, %s10, %s8
  $region1: #{gru_q_net_forward.1} parent=0
    #allocation4 [shape = 'u8[122880]{0}', space=vmem, size = 0x1e000, scoped, tag = 'input window, operand 2, single buffered']
    #allocation5 [shape = 's32[1]{0}', space=sflag, size = 0x4, scoped, tag = 'scoped memory for gru_q_net_forward.1']
    #allocation6 [shape = 's32[1]{0}', space=sflag, size = 0x4, scoped, tag = 'scoped memory for gru_q_net_forward.1']
    #allocation7 [shape = 'u8[163840]{0}', space=vmem, size = 0x28000, scoped, tag = 'input window, operand 3, single buffered']
    #allocation8 [shape = 's32[1]{0}', space=sflag, size = 0x4, scoped, tag = 'scoped memory for gru_q_net_forward.1']
    #allocation9 [shape = 'u8[2048]{0}', space=vmem, size = 0x800, scoped, tag = 'output window, operand 1, single buffered']
    %12 = vsyncpa [#allocation5], 0
    %13 = vsyncpa [#allocation8], 0
    %14 = vsyncpa [#allocation6], 0
    // Predicated region
    $region2: #{gru_q_net_forward.1} parent=1 // pred_check
      _
    $region3: #{gru_q_net_forward.1} parent=1 // pred_check_branch
      %16 = sbr.rel (0) target = $region5
    $region4: #{gru_q_net_forward.1} parent=1 // pred_region
      _
    $region5: #{gru_q_net_forward.1} parent=1 // pred_fallthru
      _
    // Predicated region
    $region6: #{gru_q_net_forward.1} parent=1 // pred_check
      _
    $region7: #{gru_q_net_forward.1} parent=1 // pred_check_branch
      %18 = sbr.rel (0) target = $region9
    $region8: #{gru_q_net_forward.1} parent=1 // pred_region
      _
    $region9: #{gru_q_net_forward.1} parent=1 // pred_fallthru
      _
    // Predicated region
    $region10: #{gru_q_net_forward.1} parent=1 // pred_check
      _
    $region11: #{gru_q_net_forward.1} parent=1 // pred_check_branch
      %20 = sbr.rel (0) target = $region13
    $region12: #{gru_q_net_forward.1} parent=1 // pred_region
      %s22 = ssub.s32 3840, 3840
      %23 = vsyncadd [#allocation5], %s22
      %s24 = sshll.u32 [#allocation4], 4
      %s25 = int_to_ptr.vmem [resolvable:$true] %s24
      %30 = dma.hbm_to_vmem [thread:$0]  %s2, 3840, %s25, [#allocation5], 384, 384, 24
    $region13: #{gru_q_net_forward.1} parent=1 // pred_fallthru
      _
    // Predicated region
    $region14: #{gru_q_net_forward.1} parent=1 // pred_check
      _
    $region15: #{gru_q_net_forward.1} parent=1 // pred_check_branch
      %32 = sbr.rel (0) target = $region17
    $region16: #{gru_q_net_forward.1} parent=1 // pred_region
      %s34 = ssub.s32 5120, 5120
      %35 = vsyncadd [#allocation8], %s34
      %s36 = sshll.u32 [#allocation7], 4
      %s37 = int_to_ptr.vmem [resolvable:$true] %s36
      %42 = dma.hbm_to_vmem [thread:$0]  %s3, 5120, %s37, [#allocation8], 1280, 1280, 80
    $region17: #{gru_q_net_forward.1} parent=1 // pred_fallthru
      _
    // Predicated region
    $region18: #{gru_q_net_forward.1} parent=1 // pred_check
      _
    $region19: #{gru_q_net_forward.1} parent=1 // pred_check_branch
      %44 = sbr.rel (0) target = $region21
    $region20: #{gru_q_net_forward.1} parent=1 // pred_region
      _
    $region21: #{gru_q_net_forward.1} parent=1 // pred_fallthru
      _
    // Predicated region
    $region22: #{gru_q_net_forward.1} parent=1 // pred_check
      _
    $region23: #{gru_q_net_forward.1} parent=1 // pred_check_branch
      %46 = sbr.rel (0) target = $region25
    $region24: #{gru_q_net_forward.1} parent=1 // pred_region
      %47 = dma.done [#allocation5], 3840
    $region25: #{gru_q_net_forward.1} parent=1 // pred_fallthru
      _
    // Predicated region
    $region26: #{gru_q_net_forward.1} parent=1 // pred_check
      _
    $region27: #{gru_q_net_forward.1} parent=1 // pred_check_branch
      %49 = sbr.rel (0) target = $region29
    $region28: #{gru_q_net_forward.1} parent=1 // pred_region
      %50 = dma.done [#allocation8], 5120
    $region29: #{gru_q_net_forward.1} parent=1 // pred_fallthru
      _
    %v51 = vld [vmem:[%s0] sm:$0xff]
    %v52 = vld [vmem:[%s0 + $0x8] sm:$0xff]
    %v53 = vld [vmem:[%s0 + $0x10] sm:$0xff]
    %v54 = vld [vmem:[%s0 + $0x18] sm:$0xff]
    %v55 = vld [vmem:[%s0 + $0x20] sm:$0xff]
    %v56 = vld [vmem:[%s0 + $0x28] sm:$0xff]
    %v57 = vld [vmem:[%s0 + $0x30] sm:$0xff]
    %v58 = vld [vmem:[%s0 + $0x38] sm:$0xff]
    %v59 = vld [vmem:[#allocation4] sm:$0xff]
    %v60 = vld [vmem:[#allocation4 + $0x18] sm:$0xff]
    %v61 = vld [vmem:[%s4] ss:$0 sm:$0xff]
    %vm62 = vcmask 130048
    %v64 = vsel %vm62, %v51, 0
    %v67 = vsel %vm62, %v52, 0
    %v70 = vsel %vm62, %v53, 0
    %v73 = vsel %vm62, %v54, 0
    %v76 = vsel %vm62, %v55, 0
    %v79 = vsel %vm62, %v56, 0
    %v82 = vsel %vm62, %v57, 0
    %v85 = vsel %vm62, %v58, 0
    %87 = vmatprep.subr.mxu0 0.0
    %88 = vmatpush1.msra.mxu0 %v59
    %89 = vmatprep.subr.mxu0 0.0
    %90 = vmatpush1.msra.mxu0 %v60
    %91 = vmatprep.subr.mxu0 0.0
    %92 = vmatpush1.msra.mxu0 0.0
    %93 = vmatprep.subr.mxu0 0.0
    %94 = vmatpush1.msra.mxu0 0.0
    %95 = vmatprep.subr.mxu0 0.0
    %96 = vmatpush1.msra.mxu0 0.0
    %97 = vmatprep.subr.mxu0 0.0
    %98 = vmatpush1.msra.mxu0 0.0
    %99 = vmatprep.subr.mxu0 0.0
    %100 = vmatpush1.msra.mxu0 0.0
    %101 = vmatprep.subr.mxu0 0.0
    %102 = vmatpush1.msra.mxu0 0.0
    %103 = vmatprep.subr.mxu0 0.0
    %104 = vmatpush1.msra.mxu0 0.0
    %105 = vmatprep.subr.mxu0 0.0
    %106 = vmatpush1.msra.mxu0 0.0
    %107 = vmatprep.subr.mxu0 0.0
    %108 = vmatpush1.msra.mxu0 0.0
    %109 = vmatprep.subr.mxu0 0.0
    %110 = vmatpush1.msra.mxu0 0.0
    %111 = vmatprep.subr.mxu0 0.0
    %112 = vmatpush1.msra.mxu0 0.0
    %113 = vmatprep.subr.mxu0 0.0
    %114 = vmatpush1.msra.mxu0 0.0
    %115 = vmatprep.subr.mxu0 0.0
    %116 = vmatpush1.msra.mxu0 0.0
    %117 = vmatprep.subr.mxu0 0.0
    %118 = vmatpush1.msra.mxu0 0.0
    %119 = vmatprep.subr.mxu0 0.0
    %120 = vmatpush1.msra.mxu0 0.0
    %121 = vmatprep.subr.mxu0 0.0
    %122 = vmatpush1.msra.mxu0 0.0
    %123 = vmatprep.subr.mxu0 0.0
    %124 = vmatpush1.msra.mxu0 0.0
    %125 = vmatprep.subr.mxu0 0.0
    %126 = vmatpush1.msra.mxu0 0.0
    %127 = vmatprep.subr.mxu0 0.0
    %128 = vmatpush1.msra.mxu0 0.0
    %129 = vmatprep.subr.mxu0 0.0
    %130 = vmatpush1.msra.mxu0 0.0
    %131 = vmatprep.subr.mxu0 0.0
    %132 = vmatpush1.msra.mxu0 0.0
    %133 = vmatprep.subr.mxu0 0.0
    %134 = vmatpush1.msra.mxu0 0.0
    %135 = vmatprep.subr.mxu0 0.0
    %136 = vmatpush1.msra.mxu0 0.0
    %137 = vmatprep.subr.mxu0 0.0
    %138 = vmatpush1.msra.mxu0 0.0
    %139 = vmatprep.subr.mxu0 0.0
    %140 = vmatpush1.msra.mxu0 0.0
    %141 = vmatprep.subr.mxu0 0.0
    %142 = vmatpush1.msra.mxu0 0.0
    %143 = vmatprep.subr.mxu0 0.0
    %144 = vmatpush1.msra.mxu0 0.0
    %145 = vmatprep.subr.mxu0 0.0
    %146 = vmatpush1.msra.mxu0 0.0
    %147 = vmatprep.subr.mxu0 0.0
    %148 = vmatpush1.msra.mxu0 0.0
    %149 = vmatprep.subr.mxu0 0.0
    %150 = vmatpush1.msra.mxu0 0.0
    %151 = vmatprep.mubr.f32.mxu0 0.0
    %152 = vmatmul.mubr.f32.gmra.mrb[0].mxu0 %v64
    %v153 = vpop.f32.mrb[0].mxu0
    %v154 = vadd.f32 %v61, %v153
    %v155 = vpop.f32.mrb[0].mxu0
    %156 = vmatprep.mubr.f32.mxu0 0.0
    %157 = vmatmul.mubr.f32.gmra.mrb[0].mxu0 %v67
    %v158 = vpop.f32.mrb[0].mxu0
    %v159 = vadd.f32 %v61, %v158
    %v160 = vpop.f32.mrb[0].mxu0
    %161 = vmatprep.mubr.f32.mxu0 0.0
    %162 = vmatmul.mubr.f32.gmra.mrb[0].mxu0 %v70
    %v163 = vpop.f32.mrb[0].mxu0
    %v164 = vadd.f32 %v61, %v163
    %v165 = vpop.f32.mrb[0].mxu0
    %166 = vmatprep.mubr.f32.mxu0 0.0
    %167 = vmatmul.mubr.f32.gmra.mrb[0].mxu0 %v73
    %v168 = vpop.f32.mrb[0].mxu0
    %v169 = vadd.f32 %v61, %v168
    %v170 = vpop.f32.mrb[0].mxu0
    %171 = vmatprep.mubr.f32.mxu0 0.0
    %172 = vmatmul.mubr.f32.gmra.mrb[0].mxu0 %v76
    %v173 = vpop.f32.mrb[0].mxu0
    %v174 = vadd.f32 %v61, %v173
    %v175 = vpop.f32.mrb[0].mxu0
    %176 = vmatprep.mubr.f32.mxu0 0.0
    %177 = vmatmul.mubr.f32.gmra.mrb[0].mxu0 %v79
    %v178 = vpop.f32.mrb[0].mxu0
    %v179 = vadd.f32 %v61, %v178
    %v180 = vpop.f32.mrb[0].mxu0
    %181 = vmatprep.mubr.f32.mxu0 0.0
    %182 = vmatmul.mubr.f32.gmra.mrb[0].mxu0 %v82
    %v183 = vpop.f32.mrb[0].mxu0
    %v184 = vadd.f32 %v61, %v183
    %v185 = vpop.f32.mrb[0].mxu0
    %186 = vmatprep.mubr.f32.mxu0 0.0
    %187 = vmatmul.mubr.f32.gmra.mrb[0].mxu0 %v85
    %v188 = vpop.f32.mrb[0].mxu0
    %v189 = vadd.f32 %v61, %v188
    %v190 = vpop.f32.mrb[0].mxu0
    %191 = vdwg.mxu0
    %v192 = vmax.f32 %v154, 0.0
    %v193 = vmax.f32 %v159, 0.0
    %v194 = vmax.f32 %v164, 0.0
    %v195 = vmax.f32 %v169, 0.0
    %v196 = vmax.f32 %v174, 0.0
    %v197 = vmax.f32 %v179, 0.0
    %v198 = vmax.f32 %v184, 0.0
    %v199 = vmax.f32 %v189, 0.0
    %v200 = vld [vmem:[#allocation4 + $0x30] sm:$0xff]
    %v201 = vld [vmem:[#allocation4 + $0x38] sm:$0xff]
    %v202 = vld [vmem:[#allocation4 + $0x40] sm:$0xff]
    %v203 = vld [vmem:[#allocation4 + $0x48] sm:$0xff]
    %v204 = vld [vmem:[#allocation4 + $0x50] sm:$0xff]
    %v205 = vld [vmem:[#allocation4 + $0x58] sm:$0xff]
    %v206 = vld [vmem:[#allocation4 + $0x60] sm:$0xff]
    %v207 = vld [vmem:[#allocation4 + $0x68] sm:$0xff]
    %v208 = vld [vmem:[#allocation4 + $0x70] sm:$0xff]
    %v209 = vld [vmem:[#allocation4 + $0x78] sm:$0xff]
    %v210 = vld [vmem:[#allocation4 + $0x80] sm:$0xff]
    %v211 = vld [vmem:[#allocation4 + $0x88] sm:$0xff]
    %v212 = vld [vmem:[#allocation4 + $0x90] sm:$0xff]
    %v213 = vld [vmem:[#allocation4 + $0x98] sm:$0xff]
    %v214 = vld [vmem:[#allocation4 + $0xa0] sm:$0xff]
    %v215 = vld [vmem:[#allocation4 + $0xa8] sm:$0xff]
    %v216 = vld [vmem:[#allocation4 + $0xb0] sm:$0xff]
    %v217 = vld [vmem:[#allocation4 + $0xb8] sm:$0xff]
    %v218 = vld [vmem:[#allocation4 + $0xc0] sm:$0xff]
    %v219 = vld [vmem:[#allocation4 + $0xc8] sm:$0xff]
    %v220 = vld [vmem:[#allocation4 + $0xd0] sm:$0xff]
    %v221 = vld [vmem:[#allocation4 + $0xd8] sm:$0xff]
    %v222 = vld [vmem:[#allocation4 + $0xe0] sm:$0xff]
    %v223 = vld [vmem:[#allocation4 + $0xe8] sm:$0xff]
    %s224 = scalar_lea.vmem %s4, 1
    %v225 = vld [vmem:[%s224] ss:$8 sm:$0x7]
    %v227 = vlaneseq
    %v228 = vshrl.u32 %v227, 7
    %v229 = vsub.s32 0, %v228
    %v230 = vrot.slane %v225, %v229
    %v231 = vlaneseq
    %v232 = vshrl.u32 %v231, 7
    %v233 = vsub.s32 1, %v232
    %v234 = vrot.slane %v225, %v233
    %v235 = vlaneseq
    %v236 = vshrl.u32 %v235, 7
    %v237 = vsub.s32 2, %v236
    %v238 = vrot.slane %v225, %v237
    %vm242 = vcmask 523264
    %v244 = vsel %vm242, %v192, 0
    %v247 = vsel %vm242, %v193, 0
    %v250 = vsel %vm242, %v194, 0
    %v253 = vsel %vm242, %v195, 0
    %v256 = vsel %vm242, %v196, 0
    %v259 = vsel %vm242, %v197, 0
    %v262 = vsel %vm242, %v198, 0
    %v265 = vsel %vm242, %v199, 0
    %267 = vmatprep.subr.mxu0 %v201
    %268 = vmatpush1.msra.mxu0 %v200
    %269 = vmatprep.subr.mxu0 %v204
    %270 = vmatpush1.msra.mxu0 %v203
    %271 = vmatprep.subr.mxu0 %v207
    %272 = vmatpush1.msra.mxu0 %v206
    %273 = vmatprep.subr.mxu0 %v210
    %274 = vmatpush1.msra.mxu0 %v209
    %275 = vmatprep.subr.mxu0 %v213
    %276 = vmatpush1.msra.mxu0 %v212
    %277 = vmatprep.subr.mxu0 %v216
    %278 = vmatpush1.msra.mxu0 %v215
    %279 = vmatprep.subr.mxu0 %v219
    %280 = vmatpush1.msra.mxu0 %v218
    %281 = vmatprep.subr.mxu0 %v222
    %282 = vmatpush1.msra.mxu0 %v221
    %283 = vmatprep.subr.mxu0 0.0
    %284 = vmatpush1.msra.mxu0 0.0
    %285 = vmatprep.subr.mxu0 0.0
    %286 = vmatpush1.msra.mxu0 0.0
    %287 = vmatprep.subr.mxu0 0.0
    %288 = vmatpush1.msra.mxu0 0.0
    %289 = vmatprep.subr.mxu0 0.0
    %290 = vmatpush1.msra.mxu0 0.0
    %291 = vmatprep.subr.mxu0 0.0
    %292 = vmatpush1.msra.mxu0 0.0
    %293 = vmatprep.subr.mxu0 0.0
    %294 = vmatpush1.msra.mxu0 0.0
    %295 = vmatprep.subr.mxu0 0.0
    %296 = vmatpush1.msra.mxu0 0.0
    %297 = vmatprep.subr.mxu0 0.0
    %298 = vmatpush1.msra.mxu0 0.0
    %299 = vmatprep.subr.mxu0 0.0
    %300 = vmatpush1.msra.mxu0 0.0
    %301 = vmatprep.subr.mxu0 0.0
    %302 = vmatpush1.msra.mxu0 0.0
    %303 = vmatprep.subr.mxu0 0.0
    %304 = vmatpush1.msra.mxu0 0.0
    %305 = vmatprep.subr.mxu0 0.0
    %306 = vmatpush1.msra.mxu0 0.0
    %307 = vmatprep.subr.mxu0 0.0
    %308 = vmatpush1.msra.mxu0 0.0
    %309 = vmatprep.subr.mxu0 0.0
    %310 = vmatpush1.msra.mxu0 0.0
    %311 = vmatprep.subr.mxu0 0.0
    %312 = vmatpush1.msra.mxu0 0.0
    %313 = vmatprep.subr.mxu0 0.0
    %314 = vmatpush1.msra.mxu0 0.0
    %315 = vmatprep.subr.mxu0 0.0
    %316 = vmatpush1.msra.mxu0 0.0
    %317 = vmatprep.subr.mxu0 0.0
    %318 = vmatpush1.msra.mxu0 0.0
    %319 = vmatprep.subr.mxu0 0.0
    %320 = vmatpush1.msra.mxu0 0.0
    %321 = vmatprep.subr.mxu0 0.0
    %322 = vmatpush1.msra.mxu0 0.0
    %323 = vmatprep.subr.mxu0 0.0
    %324 = vmatpush1.msra.mxu0 0.0
    %325 = vmatprep.subr.mxu0 0.0
    %326 = vmatpush1.msra.mxu0 0.0
    %327 = vmatprep.subr.mxu0 0.0
    %328 = vmatpush1.msra.mxu0 0.0
    %329 = vmatprep.subr.mxu0 0.0
    %330 = vmatpush1.msra.mxu0 0.0
    %331 = vmatprep.mubr.f32.mxu0 0.0
    %332 = vmatmul.mubr.f32.gmra.mrb[0].mxu0 %v244
    %v333 = vpop.f32.mrb[0].mxu0
    %v334 = vadd.f32 %v230, %v333
    %v335 = vpop.f32.mrb[0].mxu0
    %v336 = vadd.f32 %v234, %v335
    %337 = vmatprep.mubr.f32.mxu0 0.0
    %338 = vmatmul.mubr.f32.gmra.mrb[0].mxu0 %v247
    %v339 = vpop.f32.mrb[0].mxu0
    %v340 = vadd.f32 %v230, %v339
    %v341 = vpop.f32.mrb[0].mxu0
    %v342 = vadd.f32 %v234, %v341
    %343 = vmatprep.mubr.f32.mxu0 0.0
    %344 = vmatmul.mubr.f32.gmra.mrb[0].mxu0 %v250
    %v345 = vpop.f32.mrb[0].mxu0
    %v346 = vadd.f32 %v230, %v345
    %v347 = vpop.f32.mrb[0].mxu0
    %v348 = vadd.f32 %v234, %v347
    %349 = vmatprep.mubr.f32.mxu0 0.0
    %350 = vmatmul.mubr.f32.gmra.mrb[0].mxu0 %v253
    %v351 = vpop.f32.mrb[0].mxu0
    %v352 = vadd.f32 %v230, %v351
    %v353 = vpop.f32.mrb[0].mxu0
    %v354 = vadd.f32 %v234, %v353
    %355 = vmatprep.mubr.f32.mxu0 0.0
    %356 = vmatmul.mubr.f32.gmra.mrb[0].mxu0 %v256
    %v357 = vpop.f32.mrb[0].mxu0
    %v358 = vadd.f32 %v230, %v357
    %v359 = vpop.f32.mrb[0].mxu0
    %v360 = vadd.f32 %v234, %v359
    %361 = vmatprep.mubr.f32.mxu0 0.0
    %362 = vmatmul.mubr.f32.gmra.mrb[0].mxu0 %v259
    %v363 = vpop.f32.mrb[0].mxu0
    %v364 = vadd.f32 %v230, %v363
    %v365 = vpop.f32.mrb[0].mxu0
    %v366 = vadd.f32 %v234, %v365
    %367 = vmatprep.mubr.f32.mxu0 0.0
    %368 = vmatmul.mubr.f32.gmra.mrb[0].mxu0 %v262
    %v369 = vpop.f32.mrb[0].mxu0
    %v370 = vadd.f32 %v230, %v369
    %v371 = vpop.f32.mrb[0].mxu0
    %v372 = vadd.f32 %v234, %v371
    %373 = vmatprep.mubr.f32.mxu0 0.0
    %374 = vmatmul.mubr.f32.gmra.mrb[0].mxu0 %v265
    %v375 = vpop.f32.mrb[0].mxu0
    %v376 = vadd.f32 %v230, %v375
    %v377 = vpop.f32.mrb[0].mxu0
    %v378 = vadd.f32 %v234, %v377
    %379 = vdwg.mxu0
    %380 = vmatprep.subr.mxu0 0.0
    %381 = vmatpush1.msra.mxu0 %v202
    %382 = vmatprep.subr.mxu0 0.0
    %383 = vmatpush1.msra.mxu0 %v205
    %384 = vmatprep.subr.mxu0 0.0
    %385 = vmatpush1.msra.mxu0 %v208
    %386 = vmatprep.subr.mxu0 0.0
    %387 = vmatpush1.msra.mxu0 %v211
    %388 = vmatprep.subr.mxu0 0.0
    %389 = vmatpush1.msra.mxu0 %v214
    %390 = vmatprep.subr.mxu0 0.0
    %391 = vmatpush1.msra.mxu0 %v217
    %392 = vmatprep.subr.mxu0 0.0
    %393 = vmatpush1.msra.mxu0 %v220
    %394 = vmatprep.subr.mxu0 0.0
    %395 = vmatpush1.msra.mxu0 %v223
    %396 = vmatprep.subr.mxu0 0.0
    %397 = vmatpush1.msra.mxu0 0.0
    %398 = vmatprep.subr.mxu0 0.0
    %399 = vmatpush1.msra.mxu0 0.0
    %400 = vmatprep.subr.mxu0 0.0
    %401 = vmatpush1.msra.mxu0 0.0
    %402 = vmatprep.subr.mxu0 0.0
    %403 = vmatpush1.msra.mxu0 0.0
    %404 = vmatprep.subr.mxu0 0.0
    %405 = vmatpush1.msra.mxu0 0.0
    %406 = vmatprep.subr.mxu0 0.0
    %407 = vmatpush1.msra.mxu0 0.0
    %408 = vmatprep.subr.mxu0 0.0
    %409 = vmatpush1.msra.mxu0 0.0
    %410 = vmatprep.subr.mxu0 0.0
    %411 = vmatpush1.msra.mxu0 0.0
    %412 = vmatprep.subr.mxu0 0.0
    %413 = vmatpush1.msra.mxu0 0.0
    %414 = vmatprep.subr.mxu0 0.0
    %415 = vmatpush1.msra.mxu0 0.0
    %416 = vmatprep.subr.mxu0 0.0
    %417 = vmatpush1.msra.mxu0 0.0
    %418 = vmatprep.subr.mxu0 0.0
    %419 = vmatpush1.msra.mxu0 0.0
    %420 = vmatprep.subr.mxu0 0.0
    %421 = vmatpush1.msra.mxu0 0.0
    %422 = vmatprep.subr.mxu0 0.0
    %423 = vmatpush1.msra.mxu0 0.0
    %424 = vmatprep.subr.mxu0 0.0
    %425 = vmatpush1.msra.mxu0 0.0
    %426 = vmatprep.subr.mxu0 0.0
    %427 = vmatpush1.msra.mxu0 0.0
    %428 = vmatprep.subr.mxu0 0.0
    %429 = vmatpush1.msra.mxu0 0.0
    %430 = vmatprep.subr.mxu0 0.0
    %431 = vmatpush1.msra.mxu0 0.0
    %432 = vmatprep.subr.mxu0 0.0
    %433 = vmatpush1.msra.mxu0 0.0
    %434 = vmatprep.subr.mxu0 0.0
    %435 = vmatpush1.msra.mxu0 0.0
    %436 = vmatprep.subr.mxu0 0.0
    %437 = vmatpush1.msra.mxu0 0.0
    %438 = vmatprep.subr.mxu0 0.0
    %439 = vmatpush1.msra.mxu0 0.0
    %440 = vmatprep.subr.mxu0 0.0
    %441 = vmatpush1.msra.mxu0 0.0
    %442 = vmatprep.subr.mxu0 0.0
    %443 = vmatpush1.msra.mxu0 0.0
    %444 = vmatprep.mubr.f32.mxu0 0.0
    %445 = vmatmul.mubr.f32.gmra.mrb[0].mxu0 %v244
    %v446 = vpop.f32.mrb[0].mxu0
    %v447 = vadd.f32 %v238, %v446
    %v448 = vpop.f32.mrb[0].mxu0
    %449 = vmatprep.mubr.f32.mxu0 0.0
    %450 = vmatmul.mubr.f32.gmra.mrb[0].mxu0 %v247
    %v451 = vpop.f32.mrb[0].mxu0
    %v452 = vadd.f32 %v238, %v451
    %v453 = vpop.f32.mrb[0].mxu0
    %454 = vmatprep.mubr.f32.mxu0 0.0
    %455 = vmatmul.mubr.f32.gmra.mrb[0].mxu0 %v250
    %v456 = vpop.f32.mrb[0].mxu0
    %v457 = vadd.f32 %v238, %v456
    %v458 = vpop.f32.mrb[0].mxu0
    %459 = vmatprep.mubr.f32.mxu0 0.0
    %460 = vmatmul.mubr.f32.gmra.mrb[0].mxu0 %v253
    %v461 = vpop.f32.mrb[0].mxu0
    %v462 = vadd.f32 %v238, %v461
    %v463 = vpop.f32.mrb[0].mxu0
    %464 = vmatprep.mubr.f32.mxu0 0.0
    %465 = vmatmul.mubr.f32.gmra.mrb[0].mxu0 %v256
    %v466 = vpop.f32.mrb[0].mxu0
    %v467 = vadd.f32 %v238, %v466
    %v468 = vpop.f32.mrb[0].mxu0
    %469 = vmatprep.mubr.f32.mxu0 0.0
    %470 = vmatmul.mubr.f32.gmra.mrb[0].mxu0 %v259
    %v471 = vpop.f32.mrb[0].mxu0
    %v472 = vadd.f32 %v238, %v471
    %v473 = vpop.f32.mrb[0].mxu0
    %474 = vmatprep.mubr.f32.mxu0 0.0
    %475 = vmatmul.mubr.f32.gmra.mrb[0].mxu0 %v262
    %v476 = vpop.f32.mrb[0].mxu0
    %v477 = vadd.f32 %v238, %v476
    %v478 = vpop.f32.mrb[0].mxu0
    %479 = vmatprep.mubr.f32.mxu0 0.0
    %480 = vmatmul.mubr.f32.gmra.mrb[0].mxu0 %v265
    %v481 = vpop.f32.mrb[0].mxu0
    %v482 = vadd.f32 %v238, %v481
    %v483 = vpop.f32.mrb[0].mxu0
    %484 = vdwg.mxu0
    %485 = vst [vmem:[#allocation2] sm:$0xff] %v334
    %486 = vst [vmem:[#allocation2 + $0x8] sm:$0xff] %v336
    %487 = vst [vmem:[#allocation2 + $0x10] sm:$0xff] %v447
    %488 = vst [vmem:[#allocation2 + $0x18] sm:$0xff] %v340
    %489 = vst [vmem:[#allocation2 + $0x20] sm:$0xff] %v342
    %490 = vst [vmem:[#allocation2 + $0x28] sm:$0xff] %v452
    %491 = vst [vmem:[#allocation2 + $0x30] sm:$0xff] %v346
    %492 = vst [vmem:[#allocation2 + $0x38] sm:$0xff] %v348
    %493 = vst [vmem:[#allocation2 + $0x40] sm:$0xff] %v457
    %494 = vst [vmem:[#allocation2 + $0x48] sm:$0xff] %v352
    %495 = vst [vmem:[#allocation2 + $0x50] sm:$0xff] %v354
    %496 = vst [vmem:[#allocation2 + $0x58] sm:$0xff] %v462
    %497 = vst [vmem:[#allocation2 + $0x60] sm:$0xff] %v358
    %498 = vst [vmem:[#allocation2 + $0x68] sm:$0xff] %v360
    %499 = vst [vmem:[#allocation2 + $0x70] sm:$0xff] %v467
    %500 = vst [vmem:[#allocation2 + $0x78] sm:$0xff] %v364
    %501 = vst [vmem:[#allocation2 + $0x80] sm:$0xff] %v366
    %502 = vst [vmem:[#allocation2 + $0x88] sm:$0xff] %v472
    %503 = vst [vmem:[#allocation2 + $0x90] sm:$0xff] %v370
    %504 = vst [vmem:[#allocation2 + $0x98] sm:$0xff] %v372
    %505 = vst [vmem:[#allocation2 + $0xa0] sm:$0xff] %v477
    %506 = vst [vmem:[#allocation2 + $0xa8] sm:$0xff] %v376
    %507 = vst [vmem:[#allocation2 + $0xb0] sm:$0xff] %v378
    %508 = vst [vmem:[#allocation2 + $0xb8] sm:$0xff] %v482
    %s509 = scalar_lea.vmem %s4, 2
    %v510 = vld [vmem:[%s509] ss:$8 sm:$0xf]
    %v511 = vld [vmem:[%s509] ss:$8 sm:$0x30]
    %v512 = vor.u32 %v510, %v511
    %s513 = scalar_lea.vmem %s4, 3
    %v514 = vld [vmem:[%s513] ss:$8 sm:$0x7]
    %v515 = vld [vmem:[%s1] sm:$0x3]
    %s516 = scalar_lea.vmem %s1, 2
    %v517 = vld [vmem:[%s516] sm:$0x3]
    %v518 = vld [vmem:[#allocation7 + $0x18] sm:$0xff]
    %v519 = vld [vmem:[#allocation7 + $0x20] sm:$0xff]
    %v520 = vld [vmem:[#allocation7 + $0x28] sm:$0xff]
    %v521 = vld [vmem:[#allocation7 + $0x68] sm:$0xff]
    %v522 = vld [vmem:[#allocation7 + $0x70] sm:$0xff]
    %v523 = vld [vmem:[#allocation7 + $0x78] sm:$0xff]
    %v524 = vld [vmem:[#allocation7 + $0xb8] sm:$0xff]
    %v525 = vld [vmem:[#allocation7 + $0xc0] sm:$0xff]
    %v526 = vld [vmem:[#allocation7 + $0xc8] sm:$0xff]
    %v527 = vld [vmem:[#allocation7 + $0x108] sm:$0xff]
    %v528 = vld [vmem:[#allocation7 + $0x110] sm:$0xff]
    %v529 = vld [vmem:[#allocation7 + $0x118] sm:$0xff]
    %s530 = scalar_lea.vmem %s4, 26
    %v531 = vld [vmem:[%s530] ss:$8 sm:$0x7]
    %v533 = vlaneseq
    %v534 = vshrl.u32 %v533, 7
    %v535 = vsub.s32 0, %v534
    %v536 = vrot.slane %v531, %v535
    %v537 = vlaneseq
    %v538 = vshrl.u32 %v537, 7
    %v539 = vsub.s32 1, %v538
    %v540 = vrot.slane %v531, %v539
    %v541 = vlaneseq
    %v542 = vshrl.u32 %v541, 7
    %v543 = vsub.s32 2, %v542
    %v544 = vrot.slane %v531, %v543
    %vm548 = vcmask 261120
    %v550 = vsel %vm548, %v515, 0
    %552 = vmatprep.subr.mxu0 %v519
    %553 = vmatpush1.msra.mxu0 %v518
    %554 = vmatprep.subr.mxu0 %v522
    %555 = vmatpush1.msra.mxu0 %v521
    %556 = vmatprep.subr.mxu0 %v525
    %557 = vmatpush1.msra.mxu0 %v524
    %558 = vmatprep.subr.mxu0 %v528
    %559 = vmatpush1.msra.mxu0 %v527
    %560 = vmatprep.subr.mxu0 0.0
    %561 = vmatpush1.msra.mxu0 0.0
    %562 = vmatprep.subr.mxu0 0.0
    %563 = vmatpush1.msra.mxu0 0.0
    %564 = vmatprep.subr.mxu0 0.0
    %565 = vmatpush1.msra.mxu0 0.0
    %566 = vmatprep.subr.mxu0 0.0
    %567 = vmatpush1.msra.mxu0 0.0
    %568 = vmatprep.subr.mxu0 0.0
    %569 = vmatpush1.msra.mxu0 0.0
    %570 = vmatprep.subr.mxu0 0.0
    %571 = vmatpush1.msra.mxu0 0.0
    %572 = vmatprep.subr.mxu0 0.0
    %573 = vmatpush1.msra.mxu0 0.0
    %574 = vmatprep.subr.mxu0 0.0
    %575 = vmatpush1.msra.mxu0 0.0
    %576 = vmatprep.subr.mxu0 0.0
    %577 = vmatpush1.msra.mxu0 0.0
    %578 = vmatprep.subr.mxu0 0.0
    %579 = vmatpush1.msra.mxu0 0.0
    %580 = vmatprep.subr.mxu0 0.0
    %581 = vmatpush1.msra.mxu0 0.0
    %582 = vmatprep.subr.mxu0 0.0
    %583 = vmatpush1.msra.mxu0 0.0
    %584 = vmatprep.subr.mxu0 0.0
    %585 = vmatpush1.msra.mxu0 0.0
    %586 = vmatprep.subr.mxu0 0.0
    %587 = vmatpush1.msra.mxu0 0.0
    %588 = vmatprep.subr.mxu0 0.0
    %589 = vmatpush1.msra.mxu0 0.0
    %590 = vmatprep.subr.mxu0 0.0
    %591 = vmatpush1.msra.mxu0 0.0
    %592 = vmatprep.subr.mxu0 0.0
    %593 = vmatpush1.msra.mxu0 0.0
    %594 = vmatprep.subr.mxu0 0.0
    %595 = vmatpush1.msra.mxu0 0.0
    %596 = vmatprep.subr.mxu0 0.0
    %597 = vmatpush1.msra.mxu0 0.0
    %598 = vmatprep.subr.mxu0 0.0
    %599 = vmatpush1.msra.mxu0 0.0
    %600 = vmatprep.subr.mxu0 0.0
    %601 = vmatpush1.msra.mxu0 0.0
    %602 = vmatprep.subr.mxu0 0.0
    %603 = vmatpush1.msra.mxu0 0.0
    %604 = vmatprep.subr.mxu0 0.0
    %605 = vmatpush1.msra.mxu0 0.0
    %606 = vmatprep.subr.mxu0 0.0
    %607 = vmatpush1.msra.mxu0 0.0
    %608 = vmatprep.subr.mxu0 0.0
    %609 = vmatpush1.msra.mxu0 0.0
    %610 = vmatprep.subr.mxu0 0.0
    %611 = vmatpush1.msra.mxu0 0.0
    %612 = vmatprep.subr.mxu0 0.0
    %613 = vmatpush1.msra.mxu0 0.0
    %614 = vmatprep.subr.mxu0 0.0
    %615 = vmatpush1.msra.mxu0 0.0
    %616 = vmatprep.mubr.f32.mxu0 0.0
    %617 = vmatmul.mubr.f32.gmra.mrb[0].mxu0 %v550
    %v618 = vpop.f32.mrb[0].mxu0
    %v619 = vadd.f32 %v536, %v618
    %v620 = vpop.f32.mrb[0].mxu0
    %v621 = vadd.f32 %v540, %v620
    %622 = vdwg.mxu0
    %623 = vmatprep.subr.mxu0 0.0
    %624 = vmatpush1.msra.mxu0 %v520
    %625 = vmatprep.subr.mxu0 0.0
    %626 = vmatpush1.msra.mxu0 %v523
    %627 = vmatprep.subr.mxu0 0.0
    %628 = vmatpush1.msra.mxu0 %v526
    %629 = vmatprep.subr.mxu0 0.0
    %630 = vmatpush1.msra.mxu0 %v529
    %631 = vmatprep.subr.mxu0 0.0
    %632 = vmatpush1.msra.mxu0 0.0
    %633 = vmatprep.subr.mxu0 0.0
    %634 = vmatpush1.msra.mxu0 0.0
    %635 = vmatprep.subr.mxu0 0.0
    %636 = vmatpush1.msra.mxu0 0.0
    %637 = vmatprep.subr.mxu0 0.0
    %638 = vmatpush1.msra.mxu0 0.0
    %639 = vmatprep.subr.mxu0 0.0
    %640 = vmatpush1.msra.mxu0 0.0
    %641 = vmatprep.subr.mxu0 0.0
    %642 = vmatpush1.msra.mxu0 0.0
    %643 = vmatprep.subr.mxu0 0.0
    %644 = vmatpush1.msra.mxu0 0.0
    %645 = vmatprep.subr.mxu0 0.0
    %646 = vmatpush1.msra.mxu0 0.0
    %647 = vmatprep.subr.mxu0 0.0
    %648 = vmatpush1.msra.mxu0 0.0
    %649 = vmatprep.subr.mxu0 0.0
    %650 = vmatpush1.msra.mxu0 0.0
    %651 = vmatprep.subr.mxu0 0.0
    %652 = vmatpush1.msra.mxu0 0.0
    %653 = vmatprep.subr.mxu0 0.0
    %654 = vmatpush1.msra.mxu0 0.0
    %655 = vmatprep.subr.mxu0 0.0
    %656 = vmatpush1.msra.mxu0 0.0
    %657 = vmatprep.subr.mxu0 0.0
    %658 = vmatpush1.msra.mxu0 0.0
    %659 = vmatprep.subr.mxu0 0.0
    %660 = vmatpush1.msra.mxu0 0.0
    %661 = vmatprep.subr.mxu0 0.0
    %662 = vmatpush1.msra.mxu0 0.0
    %663 = vmatprep.subr.mxu0 0.0
    %664 = vmatpush1.msra.mxu0 0.0
    %665 = vmatprep.subr.mxu0 0.0
    %666 = vmatpush1.msra.mxu0 0.0
    %667 = vmatprep.subr.mxu0 0.0
    %668 = vmatpush1.msra.mxu0 0.0
    %669 = vmatprep.subr.mxu0 0.0
    %670 = vmatpush1.msra.mxu0 0.0
    %671 = vmatprep.subr.mxu0 0.0
    %672 = vmatpush1.msra.mxu0 0.0
    %673 = vmatprep.subr.mxu0 0.0
    %674 = vmatpush1.msra.mxu0 0.0
    %675 = vmatprep.subr.mxu0 0.0
    %676 = vmatpush1.msra.mxu0 0.0
    %677 = vmatprep.subr.mxu0 0.0
    %678 = vmatpush1.msra.mxu0 0.0
    %679 = vmatprep.subr.mxu0 0.0
    %680 = vmatpush1.msra.mxu0 0.0
    %681 = vmatprep.subr.mxu0 0.0
    %682 = vmatpush1.msra.mxu0 0.0
    %683 = vmatprep.subr.mxu0 0.0
    %684 = vmatpush1.msra.mxu0 0.0
    %685 = vmatprep.subr.mxu0 0.0
    %686 = vmatpush1.msra.mxu0 0.0
    %687 = vmatprep.mubr.f32.mxu0 0.0
    %688 = vmatmul.mubr.f32.gmra.mrb[0].mxu0 %v550
    %v689 = vpop.f32.mrb[0].mxu0
    %v690 = vadd.f32 %v544, %v689
    %v691 = vpop.f32.mrb[0].mxu0
    %692 = vdwg.mxu0
    %693 = vst.msk [vmem:[#allocation3] sm:$0xff] %vm548, 0.0
    %694 = vst.msk [vmem:[#allocation3 + $0x8] sm:$0xff] %vm548, 0.0
    %695 = vst.msk [vmem:[#allocation3 + $0x10] sm:$0xff] %vm548, 0.0
    %696 = vst.msk [vmem:[#allocation3 + $0x18] sm:$0xff] %vm548, 0.0
    %697 = vst.msk [vmem:[#allocation3 + $0x20] sm:$0xff] %vm548, 0.0
    %698 = vst.msk [vmem:[#allocation3 + $0x28] sm:$0xff] %vm548, 0.0
    %699 = vst.msk [vmem:[#allocation3 + $0x30] sm:$0xff] %vm548, 0.0
    %700 = vst.msk [vmem:[#allocation3 + $0x38] sm:$0xff] %vm548, 0.0
    %v701 = vld [vmem:[#allocation2] sm:$0x3]
    %v702 = vld [vmem:[#allocation2 + $0x8] sm:$0x3]
    %v703 = vld [vmem:[#allocation2 + $0x10] sm:$0x3]
    %v704 = vld [vmem:[#allocation7 + $0x30] sm:$0xff]
    %v705 = vld [vmem:[#allocation7 + $0x38] sm:$0xff]
    %v706 = vld [vmem:[#allocation7 + $0x40] sm:$0xff]
    %v707 = vld [vmem:[#allocation7 + $0x80] sm:$0xff]
    %v708 = vld [vmem:[#allocation7 + $0x88] sm:$0xff]
    %v709 = vld [vmem:[#allocation7 + $0x90] sm:$0xff]
    %v710 = vld [vmem:[#allocation7 + $0xd0] sm:$0xff]
    %v711 = vld [vmem:[#allocation7 + $0xd8] sm:$0xff]
    %v712 = vld [vmem:[#allocation7 + $0xe0] sm:$0xff]
    %v713 = vld [vmem:[#allocation7 + $0x120] sm:$0xff]
    %v714 = vld [vmem:[#allocation7 + $0x128] sm:$0xff]
    %v715 = vld [vmem:[#allocation7 + $0x130] sm:$0xff]
    %v717 = vlaneseq
    %v718 = vshrl.u32 %v717, 7
    %v719 = vsub.s32 0, %v718
    %v720 = vrot.slane %v514, %v719
    %v721 = vlaneseq
    %v722 = vshrl.u32 %v721, 7
    %v723 = vsub.s32 1, %v722
    %v724 = vrot.slane %v514, %v723
    %v725 = vlaneseq
    %v726 = vshrl.u32 %v725, 7
    %v727 = vsub.s32 2, %v726
    %v728 = vrot.slane %v514, %v727
    %v733 = vsel %vm548, %v517, 0
    %735 = vmatprep.subr.mxu0 %v705
    %736 = vmatpush1.msra.mxu0 %v704
    %737 = vmatprep.subr.mxu0 %v708
    %738 = vmatpush1.msra.mxu0 %v707
    %739 = vmatprep.subr.mxu0 %v711
    %740 = vmatpush1.msra.mxu0 %v710
    %741 = vmatprep.subr.mxu0 %v714
    %742 = vmatpush1.msra.mxu0 %v713
    %743 = vmatprep.subr.mxu0 0.0
    %744 = vmatpush1.msra.mxu0 0.0
    %745 = vmatprep.subr.mxu0 0.0
    %746 = vmatpush1.msra.mxu0 0.0
    %747 = vmatprep.subr.mxu0 0.0
    %748 = vmatpush1.msra.mxu0 0.0
    %749 = vmatprep.subr.mxu0 0.0
    %750 = vmatpush1.msra.mxu0 0.0
    %751 = vmatprep.subr.mxu0 0.0
    %752 = vmatpush1.msra.mxu0 0.0
    %753 = vmatprep.subr.mxu0 0.0
    %754 = vmatpush1.msra.mxu0 0.0
    %755 = vmatprep.subr.mxu0 0.0
    %756 = vmatpush1.msra.mxu0 0.0
    %757 = vmatprep.subr.mxu0 0.0
    %758 = vmatpush1.msra.mxu0 0.0
    %759 = vmatprep.subr.mxu0 0.0
    %760 = vmatpush1.msra.mxu0 0.0
    %761 = vmatprep.subr.mxu0 0.0
    %762 = vmatpush1.msra.mxu0 0.0
    %763 = vmatprep.subr.mxu0 0.0
    %764 = vmatpush1.msra.mxu0 0.0
    %765 = vmatprep.subr.mxu0 0.0
    %766 = vmatpush1.msra.mxu0 0.0
    %767 = vmatprep.subr.mxu0 0.0
    %768 = vmatpush1.msra.mxu0 0.0
    %769 = vmatprep.subr.mxu0 0.0
    %770 = vmatpush1.msra.mxu0 0.0
    %771 = vmatprep.subr.mxu0 0.0
    %772 = vmatpush1.msra.mxu0 0.0
    %773 = vmatprep.subr.mxu0 0.0
    %774 = vmatpush1.msra.mxu0 0.0
    %775 = vmatprep.subr.mxu0 0.0
    %776 = vmatpush1.msra.mxu0 0.0
    %777 = vmatprep.subr.mxu0 0.0
    %778 = vmatpush1.msra.mxu0 0.0
    %779 = vmatprep.subr.mxu0 0.0
    %780 = vmatpush1.msra.mxu0 0.0
    %781 = vmatprep.subr.mxu0 0.0
    %782 = vmatpush1.msra.mxu0 0.0
    %783 = vmatprep.subr.mxu0 0.0
    %784 = vmatpush1.msra.mxu0 0.0
    %785 = vmatprep.subr.mxu0 0.0
    %786 = vmatpush1.msra.mxu0 0.0
    %787 = vmatprep.subr.mxu0 0.0
    %788 = vmatpush1.msra.mxu0 0.0
    %789 = vmatprep.subr.mxu0 0.0
    %790 = vmatpush1.msra.mxu0 0.0
    %791 = vmatprep.subr.mxu0 0.0
    %792 = vmatpush1.msra.mxu0 0.0
    %793 = vmatprep.subr.mxu0 0.0
    %794 = vmatpush1.msra.mxu0 0.0
    %795 = vmatprep.subr.mxu0 0.0
    %796 = vmatpush1.msra.mxu0 0.0
    %797 = vmatprep.subr.mxu0 0.0
    %798 = vmatpush1.msra.mxu0 0.0
    %799 = vmatprep.mubr.f32.mxu0 0.0
    %800 = vmatmul.mubr.f32.gmra.mrb[0].mxu0 %v733
    %v801 = vpop.f32.mrb[0].mxu0
    %v802 = vadd.f32 %v720, %v801
    %v803 = vpop.f32.mrb[0].mxu0
    %v804 = vadd.f32 %v724, %v803
    %805 = vdwg.mxu0
    %806 = vmatprep.subr.mxu0 0.0
    %807 = vmatpush1.msra.mxu0 %v706
    %808 = vmatprep.subr.mxu0 0.0
    %809 = vmatpush1.msra.mxu0 %v709
    %810 = vmatprep.subr.mxu0 0.0
    %811 = vmatpush1.msra.mxu0 %v712
    %812 = vmatprep.subr.mxu0 0.0
    %813 = vmatpush1.msra.mxu0 %v715
    %814 = vmatprep.subr.mxu0 0.0
    %815 = vmatpush1.msra.mxu0 0.0
    %816 = vmatprep.subr.mxu0 0.0
    %817 = vmatpush1.msra.mxu0 0.0
    %818 = vmatprep.subr.mxu0 0.0
    %819 = vmatpush1.msra.mxu0 0.0
    %820 = vmatprep.subr.mxu0 0.0
    %821 = vmatpush1.msra.mxu0 0.0
    %822 = vmatprep.subr.mxu0 0.0
    %823 = vmatpush1.msra.mxu0 0.0
    %824 = vmatprep.subr.mxu0 0.0
    %825 = vmatpush1.msra.mxu0 0.0
    %826 = vmatprep.subr.mxu0 0.0
    %827 = vmatpush1.msra.mxu0 0.0
    %828 = vmatprep.subr.mxu0 0.0
    %829 = vmatpush1.msra.mxu0 0.0
    %830 = vmatprep.subr.mxu0 0.0
    %831 = vmatpush1.msra.mxu0 0.0
    %832 = vmatprep.subr.mxu0 0.0
    %833 = vmatpush1.msra.mxu0 0.0
    %834 = vmatprep.subr.mxu0 0.0
    %835 = vmatpush1.msra.mxu0 0.0
    %836 = vmatprep.subr.mxu0 0.0
    %837 = vmatpush1.msra.mxu0 0.0
    %838 = vmatprep.subr.mxu0 0.0
    %839 = vmatpush1.msra.mxu0 0.0
    %840 = vmatprep.subr.mxu0 0.0
    %841 = vmatpush1.msra.mxu0 0.0
    %842 = vmatprep.subr.mxu0 0.0
    %843 = vmatpush1.msra.mxu0 0.0
    %844 = vmatprep.subr.mxu0 0.0
    %845 = vmatpush1.msra.mxu0 0.0
    %846 = vmatprep.subr.mxu0 0.0
    %847 = vmatpush1.msra.mxu0 0.0
    %848 = vmatprep.subr.mxu0 0.0
    %849 = vmatpush1.msra.mxu0 0.0
    %850 = vmatprep.subr.mxu0 0.0
    %851 = vmatpush1.msra.mxu0 0.0
    %852 = vmatprep.subr.mxu0 0.0
    %853 = vmatpush1.msra.mxu0 0.0
    %854 = vmatprep.subr.mxu0 0.0
    %855 = vmatpush1.msra.mxu0 0.0
    %856 = vmatprep.subr.mxu0 0.0
    %857 = vmatpush1.msra.mxu0 0.0
    %858 = vmatprep.subr.mxu0 0.0
    %859 = vmatpush1.msra.mxu0 0.0
    %860 = vmatprep.subr.mxu0 0.0
    %861 = vmatpush1.msra.mxu0 0.0
    %862 = vmatprep.subr.mxu0 0.0
    %863 = vmatpush1.msra.mxu0 0.0
    %864 = vmatprep.subr.mxu0 0.0
    %865 = vmatpush1.msra.mxu0 0.0
    %866 = vmatprep.subr.mxu0 0.0
    %867 = vmatpush1.msra.mxu0 0.0
    %868 = vmatprep.subr.mxu0 0.0
    %869 = vmatpush1.msra.mxu0 0.0
    %870 = vmatprep.mubr.f32.mxu0 0.0
    %871 = vmatmul.mubr.f32.gmra.mrb[0].mxu0 %v733
    %v872 = vpop.f32.mrb[0].mxu0
    %v873 = vadd.f32 %v728, %v872
    %v874 = vpop.f32.mrb[0].mxu0
    %875 = vdwg.mxu0
    %v876 = vadd.f32 %v701, %v619
    %v877 = vadd.f32 %v702, %v621
    %v878 = vxor.u32 %v876, 2147483648
    %v879 = vxor.u32 %v877, 2147483648
    %v880 = vmul.f32 %v878, 1.442695
    %v881 = vpow.pop %v880
    %v882 = vmul.f32 %v879, 1.442695
    %v883 = vpow.pop %v882
    %v884 = vadd.f32 %v881, 1.0
    %v885 = vadd.f32 %v883, 1.0
    %v886 = vrcp.pop %v884
    %v887 = vmul.f32 1.0, %v886
    %v888 = vrcp.pop %v885
    %v889 = vmul.f32 1.0, %v888
    %v890 = vmul.f32 %v887, %v690
    %v891 = vadd.f32 %v703, %v890
    %v892 = vtanh.pop %v891
    %v893 = vsub.f32 1.0, %v889
    %v894 = vmul.f32 %v893, %v892
    %v895 = vmul.f32 %v889, %v515
    %v896 = vadd.f32 %v894, %v895
    %v897 = vld [vmem:[#allocation7] sm:$0xff]
    %v898 = vld [vmem:[#allocation7 + $0x8] sm:$0xff]
    %v899 = vld [vmem:[#allocation7 + $0x10] sm:$0xff]
    %v900 = vld [vmem:[#allocation7 + $0x18] sm:$0xff]
    %v901 = vld [vmem:[#allocation7 + $0x20] sm:$0xff]
    %v902 = vld [vmem:[#allocation7 + $0x28] sm:$0xff]
    %v903 = vld [vmem:[#allocation7 + $0x50] sm:$0xff]
    %v904 = vld [vmem:[#allocation7 + $0x58] sm:$0xff]
    %v905 = vld [vmem:[#allocation7 + $0x60] sm:$0xff]
    %v906 = vld [vmem:[#allocation7 + $0x68] sm:$0xff]
    %v907 = vld [vmem:[#allocation7 + $0x70] sm:$0xff]
    %v908 = vld [vmem:[#allocation7 + $0x78] sm:$0xff]
    %v909 = vld [vmem:[#allocation7 + $0xa0] sm:$0xff]
    %v910 = vld [vmem:[#allocation7 + $0xa8] sm:$0xff]
    %v911 = vld [vmem:[#allocation7 + $0xb0] sm:$0xff]
    %v912 = vld [vmem:[#allocation7 + $0xb8] sm:$0xff]
    %v913 = vld [vmem:[#allocation7 + $0xc0] sm:$0xff]
    %v914 = vld [vmem:[#allocation7 + $0xc8] sm:$0xff]
    %v915 = vld [vmem:[#allocation7 + $0xf0] sm:$0xff]
    %v916 = vld [vmem:[#allocation7 + $0xf8] sm:$0xff]
    %v917 = vld [vmem:[#allocation7 + $0x100] sm:$0xff]
    %v918 = vld [vmem:[#allocation7 + $0x108] sm:$0xff]
    %v919 = vld [vmem:[#allocation7 + $0x110] sm:$0xff]
    %v920 = vld [vmem:[#allocation7 + $0x118] sm:$0xff]
    %v922 = vlaneseq
    %v923 = vshrl.u32 %v922, 7
    %v924 = vsub.s32 0, %v923
    %v925 = vrot.slane %v512, %v924
    %v926 = vlaneseq
    %v927 = vshrl.u32 %v926, 7
    %v928 = vsub.s32 1, %v927
    %v929 = vrot.slane %v512, %v928
    %v930 = vlaneseq
    %v931 = vshrl.u32 %v930, 7
    %v932 = vsub.s32 2, %v931
    %v933 = vrot.slane %v512, %v932
    %v934 = vlaneseq
    %v935 = vshrl.u32 %v934, 7
    %v936 = vsub.s32 3, %v935
    %v937 = vrot.slane %v512, %v936
    %v938 = vlaneseq
    %v939 = vshrl.u32 %v938, 7
    %v940 = vsub.s32 4, %v939
    %v941 = vrot.slane %v512, %v940
    %v942 = vlaneseq
    %v943 = vshrl.u32 %v942, 7
    %v944 = vsub.s32 5, %v943
    %v945 = vrot.slane %v512, %v944
    %v953 = vsel %vm548, %v896, 0
    %955 = vmatprep.subr.mxu0 %v898
    %956 = vmatpush1.msra.mxu0 %v897
    %957 = vmatprep.subr.mxu0 %v904
    %958 = vmatpush1.msra.mxu0 %v903
    %959 = vmatprep.subr.mxu0 %v910
    %960 = vmatpush1.msra.mxu0 %v909
    %961 = vmatprep.subr.mxu0 %v916
    %962 = vmatpush1.msra.mxu0 %v915
    %963 = vmatprep.subr.mxu0 0.0
    %964 = vmatpush1.msra.mxu0 0.0
    %965 = vmatprep.subr.mxu0 0.0
    %966 = vmatpush1.msra.mxu0 0.0
    %967 = vmatprep.subr.mxu0 0.0
    %968 = vmatpush1.msra.mxu0 0.0
    %969 = vmatprep.subr.mxu0 0.0
    %970 = vmatpush1.msra.mxu0 0.0
    %971 = vmatprep.subr.mxu0 0.0
    %972 = vmatpush1.msra.mxu0 0.0
    %973 = vmatprep.subr.mxu0 0.0
    %974 = vmatpush1.msra.mxu0 0.0
    %975 = vmatprep.subr.mxu0 0.0
    %976 = vmatpush1.msra.mxu0 0.0
    %977 = vmatprep.subr.mxu0 0.0
    %978 = vmatpush1.msra.mxu0 0.0
    %979 = vmatprep.subr.mxu0 0.0
    %980 = vmatpush1.msra.mxu0 0.0
    %981 = vmatprep.subr.mxu0 0.0
    %982 = vmatpush1.msra.mxu0 0.0
    %983 = vmatprep.subr.mxu0 0.0
    %984 = vmatpush1.msra.mxu0 0.0
    %985 = vmatprep.subr.mxu0 0.0
    %986 = vmatpush1.msra.mxu0 0.0
    %987 = vmatprep.subr.mxu0 0.0
    %988 = vmatpush1.msra.mxu0 0.0
    %989 = vmatprep.subr.mxu0 0.0
    %990 = vmatpush1.msra.mxu0 0.0
    %991 = vmatprep.subr.mxu0 0.0
    %992 = vmatpush1.msra.mxu0 0.0
    %993 = vmatprep.subr.mxu0 0.0
    %994 = vmatpush1.msra.mxu0 0.0
    %995 = vmatprep.subr.mxu0 0.0
    %996 = vmatpush1.msra.mxu0 0.0
    %997 = vmatprep.subr.mxu0 0.0
    %998 = vmatpush1.msra.mxu0 0.0
    %999 = vmatprep.subr.mxu0 0.0
    %1000 = vmatpush1.msra.mxu0 0.0
    %1001 = vmatprep.subr.mxu0 0.0
    %1002 = vmatpush1.msra.mxu0 0.0
    %1003 = vmatprep.subr.mxu0 0.0
    %1004 = vmatpush1.msra.mxu0 0.0
    %1005 = vmatprep.subr.mxu0 0.0
    %1006 = vmatpush1.msra.mxu0 0.0
    %1007 = vmatprep.subr.mxu0 0.0
    %1008 = vmatpush1.msra.mxu0 0.0
    %1009 = vmatprep.subr.mxu0 0.0
    %1010 = vmatpush1.msra.mxu0 0.0
    %1011 = vmatprep.subr.mxu0 0.0
    %1012 = vmatpush1.msra.mxu0 0.0
    %1013 = vmatprep.subr.mxu0 0.0
    %1014 = vmatpush1.msra.mxu0 0.0
    %1015 = vmatprep.subr.mxu0 0.0
    %1016 = vmatpush1.msra.mxu0 0.0
    %1017 = vmatprep.subr.mxu0 0.0
    %1018 = vmatpush1.msra.mxu0 0.0
    %1019 = vmatprep.mubr.f32.mxu0 0.0
    %1020 = vmatmul.mubr.f32.gmra.mrb[0].mxu0 %v953
    %v1021 = vpop.f32.mrb[0].mxu0
    %v1022 = vadd.f32 %v925, %v1021
    %v1023 = vpop.f32.mrb[0].mxu0
    %v1024 = vadd.f32 %v929, %v1023
    %1025 = vdwg.mxu0
    %1026 = vmatprep.subr.mxu0 %v900
    %1027 = vmatpush1.msra.mxu0 %v899
    %1028 = vmatprep.subr.mxu0 %v906
    %1029 = vmatpush1.msra.mxu0 %v905
    %1030 = vmatprep.subr.mxu0 %v912
    %1031 = vmatpush1.msra.mxu0 %v911
    %1032 = vmatprep.subr.mxu0 %v918
    %1033 = vmatpush1.msra.mxu0 %v917
    %1034 = vmatprep.subr.mxu0 0.0
    %1035 = vmatpush1.msra.mxu0 0.0
    %1036 = vmatprep.subr.mxu0 0.0
    %1037 = vmatpush1.msra.mxu0 0.0
    %1038 = vmatprep.subr.mxu0 0.0
    %1039 = vmatpush1.msra.mxu0 0.0
    %1040 = vmatprep.subr.mxu0 0.0
    %1041 = vmatpush1.msra.mxu0 0.0
    %1042 = vmatprep.subr.mxu0 0.0
    %1043 = vmatpush1.msra.mxu0 0.0
    %1044 = vmatprep.subr.mxu0 0.0
    %1045 = vmatpush1.msra.mxu0 0.0
    %1046 = vmatprep.subr.mxu0 0.0
    %1047 = vmatpush1.msra.mxu0 0.0
    %1048 = vmatprep.subr.mxu0 0.0
    %1049 = vmatpush1.msra.mxu0 0.0
    %1050 = vmatprep.subr.mxu0 0.0
    %1051 = vmatpush1.msra.mxu0 0.0
    %1052 = vmatprep.subr.mxu0 0.0
    %1053 = vmatpush1.msra.mxu0 0.0
    %1054 = vmatprep.subr.mxu0 0.0
    %1055 = vmatpush1.msra.mxu0 0.0
    %1056 = vmatprep.subr.mxu0 0.0
    %1057 = vmatpush1.msra.mxu0 0.0
    %1058 = vmatprep.subr.mxu0 0.0
    %1059 = vmatpush1.msra.mxu0 0.0
    %1060 = vmatprep.subr.mxu0 0.0
    %1061 = vmatpush1.msra.mxu0 0.0
    %1062 = vmatprep.subr.mxu0 0.0
    %1063 = vmatpush1.msra.mxu0 0.0
    %1064 = vmatprep.subr.mxu0 0.0
    %1065 = vmatpush1.msra.mxu0 0.0
    %1066 = vmatprep.subr.mxu0 0.0
    %1067 = vmatpush1.msra.mxu0 0.0
    %1068 = vmatprep.subr.mxu0 0.0
    %1069 = vmatpush1.msra.mxu0 0.0
    %1070 = vmatprep.subr.mxu0 0.0
    %1071 = vmatpush1.msra.mxu0 0.0
    %1072 = vmatprep.subr.mxu0 0.0
    %1073 = vmatpush1.msra.mxu0 0.0
    %1074 = vmatprep.subr.mxu0 0.0
    %1075 = vmatpush1.msra.mxu0 0.0
    %1076 = vmatprep.subr.mxu0 0.0
    %1077 = vmatpush1.msra.mxu0 0.0
    %1078 = vmatprep.subr.mxu0 0.0
    %1079 = vmatpush1.msra.mxu0 0.0
    %1080 = vmatprep.subr.mxu0 0.0
    %1081 = vmatpush1.msra.mxu0 0.0
    %1082 = vmatprep.subr.mxu0 0.0
    %1083 = vmatpush1.msra.mxu0 0.0
    %1084 = vmatprep.subr.mxu0 0.0
    %1085 = vmatpush1.msra.mxu0 0.0
    %1086 = vmatprep.subr.mxu0 0.0
    %1087 = vmatpush1.msra.mxu0 0.0
    %1088 = vmatprep.subr.mxu0 0.0
    %1089 = vmatpush1.msra.mxu0 0.0
    %1090 = vmatprep.mubr.f32.mxu0 0.0
    %1091 = vmatmul.mubr.f32.gmra.mrb[0].mxu0 %v953
    %v1092 = vpop.f32.mrb[0].mxu0
    %v1093 = vadd.f32 %v933, %v1092
    %v1094 = vpop.f32.mrb[0].mxu0
    %v1095 = vadd.f32 %v937, %v1094
    %1096 = vdwg.mxu0
    %1097 = vmatprep.subr.mxu0 %v902
    %1098 = vmatpush1.msra.mxu0 %v901
    %1099 = vmatprep.subr.mxu0 %v908
    %1100 = vmatpush1.msra.mxu0 %v907
    %1101 = vmatprep.subr.mxu0 %v914
    %1102 = vmatpush1.msra.mxu0 %v913
    %1103 = vmatprep.subr.mxu0 %v920
    %1104 = vmatpush1.msra.mxu0 %v919
    %1105 = vmatprep.subr.mxu0 0.0
    %1106 = vmatpush1.msra.mxu0 0.0
    %1107 = vmatprep.subr.mxu0 0.0
    %1108 = vmatpush1.msra.mxu0 0.0
    %1109 = vmatprep.subr.mxu0 0.0
    %1110 = vmatpush1.msra.mxu0 0.0
    %1111 = vmatprep.subr.mxu0 0.0
    %1112 = vmatpush1.msra.mxu0 0.0
    %1113 = vmatprep.subr.mxu0 0.0
    %1114 = vmatpush1.msra.mxu0 0.0
    %1115 = vmatprep.subr.mxu0 0.0
    %1116 = vmatpush1.msra.mxu0 0.0
    %1117 = vmatprep.subr.mxu0 0.0
    %1118 = vmatpush1.msra.mxu0 0.0
    %1119 = vmatprep.subr.mxu0 0.0
    %1120 = vmatpush1.msra.mxu0 0.0
    %1121 = vmatprep.subr.mxu0 0.0
    %1122 = vmatpush1.msra.mxu0 0.0
    %1123 = vmatprep.subr.mxu0 0.0
    %1124 = vmatpush1.msra.mxu0 0.0
    %1125 = vmatprep.subr.mxu0 0.0
    %1126 = vmatpush1.msra.mxu0 0.0
    %1127 = vmatprep.subr.mxu0 0.0
    %1128 = vmatpush1.msra.mxu0 0.0
    %1129 = vmatprep.subr.mxu0 0.0
    %1130 = vmatpush1.msra.mxu0 0.0
    %1131 = vmatprep.subr.mxu0 0.0
    %1132 = vmatpush1.msra.mxu0 0.0
    %1133 = vmatprep.subr.mxu0 0.0
    %1134 = vmatpush1.msra.mxu0 0.0
    %1135 = vmatprep.subr.mxu0 0.0
    %1136 = vmatpush1.msra.mxu0 0.0
    %1137 = vmatprep.subr.mxu0 0.0
    %1138 = vmatpush1.msra.mxu0 0.0
    %1139 = vmatprep.subr.mxu0 0.0
    %1140 = vmatpush1.msra.mxu0 0.0
    %1141 = vmatprep.subr.mxu0 0.0
    %1142 = vmatpush1.msra.mxu0 0.0
    %1143 = vmatprep.subr.mxu0 0.0
    %1144 = vmatpush1.msra.mxu0 0.0
    %1145 = vmatprep.subr.mxu0 0.0
    %1146 = vmatpush1.msra.mxu0 0.0
    %1147 = vmatprep.subr.mxu0 0.0
    %1148 = vmatpush1.msra.mxu0 0.0
    %1149 = vmatprep.subr.mxu0 0.0
    %1150 = vmatpush1.msra.mxu0 0.0
    %1151 = vmatprep.subr.mxu0 0.0
    %1152 = vmatpush1.msra.mxu0 0.0
    %1153 = vmatprep.subr.mxu0 0.0
    %1154 = vmatpush1.msra.mxu0 0.0
    %1155 = vmatprep.subr.mxu0 0.0
    %1156 = vmatpush1.msra.mxu0 0.0
    %1157 = vmatprep.subr.mxu0 0.0
    %1158 = vmatpush1.msra.mxu0 0.0
    %1159 = vmatprep.subr.mxu0 0.0
    %1160 = vmatpush1.msra.mxu0 0.0
    %1161 = vmatprep.mubr.f32.mxu0 0.0
    %1162 = vmatmul.mubr.f32.gmra.mrb[0].mxu0 %v953
    %v1163 = vpop.f32.mrb[0].mxu0
    %v1164 = vadd.f32 %v941, %v1163
    %v1165 = vpop.f32.mrb[0].mxu0
    %v1166 = vadd.f32 %v945, %v1165
    %1167 = vdwg.mxu0
    %v1168 = vadd.f32 %v1022, %v802
    %v1169 = vadd.f32 %v1024, %v804
    %v1170 = vxor.u32 %v1168, 2147483648
    %v1171 = vxor.u32 %v1169, 2147483648
    %v1172 = vmul.f32 %v1170, 1.442695
    %v1173 = vpow.pop %v1172
    %v1174 = vmul.f32 %v1171, 1.442695
    %v1175 = vpow.pop %v1174
    %v1176 = vadd.f32 %v1173, 1.0
    %v1177 = vadd.f32 %v1175, 1.0
    %v1178 = vrcp.pop %v1176
    %v1179 = vmul.f32 1.0, %v1178
    %v1180 = vrcp.pop %v1177
    %v1181 = vmul.f32 1.0, %v1180
    %v1182 = vmul.f32 %v1179, %v873
    %v1183 = vadd.f32 %v1093, %v1182
    %v1184 = vtanh.pop %v1183
    %v1185 = vsub.f32 1.0, %v1181
    %v1186 = vmul.f32 %v1185, %v1184
    %v1187 = vmul.f32 %v1181, %v517
    %v1188 = vadd.f32 %v1186, %v1187
    %vm1189 = vcmask 254976
    %1190 = vst.msk [vmem:[#allocation3] sm:$0x3] %vm1189, %v1188
    %v1191 = vld [vmem:[#allocation2 + $0x18] sm:$0x3]
    %v1192 = vld [vmem:[#allocation2 + $0x20] sm:$0x3]
    %v1193 = vld [vmem:[#allocation2 + $0x28] sm:$0x3]
    %v1194 = vld [vmem:[#allocation7 + $0x30] sm:$0xff]
    %v1195 = vld [vmem:[#allocation7 + $0x38] sm:$0xff]
    %v1196 = vld [vmem:[#allocation7 + $0x40] sm:$0xff]
    %v1197 = vld [vmem:[#allocation7 + $0x80] sm:$0xff]
    %v1198 = vld [vmem:[#allocation7 + $0x88] sm:$0xff]
    %v1199 = vld [vmem:[#allocation7 + $0x90] sm:$0xff]
    %v1200 = vld [vmem:[#allocation7 + $0xd0] sm:$0xff]
    %v1201 = vld [vmem:[#allocation7 + $0xd8] sm:$0xff]
    %v1202 = vld [vmem:[#allocation7 + $0xe0] sm:$0xff]
    %v1203 = vld [vmem:[#allocation7 + $0x120] sm:$0xff]
    %v1204 = vld [vmem:[#allocation7 + $0x128] sm:$0xff]
    %v1205 = vld [vmem:[#allocation7 + $0x130] sm:$0xff]
    %v1207 = vsel %vm548, %v1188, 0
    %1209 = vmatprep.subr.mxu0 %v1195
    %1210 = vmatpush1.msra.mxu0 %v1194
    %1211 = vmatprep.subr.mxu0 %v1198
    %1212 = vmatpush1.msra.mxu0 %v1197
    %1213 = vmatprep.subr.mxu0 %v1201
    %1214 = vmatpush1.msra.mxu0 %v1200
    %1215 = vmatprep.subr.mxu0 %v1204
    %1216 = vmatpush1.msra.mxu0 %v1203
    %1217 = vmatprep.subr.mxu0 0.0
    %1218 = vmatpush1.msra.mxu0 0.0
    %1219 = vmatprep.subr.mxu0 0.0
    %1220 = vmatpush1.msra.mxu0 0.0
    %1221 = vmatprep.subr.mxu0 0.0
    %1222 = vmatpush1.msra.mxu0 0.0
    %1223 = vmatprep.subr.mxu0 0.0
    %1224 = vmatpush1.msra.mxu0 0.0
    %1225 = vmatprep.subr.mxu0 0.0
    %1226 = vmatpush1.msra.mxu0 0.0
    %1227 = vmatprep.subr.mxu0 0.0
    %1228 = vmatpush1.msra.mxu0 0.0
    %1229 = vmatprep.subr.mxu0 0.0
    %1230 = vmatpush1.msra.mxu0 0.0
    %1231 = vmatprep.subr.mxu0 0.0
    %1232 = vmatpush1.msra.mxu0 0.0
    %1233 = vmatprep.subr.mxu0 0.0
    %1234 = vmatpush1.msra.mxu0 0.0
    %1235 = vmatprep.subr.mxu0 0.0
    %1236 = vmatpush1.msra.mxu0 0.0
    %1237 = vmatprep.subr.mxu0 0.0
    %1238 = vmatpush1.msra.mxu0 0.0
    %1239 = vmatprep.subr.mxu0 0.0
    %1240 = vmatpush1.msra.mxu0 0.0
    %1241 = vmatprep.subr.mxu0 0.0
    %1242 = vmatpush1.msra.mxu0 0.0
    %1243 = vmatprep.subr.mxu0 0.0
    %1244 = vmatpush1.msra.mxu0 0.0
    %1245 = vmatprep.subr.mxu0 0.0
    %1246 = vmatpush1.msra.mxu0 0.0
    %1247 = vmatprep.subr.mxu0 0.0
    %1248 = vmatpush1.msra.mxu0 0.0
    %1249 = vmatprep.subr.mxu0 0.0
    %1250 = vmatpush1.msra.mxu0 0.0
    %1251 = vmatprep.subr.mxu0 0.0
    %1252 = vmatpush1.msra.mxu0 0.0
    %1253 = vmatprep.subr.mxu0 0.0
    %1254 = vmatpush1.msra.mxu0 0.0
    %1255 = vmatprep.subr.mxu0 0.0
    %1256 = vmatpush1.msra.mxu0 0.0
    %1257 = vmatprep.subr.mxu0 0.0
    %1258 = vmatpush1.msra.mxu0 0.0
    %1259 = vmatprep.subr.mxu0 0.0
    %1260 = vmatpush1.msra.mxu0 0.0
    %1261 = vmatprep.subr.mxu0 0.0
    %1262 = vmatpush1.msra.mxu0 0.0
    %1263 = vmatprep.subr.mxu0 0.0
    %1264 = vmatpush1.msra.mxu0 0.0
    %1265 = vmatprep.subr.mxu0 0.0
    %1266 = vmatpush1.msra.mxu0 0.0
    %1267 = vmatprep.subr.mxu0 0.0
    %1268 = vmatpush1.msra.mxu0 0.0
    %1269 = vmatprep.subr.mxu0 0.0
    %1270 = vmatpush1.msra.mxu0 0.0
    %1271 = vmatprep.subr.mxu0 0.0
    %1272 = vmatpush1.msra.mxu0 0.0
    %1273 = vmatprep.mubr.f32.mxu0 0.0
    %1274 = vmatmul.mubr.f32.gmra.mrb[0].mxu0 %v1207
    %v1275 = vpop.f32.mrb[0].mxu0
    %v1276 = vadd.f32 %v720, %v1275
    %v1277 = vpop.f32.mrb[0].mxu0
    %v1278 = vadd.f32 %v724, %v1277
    %1279 = vdwg.mxu0
    %1280 = vmatprep.subr.mxu0 0.0
    %1281 = vmatpush1.msra.mxu0 %v1196
    %1282 = vmatprep.subr.mxu0 0.0
    %1283 = vmatpush1.msra.mxu0 %v1199
    %1284 = vmatprep.subr.mxu0 0.0
    %1285 = vmatpush1.msra.mxu0 %v1202
    %1286 = vmatprep.subr.mxu0 0.0
    %1287 = vmatpush1.msra.mxu0 %v1205
    %1288 = vmatprep.subr.mxu0 0.0
    %1289 = vmatpush1.msra.mxu0 0.0
    %1290 = vmatprep.subr.mxu0 0.0
    %1291 = vmatpush1.msra.mxu0 0.0
    %1292 = vmatprep.subr.mxu0 0.0
    %1293 = vmatpush1.msra.mxu0 0.0
    %1294 = vmatprep.subr.mxu0 0.0
    %1295 = vmatpush1.msra.mxu0 0.0
    %1296 = vmatprep.subr.mxu0 0.0
    %1297 = vmatpush1.msra.mxu0 0.0
    %1298 = vmatprep.subr.mxu0 0.0
    %1299 = vmatpush1.msra.mxu0 0.0
    %1300 = vmatprep.subr.mxu0 0.0
    %1301 = vmatpush1.msra.mxu0 0.0
    %1302 = vmatprep.subr.mxu0 0.0
    %1303 = vmatpush1.msra.mxu0 0.0
    %1304 = vmatprep.subr.mxu0 0.0
    %1305 = vmatpush1.msra.mxu0 0.0
    %1306 = vmatprep.subr.mxu0 0.0
    %1307 = vmatpush1.msra.mxu0 0.0
    %1308 = vmatprep.subr.mxu0 0.0
    %1309 = vmatpush1.msra.mxu0 0.0
    %1310 = vmatprep.subr.mxu0 0.0
    %1311 = vmatpush1.msra.mxu0 0.0
    %1312 = vmatprep.subr.mxu0 0.0
    %1313 = vmatpush1.msra.mxu0 0.0
    %1314 = vmatprep.subr.mxu0 0.0
    %1315 = vmatpush1.msra.mxu0 0.0
    %1316 = vmatprep.subr.mxu0 0.0
    %1317 = vmatpush1.msra.mxu0 0.0
    %1318 = vmatprep.subr.mxu0 0.0
    %1319 = vmatpush1.msra.mxu0 0.0
    %1320 = vmatprep.subr.mxu0 0.0
    %1321 = vmatpush1.msra.mxu0 0.0
    %1322 = vmatprep.subr.mxu0 0.0
    %1323 = vmatpush1.msra.mxu0 0.0
    %1324 = vmatprep.subr.mxu0 0.0
    %1325 = vmatpush1.msra.mxu0 0.0
    %1326 = vmatprep.subr.mxu0 0.0
    %1327 = vmatpush1.msra.mxu0 0.0
    %1328 = vmatprep.subr.mxu0 0.0
    %1329 = vmatpush1.msra.mxu0 0.0
    %1330 = vmatprep.subr.mxu0 0.0
    %1331 = vmatpush1.msra.mxu0 0.0
    %1332 = vmatprep.subr.mxu0 0.0
    %1333 = vmatpush1.msra.mxu0 0.0
    %1334 = vmatprep.subr.mxu0 0.0
    %1335 = vmatpush1.msra.mxu0 0.0
    %1336 = vmatprep.subr.mxu0 0.0
    %1337 = vmatpush1.msra.mxu0 0.0
    %1338 = vmatprep.subr.mxu0 0.0
    %1339 = vmatpush1.msra.mxu0 0.0
    %1340 = vmatprep.subr.mxu0 0.0
    %1341 = vmatpush1.msra.mxu0 0.0
    %1342 = vmatprep.subr.mxu0 0.0
    %1343 = vmatpush1.msra.mxu0 0.0
    %1344 = vmatprep.mubr.f32.mxu0 0.0
    %1345 = vmatmul.mubr.f32.gmra.mrb[0].mxu0 %v1207
    %v1346 = vpop.f32.mrb[0].mxu0
    %v1347 = vadd.f32 %v728, %v1346
    %v1348 = vpop.f32.mrb[0].mxu0
    %1349 = vdwg.mxu0
    %v1350 = vadd.f32 %v1191, %v1095
    %v1351 = vadd.f32 %v1192, %v1164
    %v1352 = vxor.u32 %v1350, 2147483648
    %v1353 = vxor.u32 %v1351, 2147483648
    %v1354 = vmul.f32 %v1352, 1.442695
    %v1355 = vpow.pop %v1354
    %v1356 = vmul.f32 %v1353, 1.442695
    %v1357 = vpow.pop %v1356
    %v1358 = vadd.f32 %v1355, 1.0
    %v1359 = vadd.f32 %v1357, 1.0
    %v1360 = vrcp.pop %v1358
    %v1361 = vmul.f32 1.0, %v1360
    %v1362 = vrcp.pop %v1359
    %v1363 = vmul.f32 1.0, %v1362
    %v1364 = vmul.f32 %v1361, %v1166
    %v1365 = vadd.f32 %v1193, %v1364
    %v1366 = vtanh.pop %v1365
    %v1367 = vsub.f32 1.0, %v1363
    %v1368 = vmul.f32 %v1367, %v1366
    %v1369 = vmul.f32 %v1363, %v896
    %v1370 = vadd.f32 %v1368, %v1369
    %v1371 = vld [vmem:[#allocation7] sm:$0xff]
    %v1372 = vld [vmem:[#allocation7 + $0x8] sm:$0xff]
    %v1373 = vld [vmem:[#allocation7 + $0x10] sm:$0xff]
    %v1374 = vld [vmem:[#allocation7 + $0x18] sm:$0xff]
    %v1375 = vld [vmem:[#allocation7 + $0x20] sm:$0xff]
    %v1376 = vld [vmem:[#allocation7 + $0x28] sm:$0xff]
    %v1377 = vld [vmem:[#allocation7 + $0x50] sm:$0xff]
    %v1378 = vld [vmem:[#allocation7 + $0x58] sm:$0xff]
    %v1379 = vld [vmem:[#allocation7 + $0x60] sm:$0xff]
    %v1380 = vld [vmem:[#allocation7 + $0x68] sm:$0xff]
    %v1381 = vld [vmem:[#allocation7 + $0x70] sm:$0xff]
    %v1382 = vld [vmem:[#allocation7 + $0x78] sm:$0xff]
    %v1383 = vld [vmem:[#allocation7 + $0xa0] sm:$0xff]
    %v1384 = vld [vmem:[#allocation7 + $0xa8] sm:$0xff]
    %v1385 = vld [vmem:[#allocation7 + $0xb0] sm:$0xff]
    %v1386 = vld [vmem:[#allocation7 + $0xb8] sm:$0xff]
    %v1387 = vld [vmem:[#allocation7 + $0xc0] sm:$0xff]
    %v1388 = vld [vmem:[#allocation7 + $0xc8] sm:$0xff]
    %v1389 = vld [vmem:[#allocation7 + $0xf0] sm:$0xff]
    %v1390 = vld [vmem:[#allocation7 + $0xf8] sm:$0xff]
    %v1391 = vld [vmem:[#allocation7 + $0x100] sm:$0xff]
    %v1392 = vld [vmem:[#allocation7 + $0x108] sm:$0xff]
    %v1393 = vld [vmem:[#allocation7 + $0x110] sm:$0xff]
    %v1394 = vld [vmem:[#allocation7 + $0x118] sm:$0xff]
    %v1396 = vsel %vm548, %v1370, 0
    %1398 = vmatprep.subr.mxu0 %v1372
    %1399 = vmatpush1.msra.mxu0 %v1371
    %1400 = vmatprep.subr.mxu0 %v1378
    %1401 = vmatpush1.msra.mxu0 %v1377
    %1402 = vmatprep.subr.mxu0 %v1384
    %1403 = vmatpush1.msra.mxu0 %v1383
    %1404 = vmatprep.subr.mxu0 %v1390
    %1405 = vmatpush1.msra.mxu0 %v1389
    %1406 = vmatprep.subr.mxu0 0.0
    %1407 = vmatpush1.msra.mxu0 0.0
    %1408 = vmatprep.subr.mxu0 0.0
    %1409 = vmatpush1.msra.mxu0 0.0
    %1410 = vmatprep.subr.mxu0 0.0
    %1411 = vmatpush1.msra.mxu0 0.0
    %1412 = vmatprep.subr.mxu0 0.0
    %1413 = vmatpush1.msra.mxu0 0.0
    %1414 = vmatprep.subr.mxu0 0.0
    %1415 = vmatpush1.msra.mxu0 0.0
    %1416 = vmatprep.subr.mxu0 0.0
    %1417 = vmatpush1.msra.mxu0 0.0
    %1418 = vmatprep.subr.mxu0 0.0
    %1419 = vmatpush1.msra.mxu0 0.0
    %1420 = vmatprep.subr.mxu0 0.0
    %1421 = vmatpush1.msra.mxu0 0.0
    %1422 = vmatprep.subr.mxu0 0.0
    %1423 = vmatpush1.msra.mxu0 0.0
    %1424 = vmatprep.subr.mxu0 0.0
    %1425 = vmatpush1.msra.mxu0 0.0
    %1426 = vmatprep.subr.mxu0 0.0
    %1427 = vmatpush1.msra.mxu0 0.0
    %1428 = vmatprep.subr.mxu0 0.0
    %1429 = vmatpush1.msra.mxu0 0.0
    %1430 = vmatprep.subr.mxu0 0.0
    %1431 = vmatpush1.msra.mxu0 0.0
    %1432 = vmatprep.subr.mxu0 0.0
    %1433 = vmatpush1.msra.mxu0 0.0
    %1434 = vmatprep.subr.mxu0 0.0
    %1435 = vmatpush1.msra.mxu0 0.0
    %1436 = vmatprep.subr.mxu0 0.0
    %1437 = vmatpush1.msra.mxu0 0.0
    %1438 = vmatprep.subr.mxu0 0.0
    %1439 = vmatpush1.msra.mxu0 0.0
    %1440 = vmatprep.subr.mxu0 0.0
    %1441 = vmatpush1.msra.mxu0 0.0
    %1442 = vmatprep.subr.mxu0 0.0
    %1443 = vmatpush1.msra.mxu0 0.0
    %1444 = vmatprep.subr.mxu0 0.0
    %1445 = vmatpush1.msra.mxu0 0.0
    %1446 = vmatprep.subr.mxu0 0.0
    %1447 = vmatpush1.msra.mxu0 0.0
    %1448 = vmatprep.subr.mxu0 0.0
    %1449 = vmatpush1.msra.mxu0 0.0
    %1450 = vmatprep.subr.mxu0 0.0
    %1451 = vmatpush1.msra.mxu0 0.0
    %1452 = vmatprep.subr.mxu0 0.0
    %1453 = vmatpush1.msra.mxu0 0.0
    %1454 = vmatprep.subr.mxu0 0.0
    %1455 = vmatpush1.msra.mxu0 0.0
    %1456 = vmatprep.subr.mxu0 0.0
    %1457 = vmatpush1.msra.mxu0 0.0
    %1458 = vmatprep.subr.mxu0 0.0
    %1459 = vmatpush1.msra.mxu0 0.0
    %1460 = vmatprep.subr.mxu0 0.0
    %1461 = vmatpush1.msra.mxu0 0.0
    %1462 = vmatprep.mubr.f32.mxu0 0.0
    %1463 = vmatmul.mubr.f32.gmra.mrb[0].mxu0 %v1396
    %v1464 = vpop.f32.mrb[0].mxu0
    %v1465 = vadd.f32 %v925, %v1464
    %v1466 = vpop.f32.mrb[0].mxu0
    %v1467 = vadd.f32 %v929, %v1466
    %1468 = vdwg.mxu0
    %1469 = vmatprep.subr.mxu0 %v1374
    %1470 = vmatpush1.msra.mxu0 %v1373
    %1471 = vmatprep.subr.mxu0 %v1380
    %1472 = vmatpush1.msra.mxu0 %v1379
    %1473 = vmatprep.subr.mxu0 %v1386
    %1474 = vmatpush1.msra.mxu0 %v1385
    %1475 = vmatprep.subr.mxu0 %v1392
    %1476 = vmatpush1.msra.mxu0 %v1391
    %1477 = vmatprep.subr.mxu0 0.0
    %1478 = vmatpush1.msra.mxu0 0.0
    %1479 = vmatprep.subr.mxu0 0.0
    %1480 = vmatpush1.msra.mxu0 0.0
    %1481 = vmatprep.subr.mxu0 0.0
    %1482 = vmatpush1.msra.mxu0 0.0
    %1483 = vmatprep.subr.mxu0 0.0
    %1484 = vmatpush1.msra.mxu0 0.0
    %1485 = vmatprep.subr.mxu0 0.0
    %1486 = vmatpush1.msra.mxu0 0.0
    %1487 = vmatprep.subr.mxu0 0.0
    %1488 = vmatpush1.msra.mxu0 0.0
    %1489 = vmatprep.subr.mxu0 0.0
    %1490 = vmatpush1.msra.mxu0 0.0
    %1491 = vmatprep.subr.mxu0 0.0
    %1492 = vmatpush1.msra.mxu0 0.0
    %1493 = vmatprep.subr.mxu0 0.0
    %1494 = vmatpush1.msra.mxu0 0.0
    %1495 = vmatprep.subr.mxu0 0.0
    %1496 = vmatpush1.msra.mxu0 0.0
    %1497 = vmatprep.subr.mxu0 0.0
    %1498 = vmatpush1.msra.mxu0 0.0
    %1499 = vmatprep.subr.mxu0 0.0
    %1500 = vmatpush1.msra.mxu0 0.0
    %1501 = vmatprep.subr.mxu0 0.0
    %1502 = vmatpush1.msra.mxu0 0.0
    %1503 = vmatprep.subr.mxu0 0.0
    %1504 = vmatpush1.msra.mxu0 0.0
    %1505 = vmatprep.subr.mxu0 0.0
    %1506 = vmatpush1.msra.mxu0 0.0
    %1507 = vmatprep.subr.mxu0 0.0
    %1508 = vmatpush1.msra.mxu0 0.0
    %1509 = vmatprep.subr.mxu0 0.0
    %1510 = vmatpush1.msra.mxu0 0.0
    %1511 = vmatprep.subr.mxu0 0.0
    %1512 = vmatpush1.msra.mxu0 0.0
    %1513 = vmatprep.subr.mxu0 0.0
    %1514 = vmatpush1.msra.mxu0 0.0
    %1515 = vmatprep.subr.mxu0 0.0
    %1516 = vmatpush1.msra.mxu0 0.0
    %1517 = vmatprep.subr.mxu0 0.0
    %1518 = vmatpush1.msra.mxu0 0.0
    %1519 = vmatprep.subr.mxu0 0.0
    %1520 = vmatpush1.msra.mxu0 0.0
    %1521 = vmatprep.subr.mxu0 0.0
    %1522 = vmatpush1.msra.mxu0 0.0
    %1523 = vmatprep.subr.mxu0 0.0
    %1524 = vmatpush1.msra.mxu0 0.0
    %1525 = vmatprep.subr.mxu0 0.0
    %1526 = vmatpush1.msra.mxu0 0.0
    %1527 = vmatprep.subr.mxu0 0.0
    %1528 = vmatpush1.msra.mxu0 0.0
    %1529 = vmatprep.subr.mxu0 0.0
    %1530 = vmatpush1.msra.mxu0 0.0
    %1531 = vmatprep.subr.mxu0 0.0
    %1532 = vmatpush1.msra.mxu0 0.0
    %1533 = vmatprep.mubr.f32.mxu0 0.0
    %1534 = vmatmul.mubr.f32.gmra.mrb[0].mxu0 %v1396
    %v1535 = vpop.f32.mrb[0].mxu0
    %v1536 = vadd.f32 %v933, %v1535
    %v1537 = vpop.f32.mrb[0].mxu0
    %v1538 = vadd.f32 %v937, %v1537
    %1539 = vdwg.mxu0
    %1540 = vmatprep.subr.mxu0 %v1376
    %1541 = vmatpush1.msra.mxu0 %v1375
    %1542 = vmatprep.subr.mxu0 %v1382
    %1543 = vmatpush1.msra.mxu0 %v1381
    %1544 = vmatprep.subr.mxu0 %v1388
    %1545 = vmatpush1.msra.mxu0 %v1387
    %1546 = vmatprep.subr.mxu0 %v1394
    %1547 = vmatpush1.msra.mxu0 %v1393
    %1548 = vmatprep.subr.mxu0 0.0
    %1549 = vmatpush1.msra.mxu0 0.0
    %1550 = vmatprep.subr.mxu0 0.0
    %1551 = vmatpush1.msra.mxu0 0.0
    %1552 = vmatprep.subr.mxu0 0.0
    %1553 = vmatpush1.msra.mxu0 0.0
    %1554 = vmatprep.subr.mxu0 0.0
    %1555 = vmatpush1.msra.mxu0 0.0
    %1556 = vmatprep.subr.mxu0 0.0
    %1557 = vmatpush1.msra.mxu0 0.0
    %1558 = vmatprep.subr.mxu0 0.0
    %1559 = vmatpush1.msra.mxu0 0.0
    %1560 = vmatprep.subr.mxu0 0.0
    %1561 = vmatpush1.msra.mxu0 0.0
    %1562 = vmatprep.subr.mxu0 0.0
    %1563 = vmatpush1.msra.mxu0 0.0
    %1564 = vmatprep.subr.mxu0 0.0
    %1565 = vmatpush1.msra.mxu0 0.0
    %1566 = vmatprep.subr.mxu0 0.0
    %1567 = vmatpush1.msra.mxu0 0.0
    %1568 = vmatprep.subr.mxu0 0.0
    %1569 = vmatpush1.msra.mxu0 0.0
    %1570 = vmatprep.subr.mxu0 0.0
    %1571 = vmatpush1.msra.mxu0 0.0
    %1572 = vmatprep.subr.mxu0 0.0
    %1573 = vmatpush1.msra.mxu0 0.0
    %1574 = vmatprep.subr.mxu0 0.0
    %1575 = vmatpush1.msra.mxu0 0.0
    %1576 = vmatprep.subr.mxu0 0.0
    %1577 = vmatpush1.msra.mxu0 0.0
    %1578 = vmatprep.subr.mxu0 0.0
    %1579 = vmatpush1.msra.mxu0 0.0
    %1580 = vmatprep.subr.mxu0 0.0
    %1581 = vmatpush1.msra.mxu0 0.0
    %1582 = vmatprep.subr.mxu0 0.0
    %1583 = vmatpush1.msra.mxu0 0.0
    %1584 = vmatprep.subr.mxu0 0.0
    %1585 = vmatpush1.msra.mxu0 0.0
    %1586 = vmatprep.subr.mxu0 0.0
    %1587 = vmatpush1.msra.mxu0 0.0
    %1588 = vmatprep.subr.mxu0 0.0
    %1589 = vmatpush1.msra.mxu0 0.0
    %1590 = vmatprep.subr.mxu0 0.0
    %1591 = vmatpush1.msra.mxu0 0.0
    %1592 = vmatprep.subr.mxu0 0.0
    %1593 = vmatpush1.msra.mxu0 0.0
    %1594 = vmatprep.subr.mxu0 0.0
    %1595 = vmatpush1.msra.mxu0 0.0
    %1596 = vmatprep.subr.mxu0 0.0
    %1597 = vmatpush1.msra.mxu0 0.0
    %1598 = vmatprep.subr.mxu0 0.0
    %1599 = vmatpush1.msra.mxu0 0.0
    %1600 = vmatprep.subr.mxu0 0.0
    %1601 = vmatpush1.msra.mxu0 0.0
    %1602 = vmatprep.subr.mxu0 0.0
    %1603 = vmatpush1.msra.mxu0 0.0
    %1604 = vmatprep.mubr.f32.mxu0 0.0
    %1605 = vmatmul.mubr.f32.gmra.mrb[0].mxu0 %v1396
    %v1606 = vpop.f32.mrb[0].mxu0
    %v1607 = vadd.f32 %v941, %v1606
    %v1608 = vpop.f32.mrb[0].mxu0
    %v1609 = vadd.f32 %v945, %v1608
    %1610 = vdwg.mxu0
    %v1611 = vadd.f32 %v1465, %v1276
    %v1612 = vadd.f32 %v1467, %v1278
    %v1613 = vxor.u32 %v1611, 2147483648
    %v1614 = vxor.u32 %v1612, 2147483648
    %v1615 = vmul.f32 %v1613, 1.442695
    %v1616 = vpow.pop %v1615
    %v1617 = vmul.f32 %v1614, 1.442695
    %v1618 = vpow.pop %v1617
    %v1619 = vadd.f32 %v1616, 1.0
    %v1620 = vadd.f32 %v1618, 1.0
    %v1621 = vrcp.pop %v1619
    %v1622 = vmul.f32 1.0, %v1621
    %v1623 = vrcp.pop %v1620
    %v1624 = vmul.f32 1.0, %v1623
    %v1625 = vmul.f32 %v1622, %v1347
    %v1626 = vadd.f32 %v1536, %v1625
    %v1627 = vtanh.pop %v1626
    %v1628 = vsub.f32 1.0, %v1624
    %v1629 = vmul.f32 %v1628, %v1627
    %v1630 = vmul.f32 %v1624, %v1188
    %v1631 = vadd.f32 %v1629, %v1630
    %1632 = vst.msk [vmem:[#allocation3 + $0x8] sm:$0x3] %vm1189, %v1631
    %v1633 = vld [vmem:[#allocation2 + $0x30] sm:$0x3]
    %v1634 = vld [vmem:[#allocation2 + $0x38] sm:$0x3]
    %v1635 = vld [vmem:[#allocation2 + $0x40] sm:$0x3]
    %v1636 = vld [vmem:[#allocation7 + $0x30] sm:$0xff]
    %v1637 = vld [vmem:[#allocation7 + $0x38] sm:$0xff]
    %v1638 = vld [vmem:[#allocation7 + $0x40] sm:$0xff]
    %v1639 = vld [vmem:[#allocation7 + $0x80] sm:$0xff]
    %v1640 = vld [vmem:[#allocation7 + $0x88] sm:$0xff]
    %v1641 = vld [vmem:[#allocation7 + $0x90] sm:$0xff]
    %v1642 = vld [vmem:[#allocation7 + $0xd0] sm:$0xff]
    %v1643 = vld [vmem:[#allocation7 + $0xd8] sm:$0xff]
    %v1644 = vld [vmem:[#allocation7 + $0xe0] sm:$0xff]
    %v1645 = vld [vmem:[#allocation7 + $0x120] sm:$0xff]
    %v1646 = vld [vmem:[#allocation7 + $0x128] sm:$0xff]
    %v1647 = vld [vmem:[#allocation7 + $0x130] sm:$0xff]
    %v1649 = vsel %vm548, %v1631, 0
    %1651 = vmatprep.subr.mxu0 %v1637
    %1652 = vmatpush1.msra.mxu0 %v1636
    %1653 = vmatprep.subr.mxu0 %v1640
    %1654 = vmatpush1.msra.mxu0 %v1639
    %1655 = vmatprep.subr.mxu0 %v1643
    %1656 = vmatpush1.msra.mxu0 %v1642
    %1657 = vmatprep.subr.mxu0 %v1646
    %1658 = vmatpush1.msra.mxu0 %v1645
    %1659 = vmatprep.subr.mxu0 0.0
    %1660 = vmatpush1.msra.mxu0 0.0
    %1661 = vmatprep.subr.mxu0 0.0
    %1662 = vmatpush1.msra.mxu0 0.0
    %1663 = vmatprep.subr.mxu0 0.0
    %1664 = vmatpush1.msra.mxu0 0.0
    %1665 = vmatprep.subr.mxu0 0.0
    %1666 = vmatpush1.msra.mxu0 0.0
    %1667 = vmatprep.subr.mxu0 0.0
    %1668 = vmatpush1.msra.mxu0 0.0
    %1669 = vmatprep.subr.mxu0 0.0
    %1670 = vmatpush1.msra.mxu0 0.0
    %1671 = vmatprep.subr.mxu0 0.0
    %1672 = vmatpush1.msra.mxu0 0.0
    %1673 = vmatprep.subr.mxu0 0.0
    %1674 = vmatpush1.msra.mxu0 0.0
    %1675 = vmatprep.subr.mxu0 0.0
    %1676 = vmatpush1.msra.mxu0 0.0
    %1677 = vmatprep.subr.mxu0 0.0
    %1678 = vmatpush1.msra.mxu0 0.0
    %1679 = vmatprep.subr.mxu0 0.0
    %1680 = vmatpush1.msra.mxu0 0.0
    %1681 = vmatprep.subr.mxu0 0.0
    %1682 = vmatpush1.msra.mxu0 0.0
    %1683 = vmatprep.subr.mxu0 0.0
    %1684 = vmatpush1.msra.mxu0 0.0
    %1685 = vmatprep.subr.mxu0 0.0
    %1686 = vmatpush1.msra.mxu0 0.0
    %1687 = vmatprep.subr.mxu0 0.0
    %1688 = vmatpush1.msra.mxu0 0.0
    %1689 = vmatprep.subr.mxu0 0.0
    %1690 = vmatpush1.msra.mxu0 0.0
    %1691 = vmatprep.subr.mxu0 0.0
    %1692 = vmatpush1.msra.mxu0 0.0
    %1693 = vmatprep.subr.mxu0 0.0
    %1694 = vmatpush1.msra.mxu0 0.0
    %1695 = vmatprep.subr.mxu0 0.0
    %1696 = vmatpush1.msra.mxu0 0.0
    %1697 = vmatprep.subr.mxu0 0.0
    %1698 = vmatpush1.msra.mxu0 0.0
    %1699 = vmatprep.subr.mxu0 0.0
    %1700 = vmatpush1.msra.mxu0 0.0
    %1701 = vmatprep.subr.mxu0 0.0
    %1702 = vmatpush1.msra.mxu0 0.0
    %1703 = vmatprep.subr.mxu0 0.0
    %1704 = vmatpush1.msra.mxu0 0.0
    %1705 = vmatprep.subr.mxu0 0.0
    %1706 = vmatpush1.msra.mxu0 0.0
    %1707 = vmatprep.subr.mxu0 0.0
    %1708 = vmatpush1.msra.mxu0 0.0
    %1709 = vmatprep.subr.mxu0 0.0
    %1710 = vmatpush1.msra.mxu0 0.0
    %1711 = vmatprep.subr.mxu0 0.0
    %1712 = vmatpush1.msra.mxu0 0.0
    %1713 = vmatprep.subr.mxu0 0.0
    %1714 = vmatpush1.msra.mxu0 0.0
    %1715 = vmatprep.mubr.f32.mxu0 0.0
    %1716 = vmatmul.mubr.f32.gmra.mrb[0].mxu0 %v1649
    %v1717 = vpop.f32.mrb[0].mxu0
    %v1718 = vadd.f32 %v720, %v1717
    %v1719 = vpop.f32.mrb[0].mxu0
    %v1720 = vadd.f32 %v724, %v1719
    %1721 = vdwg.mxu0
    %1722 = vmatprep.subr.mxu0 0.0
    %1723 = vmatpush1.msra.mxu0 %v1638
    %1724 = vmatprep.subr.mxu0 0.0
    %1725 = vmatpush1.msra.mxu0 %v1641
    %1726 = vmatprep.subr.mxu0 0.0
    %1727 = vmatpush1.msra.mxu0 %v1644
    %1728 = vmatprep.subr.mxu0 0.0
    %1729 = vmatpush1.msra.mxu0 %v1647
    %1730 = vmatprep.subr.mxu0 0.0
    %1731 = vmatpush1.msra.mxu0 0.0
    %1732 = vmatprep.subr.mxu0 0.0
    %1733 = vmatpush1.msra.mxu0 0.0
    %1734 = vmatprep.subr.mxu0 0.0
    %1735 = vmatpush1.msra.mxu0 0.0
    %1736 = vmatprep.subr.mxu0 0.0
    %1737 = vmatpush1.msra.mxu0 0.0
    %1738 = vmatprep.subr.mxu0 0.0
    %1739 = vmatpush1.msra.mxu0 0.0
    %1740 = vmatprep.subr.mxu0 0.0
    %1741 = vmatpush1.msra.mxu0 0.0
    %1742 = vmatprep.subr.mxu0 0.0
    %1743 = vmatpush1.msra.mxu0 0.0
    %1744 = vmatprep.subr.mxu0 0.0
    %1745 = vmatpush1.msra.mxu0 0.0
    %1746 = vmatprep.subr.mxu0 0.0
    %1747 = vmatpush1.msra.mxu0 0.0
    %1748 = vmatprep.subr.mxu0 0.0
    %1749 = vmatpush1.msra.mxu0 0.0
    %1750 = vmatprep.subr.mxu0 0.0
    %1751 = vmatpush1.msra.mxu0 0.0
    %1752 = vmatprep.subr.mxu0 0.0
    %1753 = vmatpush1.msra.mxu0 0.0
    %1754 = vmatprep.subr.mxu0 0.0
    %1755 = vmatpush1.msra.mxu0 0.0
    %1756 = vmatprep.subr.mxu0 0.0
    %1757 = vmatpush1.msra.mxu0 0.0
    %1758 = vmatprep.subr.mxu0 0.0
    %1759 = vmatpush1.msra.mxu0 0.0
    %1760 = vmatprep.subr.mxu0 0.0
    %1761 = vmatpush1.msra.mxu0 0.0
    %1762 = vmatprep.subr.mxu0 0.0
    %1763 = vmatpush1.msra.mxu0 0.0
    %1764 = vmatprep.subr.mxu0 0.0
    %1765 = vmatpush1.msra.mxu0 0.0
    %1766 = vmatprep.subr.mxu0 0.0
    %1767 = vmatpush1.msra.mxu0 0.0
    %1768 = vmatprep.subr.mxu0 0.0
    %1769 = vmatpush1.msra.mxu0 0.0
    %1770 = vmatprep.subr.mxu0 0.0
    %1771 = vmatpush1.msra.mxu0 0.0
    %1772 = vmatprep.subr.mxu0 0.0
    %1773 = vmatpush1.msra.mxu0 0.0
    %1774 = vmatprep.subr.mxu0 0.0
    %1775 = vmatpush1.msra.mxu0 0.0
    %1776 = vmatprep.subr.mxu0 0.0
    %1777 = vmatpush1.msra.mxu0 0.0
    %1778 = vmatprep.subr.mxu0 0.0
    %1779 = vmatpush1.msra.mxu0 0.0
    %1780 = vmatprep.subr.mxu0 0.0
    %1781 = vmatpush1.msra.mxu0 0.0
    %1782 = vmatprep.subr.mxu0 0.0
    %1783 = vmatpush1.msra.mxu0 0.0
    %1784 = vmatprep.subr.mxu0 0.0
    %1785 = vmatpush1.msra.mxu0 0.0
    %1786 = vmatprep.mubr.f32.mxu0 0.0
    %1787 = vmatmul.mubr.f32.gmra.mrb[0].mxu0 %v1649
    %v1788 = vpop.f32.mrb[0].mxu0
    %v1789 = vadd.f32 %v728, %v1788
    %v1790 = vpop.f32.mrb[0].mxu0
    %1791 = vdwg.mxu0
    %v1792 = vadd.f32 %v1633, %v1538
    %v1793 = vadd.f32 %v1634, %v1607
    %v1794 = vxor.u32 %v1792, 2147483648
    %v1795 = vxor.u32 %v1793, 2147483648
    %v1796 = vmul.f32 %v1794, 1.442695
    %v1797 = vpow.pop %v1796
    %v1798 = vmul.f32 %v1795, 1.442695
    %v1799 = vpow.pop %v1798
    %v1800 = vadd.f32 %v1797, 1.0
    %v1801 = vadd.f32 %v1799, 1.0
    %v1802 = vrcp.pop %v1800
    %v1803 = vmul.f32 1.0, %v1802
    %v1804 = vrcp.pop %v1801
    %v1805 = vmul.f32 1.0, %v1804
    %v1806 = vmul.f32 %v1803, %v1609
    %v1807 = vadd.f32 %v1635, %v1806
    %v1808 = vtanh.pop %v1807
    %v1809 = vsub.f32 1.0, %v1805
    %v1810 = vmul.f32 %v1809, %v1808
    %v1811 = vmul.f32 %v1805, %v1370
    %v1812 = vadd.f32 %v1810, %v1811
    %v1813 = vld [vmem:[#allocation7] sm:$0xff]
    %v1814 = vld [vmem:[#allocation7 + $0x8] sm:$0xff]
    %v1815 = vld [vmem:[#allocation7 + $0x10] sm:$0xff]
    %v1816 = vld [vmem:[#allocation7 + $0x18] sm:$0xff]
    %v1817 = vld [vmem:[#allocation7 + $0x20] sm:$0xff]
    %v1818 = vld [vmem:[#allocation7 + $0x28] sm:$0xff]
    %v1819 = vld [vmem:[#allocation7 + $0x50] sm:$0xff]
    %v1820 = vld [vmem:[#allocation7 + $0x58] sm:$0xff]
    %v1821 = vld [vmem:[#allocation7 + $0x60] sm:$0xff]
    %v1822 = vld [vmem:[#allocation7 + $0x68] sm:$0xff]
    %v1823 = vld [vmem:[#allocation7 + $0x70] sm:$0xff]
    %v1824 = vld [vmem:[#allocation7 + $0x78] sm:$0xff]
    %v1825 = vld [vmem:[#allocation7 + $0xa0] sm:$0xff]
    %v1826 = vld [vmem:[#allocation7 + $0xa8] sm:$0xff]
    %v1827 = vld [vmem:[#allocation7 + $0xb0] sm:$0xff]
    %v1828 = vld [vmem:[#allocation7 + $0xb8] sm:$0xff]
    %v1829 = vld [vmem:[#allocation7 + $0xc0] sm:$0xff]
    %v1830 = vld [vmem:[#allocation7 + $0xc8] sm:$0xff]
    %v1831 = vld [vmem:[#allocation7 + $0xf0] sm:$0xff]
    %v1832 = vld [vmem:[#allocation7 + $0xf8] sm:$0xff]
    %v1833 = vld [vmem:[#allocation7 + $0x100] sm:$0xff]
    %v1834 = vld [vmem:[#allocation7 + $0x108] sm:$0xff]
    %v1835 = vld [vmem:[#allocation7 + $0x110] sm:$0xff]
    %v1836 = vld [vmem:[#allocation7 + $0x118] sm:$0xff]
    %v1838 = vsel %vm548, %v1812, 0
    %1840 = vmatprep.subr.mxu0 %v1814
    %1841 = vmatpush1.msra.mxu0 %v1813
    %1842 = vmatprep.subr.mxu0 %v1820
    %1843 = vmatpush1.msra.mxu0 %v1819
    %1844 = vmatprep.subr.mxu0 %v1826
    %1845 = vmatpush1.msra.mxu0 %v1825
    %1846 = vmatprep.subr.mxu0 %v1832
    %1847 = vmatpush1.msra.mxu0 %v1831
    %1848 = vmatprep.subr.mxu0 0.0
    %1849 = vmatpush1.msra.mxu0 0.0
    %1850 = vmatprep.subr.mxu0 0.0
    %1851 = vmatpush1.msra.mxu0 0.0
    %1852 = vmatprep.subr.mxu0 0.0
    %1853 = vmatpush1.msra.mxu0 0.0
    %1854 = vmatprep.subr.mxu0 0.0
    %1855 = vmatpush1.msra.mxu0 0.0
    %1856 = vmatprep.subr.mxu0 0.0
    %1857 = vmatpush1.msra.mxu0 0.0
    %1858 = vmatprep.subr.mxu0 0.0
    %1859 = vmatpush1.msra.mxu0 0.0
    %1860 = vmatprep.subr.mxu0 0.0
    %1861 = vmatpush1.msra.mxu0 0.0
    %1862 = vmatprep.subr.mxu0 0.0
    %1863 = vmatpush1.msra.mxu0 0.0
    %1864 = vmatprep.subr.mxu0 0.0
    %1865 = vmatpush1.msra.mxu0 0.0
    %1866 = vmatprep.subr.mxu0 0.0
    %1867 = vmatpush1.msra.mxu0 0.0
    %1868 = vmatprep.subr.mxu0 0.0
    %1869 = vmatpush1.msra.mxu0 0.0
    %1870 = vmatprep.subr.mxu0 0.0
    %1871 = vmatpush1.msra.mxu0 0.0
    %1872 = vmatprep.subr.mxu0 0.0
    %1873 = vmatpush1.msra.mxu0 0.0
    %1874 = vmatprep.subr.mxu0 0.0
    %1875 = vmatpush1.msra.mxu0 0.0
    %1876 = vmatprep.subr.mxu0 0.0
    %1877 = vmatpush1.msra.mxu0 0.0
    %1878 = vmatprep.subr.mxu0 0.0
    %1879 = vmatpush1.msra.mxu0 0.0
    %1880 = vmatprep.subr.mxu0 0.0
    %1881 = vmatpush1.msra.mxu0 0.0
    %1882 = vmatprep.subr.mxu0 0.0
    %1883 = vmatpush1.msra.mxu0 0.0
    %1884 = vmatprep.subr.mxu0 0.0
    %1885 = vmatpush1.msra.mxu0 0.0
    %1886 = vmatprep.subr.mxu0 0.0
    %1887 = vmatpush1.msra.mxu0 0.0
    %1888 = vmatprep.subr.mxu0 0.0
    %1889 = vmatpush1.msra.mxu0 0.0
    %1890 = vmatprep.subr.mxu0 0.0
    %1891 = vmatpush1.msra.mxu0 0.0
    %1892 = vmatprep.subr.mxu0 0.0
    %1893 = vmatpush1.msra.mxu0 0.0
    %1894 = vmatprep.subr.mxu0 0.0
    %1895 = vmatpush1.msra.mxu0 0.0
    %1896 = vmatprep.subr.mxu0 0.0
    %1897 = vmatpush1.msra.mxu0 0.0
    %1898 = vmatprep.subr.mxu0 0.0
    %1899 = vmatpush1.msra.mxu0 0.0
    %1900 = vmatprep.subr.mxu0 0.0
    %1901 = vmatpush1.msra.mxu0 0.0
    %1902 = vmatprep.subr.mxu0 0.0
    %1903 = vmatpush1.msra.mxu0 0.0
    %1904 = vmatprep.mubr.f32.mxu0 0.0
    %1905 = vmatmul.mubr.f32.gmra.mrb[0].mxu0 %v1838
    %v1906 = vpop.f32.mrb[0].mxu0
    %v1907 = vadd.f32 %v925, %v1906
    %v1908 = vpop.f32.mrb[0].mxu0
    %v1909 = vadd.f32 %v929, %v1908
    %1910 = vdwg.mxu0
    %1911 = vmatprep.subr.mxu0 %v1816
    %1912 = vmatpush1.msra.mxu0 %v1815
    %1913 = vmatprep.subr.mxu0 %v1822
    %1914 = vmatpush1.msra.mxu0 %v1821
    %1915 = vmatprep.subr.mxu0 %v1828
    %1916 = vmatpush1.msra.mxu0 %v1827
    %1917 = vmatprep.subr.mxu0 %v1834
    %1918 = vmatpush1.msra.mxu0 %v1833
    %1919 = vmatprep.subr.mxu0 0.0
    %1920 = vmatpush1.msra.mxu0 0.0
    %1921 = vmatprep.subr.mxu0 0.0
    %1922 = vmatpush1.msra.mxu0 0.0
    %1923 = vmatprep.subr.mxu0 0.0
    %1924 = vmatpush1.msra.mxu0 0.0
    %1925 = vmatprep.subr.mxu0 0.0
    %1926 = vmatpush1.msra.mxu0 0.0
    %1927 = vmatprep.subr.mxu0 0.0
    %1928 = vmatpush1.msra.mxu0 0.0
    %1929 = vmatprep.subr.mxu0 0.0
    %1930 = vmatpush1.msra.mxu0 0.0
    %1931 = vmatprep.subr.mxu0 0.0
    %1932 = vmatpush1.msra.mxu0 0.0
    %1933 = vmatprep.subr.mxu0 0.0
    %1934 = vmatpush1.msra.mxu0 0.0
    %1935 = vmatprep.subr.mxu0 0.0
    %1936 = vmatpush1.msra.mxu0 0.0
    %1937 = vmatprep.subr.mxu0 0.0
    %1938 = vmatpush1.msra.mxu0 0.0
    %1939 = vmatprep.subr.mxu0 0.0
    %1940 = vmatpush1.msra.mxu0 0.0
    %1941 = vmatprep.subr.mxu0 0.0
    %1942 = vmatpush1.msra.mxu0 0.0
    %1943 = vmatprep.subr.mxu0 0.0
    %1944 = vmatpush1.msra.mxu0 0.0
    %1945 = vmatprep.subr.mxu0 0.0
    %1946 = vmatpush1.msra.mxu0 0.0
    %1947 = vmatprep.subr.mxu0 0.0
    %1948 = vmatpush1.msra.mxu0 0.0
    %1949 = vmatprep.subr.mxu0 0.0
    %1950 = vmatpush1.msra.mxu0 0.0
    %1951 = vmatprep.subr.mxu0 0.0
    %1952 = vmatpush1.msra.mxu0 0.0
    %1953 = vmatprep.subr.mxu0 0.0
    %1954 = vmatpush1.msra.mxu0 0.0
    %1955 = vmatprep.subr.mxu0 0.0
    %1956 = vmatpush1.msra.mxu0 0.0
    %1957 = vmatprep.subr.mxu0 0.0
    %1958 = vmatpush1.msra.mxu0 0.0
    %1959 = vmatprep.subr.mxu0 0.0
    %1960 = vmatpush1.msra.mxu0 0.0
    %1961 = vmatprep.subr.mxu0 0.0
    %1962 = vmatpush1.msra.mxu0 0.0
    %1963 = vmatprep.subr.mxu0 0.0
    %1964 = vmatpush1.msra.mxu0 0.0
    %1965 = vmatprep.subr.mxu0 0.0
    %1966 = vmatpush1.msra.mxu0 0.0
    %1967 = vmatprep.subr.mxu0 0.0
    %1968 = vmatpush1.msra.mxu0 0.0
    %1969 = vmatprep.subr.mxu0 0.0
    %1970 = vmatpush1.msra.mxu0 0.0
    %1971 = vmatprep.subr.mxu0 0.0
    %1972 = vmatpush1.msra.mxu0 0.0
    %1973 = vmatprep.subr.mxu0 0.0
    %1974 = vmatpush1.msra.mxu0 0.0
    %1975 = vmatprep.mubr.f32.mxu0 0.0
    %1976 = vmatmul.mubr.f32.gmra.mrb[0].mxu0 %v1838
    %v1977 = vpop.f32.mrb[0].mxu0
    %v1978 = vadd.f32 %v933, %v1977
    %v1979 = vpop.f32.mrb[0].mxu0
    %v1980 = vadd.f32 %v937, %v1979
    %1981 = vdwg.mxu0
    %1982 = vmatprep.subr.mxu0 %v1818
    %1983 = vmatpush1.msra.mxu0 %v1817
    %1984 = vmatprep.subr.mxu0 %v1824
    %1985 = vmatpush1.msra.mxu0 %v1823
    %1986 = vmatprep.subr.mxu0 %v1830
    %1987 = vmatpush1.msra.mxu0 %v1829
    %1988 = vmatprep.subr.mxu0 %v1836
    %1989 = vmatpush1.msra.mxu0 %v1835
    %1990 = vmatprep.subr.mxu0 0.0
    %1991 = vmatpush1.msra.mxu0 0.0
    %1992 = vmatprep.subr.mxu0 0.0
    %1993 = vmatpush1.msra.mxu0 0.0
    %1994 = vmatprep.subr.mxu0 0.0
    %1995 = vmatpush1.msra.mxu0 0.0
    %1996 = vmatprep.subr.mxu0 0.0
    %1997 = vmatpush1.msra.mxu0 0.0
    %1998 = vmatprep.subr.mxu0 0.0
    %1999 = vmatpush1.msra.mxu0 0.0
    %2000 = vmatprep.subr.mxu0 0.0
    %2001 = vmatpush1.msra.mxu0 0.0
    %2002 = vmatprep.subr.mxu0 0.0
    %2003 = vmatpush1.msra.mxu0 0.0
    %2004 = vmatprep.subr.mxu0 0.0
    %2005 = vmatpush1.msra.mxu0 0.0
    %2006 = vmatprep.subr.mxu0 0.0
    %2007 = vmatpush1.msra.mxu0 0.0
    %2008 = vmatprep.subr.mxu0 0.0
    %2009 = vmatpush1.msra.mxu0 0.0
    %2010 = vmatprep.subr.mxu0 0.0
    %2011 = vmatpush1.msra.mxu0 0.0
    %2012 = vmatprep.subr.mxu0 0.0
    %2013 = vmatpush1.msra.mxu0 0.0
    %2014 = vmatprep.subr.mxu0 0.0
    %2015 = vmatpush1.msra.mxu0 0.0
    %2016 = vmatprep.subr.mxu0 0.0
    %2017 = vmatpush1.msra.mxu0 0.0
    %2018 = vmatprep.subr.mxu0 0.0
    %2019 = vmatpush1.msra.mxu0 0.0
    %2020 = vmatprep.subr.mxu0 0.0
    %2021 = vmatpush1.msra.mxu0 0.0
    %2022 = vmatprep.subr.mxu0 0.0
    %2023 = vmatpush1.msra.mxu0 0.0
    %2024 = vmatprep.subr.mxu0 0.0
    %2025 = vmatpush1.msra.mxu0 0.0
    %2026 = vmatprep.subr.mxu0 0.0
    %2027 = vmatpush1.msra.mxu0 0.0
    %2028 = vmatprep.subr.mxu0 0.0
    %2029 = vmatpush1.msra.mxu0 0.0
    %2030 = vmatprep.subr.mxu0 0.0
    %2031 = vmatpush1.msra.mxu0 0.0
    %2032 = vmatprep.subr.mxu0 0.0
    %2033 = vmatpush1.msra.mxu0 0.0
    %2034 = vmatprep.subr.mxu0 0.0
    %2035 = vmatpush1.msra.mxu0 0.0
    %2036 = vmatprep.subr.mxu0 0.0
    %2037 = vmatpush1.msra.mxu0 0.0
    %2038 = vmatprep.subr.mxu0 0.0
    %2039 = vmatpush1.msra.mxu0 0.0
    %2040 = vmatprep.subr.mxu0 0.0
    %2041 = vmatpush1.msra.mxu0 0.0
    %2042 = vmatprep.subr.mxu0 0.0
    %2043 = vmatpush1.msra.mxu0 0.0
    %2044 = vmatprep.subr.mxu0 0.0
    %2045 = vmatpush1.msra.mxu0 0.0
    %2046 = vmatprep.mubr.f32.mxu0 0.0
    %2047 = vmatmul.mubr.f32.gmra.mrb[0].mxu0 %v1838
    %v2048 = vpop.f32.mrb[0].mxu0
    %v2049 = vadd.f32 %v941, %v2048
    %v2050 = vpop.f32.mrb[0].mxu0
    %v2051 = vadd.f32 %v945, %v2050
    %2052 = vdwg.mxu0
    %v2053 = vadd.f32 %v1907, %v1718
    %v2054 = vadd.f32 %v1909, %v1720
    %v2055 = vxor.u32 %v2053, 2147483648
    %v2056 = vxor.u32 %v2054, 2147483648
    %v2057 = vmul.f32 %v2055, 1.442695
    %v2058 = vpow.pop %v2057
    %v2059 = vmul.f32 %v2056, 1.442695
    %v2060 = vpow.pop %v2059
    %v2061 = vadd.f32 %v2058, 1.0
    %v2062 = vadd.f32 %v2060, 1.0
    %v2063 = vrcp.pop %v2061
    %v2064 = vmul.f32 1.0, %v2063
    %v2065 = vrcp.pop %v2062
    %v2066 = vmul.f32 1.0, %v2065
    %v2067 = vmul.f32 %v2064, %v1789
    %v2068 = vadd.f32 %v1978, %v2067
    %v2069 = vtanh.pop %v2068
    %v2070 = vsub.f32 1.0, %v2066
    %v2071 = vmul.f32 %v2070, %v2069
    %v2072 = vmul.f32 %v2066, %v1631
    %v2073 = vadd.f32 %v2071, %v2072
    %2074 = vst.msk [vmem:[#allocation3 + $0x10] sm:$0x3] %vm1189, %v2073
    %v2075 = vld [vmem:[#allocation2 + $0x48] sm:$0x3]
    %v2076 = vld [vmem:[#allocation2 + $0x50] sm:$0x3]
    %v2077 = vld [vmem:[#allocation2 + $0x58] sm:$0x3]
    %v2078 = vld [vmem:[#allocation7 + $0x30] sm:$0xff]
    %v2079 = vld [vmem:[#allocation7 + $0x38] sm:$0xff]
    %v2080 = vld [vmem:[#allocation7 + $0x40] sm:$0xff]
    %v2081 = vld [vmem:[#allocation7 + $0x80] sm:$0xff]
    %v2082 = vld [vmem:[#allocation7 + $0x88] sm:$0xff]
    %v2083 = vld [vmem:[#allocation7 + $0x90] sm:$0xff]
    %v2084 = vld [vmem:[#allocation7 + $0xd0] sm:$0xff]
    %v2085 = vld [vmem:[#allocation7 + $0xd8] sm:$0xff]
    %v2086 = vld [vmem:[#allocation7 + $0xe0] sm:$0xff]
    %v2087 = vld [vmem:[#allocation7 + $0x120] sm:$0xff]
    %v2088 = vld [vmem:[#allocation7 + $0x128] sm:$0xff]
    %v2089 = vld [vmem:[#allocation7 + $0x130] sm:$0xff]
    %v2091 = vsel %vm548, %v2073, 0
    %2093 = vmatprep.subr.mxu0 %v2079
    %2094 = vmatpush1.msra.mxu0 %v2078
    %2095 = vmatprep.subr.mxu0 %v2082
    %2096 = vmatpush1.msra.mxu0 %v2081
    %2097 = vmatprep.subr.mxu0 %v2085
    %2098 = vmatpush1.msra.mxu0 %v2084
    %2099 = vmatprep.subr.mxu0 %v2088
    %2100 = vmatpush1.msra.mxu0 %v2087
    %2101 = vmatprep.subr.mxu0 0.0
    %2102 = vmatpush1.msra.mxu0 0.0
    %2103 = vmatprep.subr.mxu0 0.0
    %2104 = vmatpush1.msra.mxu0 0.0
    %2105 = vmatprep.subr.mxu0 0.0
    %2106 = vmatpush1.msra.mxu0 0.0
    %2107 = vmatprep.subr.mxu0 0.0
    %2108 = vmatpush1.msra.mxu0 0.0
    %2109 = vmatprep.subr.mxu0 0.0
    %2110 = vmatpush1.msra.mxu0 0.0
    %2111 = vmatprep.subr.mxu0 0.0
    %2112 = vmatpush1.msra.mxu0 0.0
    %2113 = vmatprep.subr.mxu0 0.0
    %2114 = vmatpush1.msra.mxu0 0.0
    %2115 = vmatprep.subr.mxu0 0.0
    %2116 = vmatpush1.msra.mxu0 0.0
    %2117 = vmatprep.subr.mxu0 0.0
    %2118 = vmatpush1.msra.mxu0 0.0
    %2119 = vmatprep.subr.mxu0 0.0
    %2120 = vmatpush1.msra.mxu0 0.0
    %2121 = vmatprep.subr.mxu0 0.0
    %2122 = vmatpush1.msra.mxu0 0.0
    %2123 = vmatprep.subr.mxu0 0.0
    %2124 = vmatpush1.msra.mxu0 0.0
    %2125 = vmatprep.subr.mxu0 0.0
    %2126 = vmatpush1.msra.mxu0 0.0
    %2127 = vmatprep.subr.mxu0 0.0
    %2128 = vmatpush1.msra.mxu0 0.0
    %2129 = vmatprep.subr.mxu0 0.0
    %2130 = vmatpush1.msra.mxu0 0.0
    %2131 = vmatprep.subr.mxu0 0.0
    %2132 = vmatpush1.msra.mxu0 0.0
    %2133 = vmatprep.subr.mxu0 0.0
    %2134 = vmatpush1.msra.mxu0 0.0
    %2135 = vmatprep.subr.mxu0 0.0
    %2136 = vmatpush1.msra.mxu0 0.0
    %2137 = vmatprep.subr.mxu0 0.0
    %2138 = vmatpush1.msra.mxu0 0.0
    %2139 = vmatprep.subr.mxu0 0.0
    %2140 = vmatpush1.msra.mxu0 0.0
    %2141 = vmatprep.subr.mxu0 0.0
    %2142 = vmatpush1.msra.mxu0 0.0
    %2143 = vmatprep.subr.mxu0 0.0
    %2144 = vmatpush1.msra.mxu0 0.0
    %2145 = vmatprep.subr.mxu0 0.0
    %2146 = vmatpush1.msra.mxu0 0.0
    %2147 = vmatprep.subr.mxu0 0.0
    %2148 = vmatpush1.msra.mxu0 0.0
    %2149 = vmatprep.subr.mxu0 0.0
    %2150 = vmatpush1.msra.mxu0 0.0
    %2151 = vmatprep.subr.mxu0 0.0
    %2152 = vmatpush1.msra.mxu0 0.0
    %2153 = vmatprep.subr.mxu0 0.0
    %2154 = vmatpush1.msra.mxu0 0.0
    %2155 = vmatprep.subr.mxu0 0.0
    %2156 = vmatpush1.msra.mxu0 0.0
    %2157 = vmatprep.mubr.f32.mxu0 0.0
    %2158 = vmatmul.mubr.f32.gmra.mrb[0].mxu0 %v2091
    %v2159 = vpop.f32.mrb[0].mxu0
    %v2160 = vadd.f32 %v720, %v2159
    %v2161 = vpop.f32.mrb[0].mxu0
    %v2162 = vadd.f32 %v724, %v2161
    %2163 = vdwg.mxu0
    %2164 = vmatprep.subr.mxu0 0.0
    %2165 = vmatpush1.msra.mxu0 %v2080
    %2166 = vmatprep.subr.mxu0 0.0
    %2167 = vmatpush1.msra.mxu0 %v2083
    %2168 = vmatprep.subr.mxu0 0.0
    %2169 = vmatpush1.msra.mxu0 %v2086
    %2170 = vmatprep.subr.mxu0 0.0
    %2171 = vmatpush1.msra.mxu0 %v2089
    %2172 = vmatprep.subr.mxu0 0.0
    %2173 = vmatpush1.msra.mxu0 0.0
    %2174 = vmatprep.subr.mxu0 0.0
    %2175 = vmatpush1.msra.mxu0 0.0
    %2176 = vmatprep.subr.mxu0 0.0
    %2177 = vmatpush1.msra.mxu0 0.0
    %2178 = vmatprep.subr.mxu0 0.0
    %2179 = vmatpush1.msra.mxu0 0.0
    %2180 = vmatprep.subr.mxu0 0.0
    %2181 = vmatpush1.msra.mxu0 0.0
    %2182 = vmatprep.subr.mxu0 0.0
    %2183 = vmatpush1.msra.mxu0 0.0
    %2184 = vmatprep.subr.mxu0 0.0
    %2185 = vmatpush1.msra.mxu0 0.0
    %2186 = vmatprep.subr.mxu0 0.0
    %2187 = vmatpush1.msra.mxu0 0.0
    %2188 = vmatprep.subr.mxu0 0.0
    %2189 = vmatpush1.msra.mxu0 0.0
    %2190 = vmatprep.subr.mxu0 0.0
    %2191 = vmatpush1.msra.mxu0 0.0
    %2192 = vmatprep.subr.mxu0 0.0
    %2193 = vmatpush1.msra.mxu0 0.0
    %2194 = vmatprep.subr.mxu0 0.0
    %2195 = vmatpush1.msra.mxu0 0.0
    %2196 = vmatprep.subr.mxu0 0.0
    %2197 = vmatpush1.msra.mxu0 0.0
    %2198 = vmatprep.subr.mxu0 0.0
    %2199 = vmatpush1.msra.mxu0 0.0
    %2200 = vmatprep.subr.mxu0 0.0
    %2201 = vmatpush1.msra.mxu0 0.0
    %2202 = vmatprep.subr.mxu0 0.0
    %2203 = vmatpush1.msra.mxu0 0.0
    %2204 = vmatprep.subr.mxu0 0.0
    %2205 = vmatpush1.msra.mxu0 0.0
    %2206 = vmatprep.subr.mxu0 0.0
    %2207 = vmatpush1.msra.mxu0 0.0
    %2208 = vmatprep.subr.mxu0 0.0
    %2209 = vmatpush1.msra.mxu0 0.0
    %2210 = vmatprep.subr.mxu0 0.0
    %2211 = vmatpush1.msra.mxu0 0.0
    %2212 = vmatprep.subr.mxu0 0.0
    %2213 = vmatpush1.msra.mxu0 0.0
    %2214 = vmatprep.subr.mxu0 0.0
    %2215 = vmatpush1.msra.mxu0 0.0
    %2216 = vmatprep.subr.mxu0 0.0
    %2217 = vmatpush1.msra.mxu0 0.0
    %2218 = vmatprep.subr.mxu0 0.0
    %2219 = vmatpush1.msra.mxu0 0.0
    %2220 = vmatprep.subr.mxu0 0.0
    %2221 = vmatpush1.msra.mxu0 0.0
    %2222 = vmatprep.subr.mxu0 0.0
    %2223 = vmatpush1.msra.mxu0 0.0
    %2224 = vmatprep.subr.mxu0 0.0
    %2225 = vmatpush1.msra.mxu0 0.0
    %2226 = vmatprep.subr.mxu0 0.0
    %2227 = vmatpush1.msra.mxu0 0.0
    %2228 = vmatprep.mubr.f32.mxu0 0.0
    %2229 = vmatmul.mubr.f32.gmra.mrb[0].mxu0 %v2091
    %v2230 = vpop.f32.mrb[0].mxu0
    %v2231 = vadd.f32 %v728, %v2230
    %v2232 = vpop.f32.mrb[0].mxu0
    %2233 = vdwg.mxu0
    %v2234 = vadd.f32 %v2075, %v1980
    %v2235 = vadd.f32 %v2076, %v2049
    %v2236 = vxor.u32 %v2234, 2147483648
    %v2237 = vxor.u32 %v2235, 2147483648
    %v2238 = vmul.f32 %v2236, 1.442695
    %v2239 = vpow.pop %v2238
    %v2240 = vmul.f32 %v2237, 1.442695
    %v2241 = vpow.pop %v2240
    %v2242 = vadd.f32 %v2239, 1.0
    %v2243 = vadd.f32 %v2241, 1.0
    %v2244 = vrcp.pop %v2242
    %v2245 = vmul.f32 1.0, %v2244
    %v2246 = vrcp.pop %v2243
    %v2247 = vmul.f32 1.0, %v2246
    %v2248 = vmul.f32 %v2245, %v2051
    %v2249 = vadd.f32 %v2077, %v2248
    %v2250 = vtanh.pop %v2249
    %v2251 = vsub.f32 1.0, %v2247
    %v2252 = vmul.f32 %v2251, %v2250
    %v2253 = vmul.f32 %v2247, %v1812
    %v2254 = vadd.f32 %v2252, %v2253
    %v2255 = vld [vmem:[#allocation7] sm:$0xff]
    %v2256 = vld [vmem:[#allocation7 + $0x8] sm:$0xff]
    %v2257 = vld [vmem:[#allocation7 + $0x10] sm:$0xff]
    %v2258 = vld [vmem:[#allocation7 + $0x18] sm:$0xff]
    %v2259 = vld [vmem:[#allocation7 + $0x20] sm:$0xff]
    %v2260 = vld [vmem:[#allocation7 + $0x28] sm:$0xff]
    %v2261 = vld [vmem:[#allocation7 + $0x50] sm:$0xff]
    %v2262 = vld [vmem:[#allocation7 + $0x58] sm:$0xff]
    %v2263 = vld [vmem:[#allocation7 + $0x60] sm:$0xff]
    %v2264 = vld [vmem:[#allocation7 + $0x68] sm:$0xff]
    %v2265 = vld [vmem:[#allocation7 + $0x70] sm:$0xff]
    %v2266 = vld [vmem:[#allocation7 + $0x78] sm:$0xff]
    %v2267 = vld [vmem:[#allocation7 + $0xa0] sm:$0xff]
    %v2268 = vld [vmem:[#allocation7 + $0xa8] sm:$0xff]
    %v2269 = vld [vmem:[#allocation7 + $0xb0] sm:$0xff]
    %v2270 = vld [vmem:[#allocation7 + $0xb8] sm:$0xff]
    %v2271 = vld [vmem:[#allocation7 + $0xc0] sm:$0xff]
    %v2272 = vld [vmem:[#allocation7 + $0xc8] sm:$0xff]
    %v2273 = vld [vmem:[#allocation7 + $0xf0] sm:$0xff]
    %v2274 = vld [vmem:[#allocation7 + $0xf8] sm:$0xff]
    %v2275 = vld [vmem:[#allocation7 + $0x100] sm:$0xff]
    %v2276 = vld [vmem:[#allocation7 + $0x108] sm:$0xff]
    %v2277 = vld [vmem:[#allocation7 + $0x110] sm:$0xff]
    %v2278 = vld [vmem:[#allocation7 + $0x118] sm:$0xff]
    %v2280 = vsel %vm548, %v2254, 0
    %2282 = vmatprep.subr.mxu0 %v2256
    %2283 = vmatpush1.msra.mxu0 %v2255
    %2284 = vmatprep.subr.mxu0 %v2262
    %2285 = vmatpush1.msra.mxu0 %v2261
    %2286 = vmatprep.subr.mxu0 %v2268
    %2287 = vmatpush1.msra.mxu0 %v2267
    %2288 = vmatprep.subr.mxu0 %v2274
    %2289 = vmatpush1.msra.mxu0 %v2273
    %2290 = vmatprep.subr.mxu0 0.0
    %2291 = vmatpush1.msra.mxu0 0.0
    %2292 = vmatprep.subr.mxu0 0.0
    %2293 = vmatpush1.msra.mxu0 0.0
    %2294 = vmatprep.subr.mxu0 0.0
    %2295 = vmatpush1.msra.mxu0 0.0
    %2296 = vmatprep.subr.mxu0 0.0
    %2297 = vmatpush1.msra.mxu0 0.0
    %2298 = vmatprep.subr.mxu0 0.0
    %2299 = vmatpush1.msra.mxu0 0.0
    %2300 = vmatprep.subr.mxu0 0.0
    %2301 = vmatpush1.msra.mxu0 0.0
    %2302 = vmatprep.subr.mxu0 0.0
    %2303 = vmatpush1.msra.mxu0 0.0
    %2304 = vmatprep.subr.mxu0 0.0
    %2305 = vmatpush1.msra.mxu0 0.0
    %2306 = vmatprep.subr.mxu0 0.0
    %2307 = vmatpush1.msra.mxu0 0.0
    %2308 = vmatprep.subr.mxu0 0.0
    %2309 = vmatpush1.msra.mxu0 0.0
    %2310 = vmatprep.subr.mxu0 0.0
    %2311 = vmatpush1.msra.mxu0 0.0
    %2312 = vmatprep.subr.mxu0 0.0
    %2313 = vmatpush1.msra.mxu0 0.0
    %2314 = vmatprep.subr.mxu0 0.0
    %2315 = vmatpush1.msra.mxu0 0.0
    %2316 = vmatprep.subr.mxu0 0.0
    %2317 = vmatpush1.msra.mxu0 0.0
    %2318 = vmatprep.subr.mxu0 0.0
    %2319 = vmatpush1.msra.mxu0 0.0
    %2320 = vmatprep.subr.mxu0 0.0
    %2321 = vmatpush1.msra.mxu0 0.0
    %2322 = vmatprep.subr.mxu0 0.0
    %2323 = vmatpush1.msra.mxu0 0.0
    %2324 = vmatprep.subr.mxu0 0.0
    %2325 = vmatpush1.msra.mxu0 0.0
    %2326 = vmatprep.subr.mxu0 0.0
    %2327 = vmatpush1.msra.mxu0 0.0
    %2328 = vmatprep.subr.mxu0 0.0
    %2329 = vmatpush1.msra.mxu0 0.0
    %2330 = vmatprep.subr.mxu0 0.0
    %2331 = vmatpush1.msra.mxu0 0.0
    %2332 = vmatprep.subr.mxu0 0.0
    %2333 = vmatpush1.msra.mxu0 0.0
    %2334 = vmatprep.subr.mxu0 0.0
    %2335 = vmatpush1.msra.mxu0 0.0
    %2336 = vmatprep.subr.mxu0 0.0
    %2337 = vmatpush1.msra.mxu0 0.0
    %2338 = vmatprep.subr.mxu0 0.0
    %2339 = vmatpush1.msra.mxu0 0.0
    %2340 = vmatprep.subr.mxu0 0.0
    %2341 = vmatpush1.msra.mxu0 0.0
    %2342 = vmatprep.subr.mxu0 0.0
    %2343 = vmatpush1.msra.mxu0 0.0
    %2344 = vmatprep.subr.mxu0 0.0
    %2345 = vmatpush1.msra.mxu0 0.0
    %2346 = vmatprep.mubr.f32.mxu0 0.0
    %2347 = vmatmul.mubr.f32.gmra.mrb[0].mxu0 %v2280
    %v2348 = vpop.f32.mrb[0].mxu0
    %v2349 = vadd.f32 %v925, %v2348
    %v2350 = vpop.f32.mrb[0].mxu0
    %v2351 = vadd.f32 %v929, %v2350
    %2352 = vdwg.mxu0
    %2353 = vmatprep.subr.mxu0 %v2258
    %2354 = vmatpush1.msra.mxu0 %v2257
    %2355 = vmatprep.subr.mxu0 %v2264
    %2356 = vmatpush1.msra.mxu0 %v2263
    %2357 = vmatprep.subr.mxu0 %v2270
    %2358 = vmatpush1.msra.mxu0 %v2269
    %2359 = vmatprep.subr.mxu0 %v2276
    %2360 = vmatpush1.msra.mxu0 %v2275
    %2361 = vmatprep.subr.mxu0 0.0
    %2362 = vmatpush1.msra.mxu0 0.0
    %2363 = vmatprep.subr.mxu0 0.0
    %2364 = vmatpush1.msra.mxu0 0.0
    %2365 = vmatprep.subr.mxu0 0.0
    %2366 = vmatpush1.msra.mxu0 0.0
    %2367 = vmatprep.subr.mxu0 0.0
    %2368 = vmatpush1.msra.mxu0 0.0
    %2369 = vmatprep.subr.mxu0 0.0
    %2370 = vmatpush1.msra.mxu0 0.0
    %2371 = vmatprep.subr.mxu0 0.0
    %2372 = vmatpush1.msra.mxu0 0.0
    %2373 = vmatprep.subr.mxu0 0.0
    %2374 = vmatpush1.msra.mxu0 0.0
    %2375 = vmatprep.subr.mxu0 0.0
    %2376 = vmatpush1.msra.mxu0 0.0
    %2377 = vmatprep.subr.mxu0 0.0
    %2378 = vmatpush1.msra.mxu0 0.0
    %2379 = vmatprep.subr.mxu0 0.0
    %2380 = vmatpush1.msra.mxu0 0.0
    %2381 = vmatprep.subr.mxu0 0.0
    %2382 = vmatpush1.msra.mxu0 0.0
    %2383 = vmatprep.subr.mxu0 0.0
    %2384 = vmatpush1.msra.mxu0 0.0
    %2385 = vmatprep.subr.mxu0 0.0
    %2386 = vmatpush1.msra.mxu0 0.0
    %2387 = vmatprep.subr.mxu0 0.0
    %2388 = vmatpush1.msra.mxu0 0.0
    %2389 = vmatprep.subr.mxu0 0.0
    %2390 = vmatpush1.msra.mxu0 0.0
    %2391 = vmatprep.subr.mxu0 0.0
    %2392 = vmatpush1.msra.mxu0 0.0
    %2393 = vmatprep.subr.mxu0 0.0
    %2394 = vmatpush1.msra.mxu0 0.0
    %2395 = vmatprep.subr.mxu0 0.0
    %2396 = vmatpush1.msra.mxu0 0.0
    %2397 = vmatprep.subr.mxu0 0.0
    %2398 = vmatpush1.msra.mxu0 0.0
    %2399 = vmatprep.subr.mxu0 0.0
    %2400 = vmatpush1.msra.mxu0 0.0
    %2401 = vmatprep.subr.mxu0 0.0
    %2402 = vmatpush1.msra.mxu0 0.0
    %2403 = vmatprep.subr.mxu0 0.0
    %2404 = vmatpush1.msra.mxu0 0.0
    %2405 = vmatprep.subr.mxu0 0.0
    %2406 = vmatpush1.msra.mxu0 0.0
    %2407 = vmatprep.subr.mxu0 0.0
    %2408 = vmatpush1.msra.mxu0 0.0
    %2409 = vmatprep.subr.mxu0 0.0
    %2410 = vmatpush1.msra.mxu0 0.0
    %2411 = vmatprep.subr.mxu0 0.0
    %2412 = vmatpush1.msra.mxu0 0.0
    %2413 = vmatprep.subr.mxu0 0.0
    %2414 = vmatpush1.msra.mxu0 0.0
    %2415 = vmatprep.subr.mxu0 0.0
    %2416 = vmatpush1.msra.mxu0 0.0
    %2417 = vmatprep.mubr.f32.mxu0 0.0
    %2418 = vmatmul.mubr.f32.gmra.mrb[0].mxu0 %v2280
    %v2419 = vpop.f32.mrb[0].mxu0
    %v2420 = vadd.f32 %v933, %v2419
    %v2421 = vpop.f32.mrb[0].mxu0
    %v2422 = vadd.f32 %v937, %v2421
    %2423 = vdwg.mxu0
    %2424 = vmatprep.subr.mxu0 %v2260
    %2425 = vmatpush1.msra.mxu0 %v2259
    %2426 = vmatprep.subr.mxu0 %v2266
    %2427 = vmatpush1.msra.mxu0 %v2265
    %2428 = vmatprep.subr.mxu0 %v2272
    %2429 = vmatpush1.msra.mxu0 %v2271
    %2430 = vmatprep.subr.mxu0 %v2278
    %2431 = vmatpush1.msra.mxu0 %v2277
    %2432 = vmatprep.subr.mxu0 0.0
    %2433 = vmatpush1.msra.mxu0 0.0
    %2434 = vmatprep.subr.mxu0 0.0
    %2435 = vmatpush1.msra.mxu0 0.0
    %2436 = vmatprep.subr.mxu0 0.0
    %2437 = vmatpush1.msra.mxu0 0.0
    %2438 = vmatprep.subr.mxu0 0.0
    %2439 = vmatpush1.msra.mxu0 0.0
    %2440 = vmatprep.subr.mxu0 0.0
    %2441 = vmatpush1.msra.mxu0 0.0
    %2442 = vmatprep.subr.mxu0 0.0
    %2443 = vmatpush1.msra.mxu0 0.0
    %2444 = vmatprep.subr.mxu0 0.0
    %2445 = vmatpush1.msra.mxu0 0.0
    %2446 = vmatprep.subr.mxu0 0.0
    %2447 = vmatpush1.msra.mxu0 0.0
    %2448 = vmatprep.subr.mxu0 0.0
    %2449 = vmatpush1.msra.mxu0 0.0
    %2450 = vmatprep.subr.mxu0 0.0
    %2451 = vmatpush1.msra.mxu0 0.0
    %2452 = vmatprep.subr.mxu0 0.0
    %2453 = vmatpush1.msra.mxu0 0.0
    %2454 = vmatprep.subr.mxu0 0.0
    %2455 = vmatpush1.msra.mxu0 0.0
    %2456 = vmatprep.subr.mxu0 0.0
    %2457 = vmatpush1.msra.mxu0 0.0
    %2458 = vmatprep.subr.mxu0 0.0
    %2459 = vmatpush1.msra.mxu0 0.0
    %2460 = vmatprep.subr.mxu0 0.0
    %2461 = vmatpush1.msra.mxu0 0.0
    %2462 = vmatprep.subr.mxu0 0.0
    %2463 = vmatpush1.msra.mxu0 0.0
    %2464 = vmatprep.subr.mxu0 0.0
    %2465 = vmatpush1.msra.mxu0 0.0
    %2466 = vmatprep.subr.mxu0 0.0
    %2467 = vmatpush1.msra.mxu0 0.0
    %2468 = vmatprep.subr.mxu0 0.0
    %2469 = vmatpush1.msra.mxu0 0.0
    %2470 = vmatprep.subr.mxu0 0.0
    %2471 = vmatpush1.msra.mxu0 0.0
    %2472 = vmatprep.subr.mxu0 0.0
    %2473 = vmatpush1.msra.mxu0 0.0
    %2474 = vmatprep.subr.mxu0 0.0
    %2475 = vmatpush1.msra.mxu0 0.0
    %2476 = vmatprep.subr.mxu0 0.0
    %2477 = vmatpush1.msra.mxu0 0.0
    %2478 = vmatprep.subr.mxu0 0.0
    %2479 = vmatpush1.msra.mxu0 0.0
    %2480 = vmatprep.subr.mxu0 0.0
    %2481 = vmatpush1.msra.mxu0 0.0
    %2482 = vmatprep.subr.mxu0 0.0
    %2483 = vmatpush1.msra.mxu0 0.0
    %2484 = vmatprep.subr.mxu0 0.0
    %2485 = vmatpush1.msra.mxu0 0.0
    %2486 = vmatprep.subr.mxu0 0.0
    %2487 = vmatpush1.msra.mxu0 0.0
    %2488 = vmatprep.mubr.f32.mxu0 0.0
    %2489 = vmatmul.mubr.f32.gmra.mrb[0].mxu0 %v2280
    %v2490 = vpop.f32.mrb[0].mxu0
    %v2491 = vadd.f32 %v941, %v2490
    %v2492 = vpop.f32.mrb[0].mxu0
    %v2493 = vadd.f32 %v945, %v2492
    %2494 = vdwg.mxu0
    %v2495 = vadd.f32 %v2349, %v2160
    %v2496 = vadd.f32 %v2351, %v2162
    %v2497 = vxor.u32 %v2495, 2147483648
    %v2498 = vxor.u32 %v2496, 2147483648
    %v2499 = vmul.f32 %v2497, 1.442695
    %v2500 = vpow.pop %v2499
    %v2501 = vmul.f32 %v2498, 1.442695
    %v2502 = vpow.pop %v2501
    %v2503 = vadd.f32 %v2500, 1.0
    %v2504 = vadd.f32 %v2502, 1.0
    %v2505 = vrcp.pop %v2503
    %v2506 = vmul.f32 1.0, %v2505
    %v2507 = vrcp.pop %v2504
    %v2508 = vmul.f32 1.0, %v2507
    %v2509 = vmul.f32 %v2506, %v2231
    %v2510 = vadd.f32 %v2420, %v2509
    %v2511 = vtanh.pop %v2510
    %v2512 = vsub.f32 1.0, %v2508
    %v2513 = vmul.f32 %v2512, %v2511
    %v2514 = vmul.f32 %v2508, %v2073
    %v2515 = vadd.f32 %v2513, %v2514
    %2516 = vst.msk [vmem:[#allocation3 + $0x18] sm:$0x3] %vm1189, %v2515
    %v2517 = vld [vmem:[#allocation2 + $0x60] sm:$0x3]
    %v2518 = vld [vmem:[#allocation2 + $0x68] sm:$0x3]
    %v2519 = vld [vmem:[#allocation2 + $0x70] sm:$0x3]
    %v2520 = vld [vmem:[#allocation7 + $0x30] sm:$0xff]
    %v2521 = vld [vmem:[#allocation7 + $0x38] sm:$0xff]
    %v2522 = vld [vmem:[#allocation7 + $0x40] sm:$0xff]
    %v2523 = vld [vmem:[#allocation7 + $0x80] sm:$0xff]
    %v2524 = vld [vmem:[#allocation7 + $0x88] sm:$0xff]
    %v2525 = vld [vmem:[#allocation7 + $0x90] sm:$0xff]
    %v2526 = vld [vmem:[#allocation7 + $0xd0] sm:$0xff]
    %v2527 = vld [vmem:[#allocation7 + $0xd8] sm:$0xff]
    %v2528 = vld [vmem:[#allocation7 + $0xe0] sm:$0xff]
    %v2529 = vld [vmem:[#allocation7 + $0x120] sm:$0xff]
    %v2530 = vld [vmem:[#allocation7 + $0x128] sm:$0xff]
    %v2531 = vld [vmem:[#allocation7 + $0x130] sm:$0xff]
    %v2533 = vsel %vm548, %v2515, 0
    %2535 = vmatprep.subr.mxu0 %v2521
    %2536 = vmatpush1.msra.mxu0 %v2520
    %2537 = vmatprep.subr.mxu0 %v2524
    %2538 = vmatpush1.msra.mxu0 %v2523
    %2539 = vmatprep.subr.mxu0 %v2527
    %2540 = vmatpush1.msra.mxu0 %v2526
    %2541 = vmatprep.subr.mxu0 %v2530
    %2542 = vmatpush1.msra.mxu0 %v2529
    %2543 = vmatprep.subr.mxu0 0.0
    %2544 = vmatpush1.msra.mxu0 0.0
    %2545 = vmatprep.subr.mxu0 0.0
    %2546 = vmatpush1.msra.mxu0 0.0
    %2547 = vmatprep.subr.mxu0 0.0
    %2548 = vmatpush1.msra.mxu0 0.0
    %2549 = vmatprep.subr.mxu0 0.0
    %2550 = vmatpush1.msra.mxu0 0.0
    %2551 = vmatprep.subr.mxu0 0.0
    %2552 = vmatpush1.msra.mxu0 0.0
    %2553 = vmatprep.subr.mxu0 0.0
    %2554 = vmatpush1.msra.mxu0 0.0
    %2555 = vmatprep.subr.mxu0 0.0
    %2556 = vmatpush1.msra.mxu0 0.0
    %2557 = vmatprep.subr.mxu0 0.0
    %2558 = vmatpush1.msra.mxu0 0.0
    %2559 = vmatprep.subr.mxu0 0.0
    %2560 = vmatpush1.msra.mxu0 0.0
    %2561 = vmatprep.subr.mxu0 0.0
    %2562 = vmatpush1.msra.mxu0 0.0
    %2563 = vmatprep.subr.mxu0 0.0
    %2564 = vmatpush1.msra.mxu0 0.0
    %2565 = vmatprep.subr.mxu0 0.0
    %2566 = vmatpush1.msra.mxu0 0.0
    %2567 = vmatprep.subr.mxu0 0.0
    %2568 = vmatpush1.msra.mxu0 0.0
    %2569 = vmatprep.subr.mxu0 0.0
    %2570 = vmatpush1.msra.mxu0 0.0
    %2571 = vmatprep.subr.mxu0 0.0
    %2572 = vmatpush1.msra.mxu0 0.0
    %2573 = vmatprep.subr.mxu0 0.0
    %2574 = vmatpush1.msra.mxu0 0.0
    %2575 = vmatprep.subr.mxu0 0.0
    %2576 = vmatpush1.msra.mxu0 0.0
    %2577 = vmatprep.subr.mxu0 0.0
    %2578 = vmatpush1.msra.mxu0 0.0
    %2579 = vmatprep.subr.mxu0 0.0
    %2580 = vmatpush1.msra.mxu0 0.0
    %2581 = vmatprep.subr.mxu0 0.0
    %2582 = vmatpush1.msra.mxu0 0.0
    %2583 = vmatprep.subr.mxu0 0.0
    %2584 = vmatpush1.msra.mxu0 0.0
    %2585 = vmatprep.subr.mxu0 0.0
    %2586 = vmatpush1.msra.mxu0 0.0
    %2587 = vmatprep.subr.mxu0 0.0
    %2588 = vmatpush1.msra.mxu0 0.0
    %2589 = vmatprep.subr.mxu0 0.0
    %2590 = vmatpush1.msra.mxu0 0.0
    %2591 = vmatprep.subr.mxu0 0.0
    %2592 = vmatpush1.msra.mxu0 0.0
    %2593 = vmatprep.subr.mxu0 0.0
    %2594 = vmatpush1.msra.mxu0 0.0
    %2595 = vmatprep.subr.mxu0 0.0
    %2596 = vmatpush1.msra.mxu0 0.0
    %2597 = vmatprep.subr.mxu0 0.0
    %2598 = vmatpush1.msra.mxu0 0.0
    %2599 = vmatprep.mubr.f32.mxu0 0.0
    %2600 = vmatmul.mubr.f32.gmra.mrb[0].mxu0 %v2533
    %v2601 = vpop.f32.mrb[0].mxu0
    %v2602 = vadd.f32 %v720, %v2601
    %v2603 = vpop.f32.mrb[0].mxu0
    %v2604 = vadd.f32 %v724, %v2603
    %2605 = vdwg.mxu0
    %2606 = vmatprep.subr.mxu0 0.0
    %2607 = vmatpush1.msra.mxu0 %v2522
    %2608 = vmatprep.subr.mxu0 0.0
    %2609 = vmatpush1.msra.mxu0 %v2525
    %2610 = vmatprep.subr.mxu0 0.0
    %2611 = vmatpush1.msra.mxu0 %v2528
    %2612 = vmatprep.subr.mxu0 0.0
    %2613 = vmatpush1.msra.mxu0 %v2531
    %2614 = vmatprep.subr.mxu0 0.0
    %2615 = vmatpush1.msra.mxu0 0.0
    %2616 = vmatprep.subr.mxu0 0.0
    %2617 = vmatpush1.msra.mxu0 0.0
    %2618 = vmatprep.subr.mxu0 0.0
    %2619 = vmatpush1.msra.mxu0 0.0
    %2620 = vmatprep.subr.mxu0 0.0
    %2621 = vmatpush1.msra.mxu0 0.0
    %2622 = vmatprep.subr.mxu0 0.0
    %2623 = vmatpush1.msra.mxu0 0.0
    %2624 = vmatprep.subr.mxu0 0.0
    %2625 = vmatpush1.msra.mxu0 0.0
    %2626 = vmatprep.subr.mxu0 0.0
    %2627 = vmatpush1.msra.mxu0 0.0
    %2628 = vmatprep.subr.mxu0 0.0
    %2629 = vmatpush1.msra.mxu0 0.0
    %2630 = vmatprep.subr.mxu0 0.0
    %2631 = vmatpush1.msra.mxu0 0.0
    %2632 = vmatprep.subr.mxu0 0.0
    %2633 = vmatpush1.msra.mxu0 0.0
    %2634 = vmatprep.subr.mxu0 0.0
    %2635 = vmatpush1.msra.mxu0 0.0
    %2636 = vmatprep.subr.mxu0 0.0
    %2637 = vmatpush1.msra.mxu0 0.0
    %2638 = vmatprep.subr.mxu0 0.0
    %2639 = vmatpush1.msra.mxu0 0.0
    %2640 = vmatprep.subr.mxu0 0.0
    %2641 = vmatpush1.msra.mxu0 0.0
    %2642 = vmatprep.subr.mxu0 0.0
    %2643 = vmatpush1.msra.mxu0 0.0
    %2644 = vmatprep.subr.mxu0 0.0
    %2645 = vmatpush1.msra.mxu0 0.0
    %2646 = vmatprep.subr.mxu0 0.0
    %2647 = vmatpush1.msra.mxu0 0.0
    %2648 = vmatprep.subr.mxu0 0.0
    %2649 = vmatpush1.msra.mxu0 0.0
    %2650 = vmatprep.subr.mxu0 0.0
    %2651 = vmatpush1.msra.mxu0 0.0
    %2652 = vmatprep.subr.mxu0 0.0
    %2653 = vmatpush1.msra.mxu0 0.0
    %2654 = vmatprep.subr.mxu0 0.0
    %2655 = vmatpush1.msra.mxu0 0.0
    %2656 = vmatprep.subr.mxu0 0.0
    %2657 = vmatpush1.msra.mxu0 0.0
    %2658 = vmatprep.subr.mxu0 0.0
    %2659 = vmatpush1.msra.mxu0 0.0
    %2660 = vmatprep.subr.mxu0 0.0
    %2661 = vmatpush1.msra.mxu0 0.0
    %2662 = vmatprep.subr.mxu0 0.0
    %2663 = vmatpush1.msra.mxu0 0.0
    %2664 = vmatprep.subr.mxu0 0.0
    %2665 = vmatpush1.msra.mxu0 0.0
    %2666 = vmatprep.subr.mxu0 0.0
    %2667 = vmatpush1.msra.mxu0 0.0
    %2668 = vmatprep.subr.mxu0 0.0
    %2669 = vmatpush1.msra.mxu0 0.0
    %2670 = vmatprep.mubr.f32.mxu0 0.0
    %2671 = vmatmul.mubr.f32.gmra.mrb[0].mxu0 %v2533
    %v2672 = vpop.f32.mrb[0].mxu0
    %v2673 = vadd.f32 %v728, %v2672
    %v2674 = vpop.f32.mrb[0].mxu0
    %2675 = vdwg.mxu0
    %v2676 = vadd.f32 %v2517, %v2422
    %v2677 = vadd.f32 %v2518, %v2491
    %v2678 = vxor.u32 %v2676, 2147483648
    %v2679 = vxor.u32 %v2677, 2147483648
    %v2680 = vmul.f32 %v2678, 1.442695
    %v2681 = vpow.pop %v2680
    %v2682 = vmul.f32 %v2679, 1.442695
    %v2683 = vpow.pop %v2682
    %v2684 = vadd.f32 %v2681, 1.0
    %v2685 = vadd.f32 %v2683, 1.0
    %v2686 = vrcp.pop %v2684
    %v2687 = vmul.f32 1.0, %v2686
    %v2688 = vrcp.pop %v2685
    %v2689 = vmul.f32 1.0, %v2688
    %v2690 = vmul.f32 %v2687, %v2493
    %v2691 = vadd.f32 %v2519, %v2690
    %v2692 = vtanh.pop %v2691
    %v2693 = vsub.f32 1.0, %v2689
    %v2694 = vmul.f32 %v2693, %v2692
    %v2695 = vmul.f32 %v2689, %v2254
    %v2696 = vadd.f32 %v2694, %v2695
    %v2697 = vld [vmem:[#allocation7] sm:$0xff]
    %v2698 = vld [vmem:[#allocation7 + $0x8] sm:$0xff]
    %v2699 = vld [vmem:[#allocation7 + $0x10] sm:$0xff]
    %v2700 = vld [vmem:[#allocation7 + $0x18] sm:$0xff]
    %v2701 = vld [vmem:[#allocation7 + $0x20] sm:$0xff]
    %v2702 = vld [vmem:[#allocation7 + $0x28] sm:$0xff]
    %v2703 = vld [vmem:[#allocation7 + $0x50] sm:$0xff]
    %v2704 = vld [vmem:[#allocation7 + $0x58] sm:$0xff]
    %v2705 = vld [vmem:[#allocation7 + $0x60] sm:$0xff]
    %v2706 = vld [vmem:[#allocation7 + $0x68] sm:$0xff]
    %v2707 = vld [vmem:[#allocation7 + $0x70] sm:$0xff]
    %v2708 = vld [vmem:[#allocation7 + $0x78] sm:$0xff]
    %v2709 = vld [vmem:[#allocation7 + $0xa0] sm:$0xff]
    %v2710 = vld [vmem:[#allocation7 + $0xa8] sm:$0xff]
    %v2711 = vld [vmem:[#allocation7 + $0xb0] sm:$0xff]
    %v2712 = vld [vmem:[#allocation7 + $0xb8] sm:$0xff]
    %v2713 = vld [vmem:[#allocation7 + $0xc0] sm:$0xff]
    %v2714 = vld [vmem:[#allocation7 + $0xc8] sm:$0xff]
    %v2715 = vld [vmem:[#allocation7 + $0xf0] sm:$0xff]
    %v2716 = vld [vmem:[#allocation7 + $0xf8] sm:$0xff]
    %v2717 = vld [vmem:[#allocation7 + $0x100] sm:$0xff]
    %v2718 = vld [vmem:[#allocation7 + $0x108] sm:$0xff]
    %v2719 = vld [vmem:[#allocation7 + $0x110] sm:$0xff]
    %v2720 = vld [vmem:[#allocation7 + $0x118] sm:$0xff]
    %v2722 = vsel %vm548, %v2696, 0
    %2724 = vmatprep.subr.mxu0 %v2698
    %2725 = vmatpush1.msra.mxu0 %v2697
    %2726 = vmatprep.subr.mxu0 %v2704
    %2727 = vmatpush1.msra.mxu0 %v2703
    %2728 = vmatprep.subr.mxu0 %v2710
    %2729 = vmatpush1.msra.mxu0 %v2709
    %2730 = vmatprep.subr.mxu0 %v2716
    %2731 = vmatpush1.msra.mxu0 %v2715
    %2732 = vmatprep.subr.mxu0 0.0
    %2733 = vmatpush1.msra.mxu0 0.0
    %2734 = vmatprep.subr.mxu0 0.0
    %2735 = vmatpush1.msra.mxu0 0.0
    %2736 = vmatprep.subr.mxu0 0.0
    %2737 = vmatpush1.msra.mxu0 0.0
    %2738 = vmatprep.subr.mxu0 0.0
    %2739 = vmatpush1.msra.mxu0 0.0
    %2740 = vmatprep.subr.mxu0 0.0
    %2741 = vmatpush1.msra.mxu0 0.0
    %2742 = vmatprep.subr.mxu0 0.0
    %2743 = vmatpush1.msra.mxu0 0.0
    %2744 = vmatprep.subr.mxu0 0.0
    %2745 = vmatpush1.msra.mxu0 0.0
    %2746 = vmatprep.subr.mxu0 0.0
    %2747 = vmatpush1.msra.mxu0 0.0
    %2748 = vmatprep.subr.mxu0 0.0
    %2749 = vmatpush1.msra.mxu0 0.0
    %2750 = vmatprep.subr.mxu0 0.0
    %2751 = vmatpush1.msra.mxu0 0.0
    %2752 = vmatprep.subr.mxu0 0.0
    %2753 = vmatpush1.msra.mxu0 0.0
    %2754 = vmatprep.subr.mxu0 0.0
    %2755 = vmatpush1.msra.mxu0 0.0
    %2756 = vmatprep.subr.mxu0 0.0
    %2757 = vmatpush1.msra.mxu0 0.0
    %2758 = vmatprep.subr.mxu0 0.0
    %2759 = vmatpush1.msra.mxu0 0.0
    %2760 = vmatprep.subr.mxu0 0.0
    %2761 = vmatpush1.msra.mxu0 0.0
    %2762 = vmatprep.subr.mxu0 0.0
    %2763 = vmatpush1.msra.mxu0 0.0
    %2764 = vmatprep.subr.mxu0 0.0
    %2765 = vmatpush1.msra.mxu0 0.0
    %2766 = vmatprep.subr.mxu0 0.0
    %2767 = vmatpush1.msra.mxu0 0.0
    %2768 = vmatprep.subr.mxu0 0.0
    %2769 = vmatpush1.msra.mxu0 0.0
    %2770 = vmatprep.subr.mxu0 0.0
    %2771 = vmatpush1.msra.mxu0 0.0
    %2772 = vmatprep.subr.mxu0 0.0
    %2773 = vmatpush1.msra.mxu0 0.0
    %2774 = vmatprep.subr.mxu0 0.0
    %2775 = vmatpush1.msra.mxu0 0.0
    %2776 = vmatprep.subr.mxu0 0.0
    %2777 = vmatpush1.msra.mxu0 0.0
    %2778 = vmatprep.subr.mxu0 0.0
    %2779 = vmatpush1.msra.mxu0 0.0
    %2780 = vmatprep.subr.mxu0 0.0
    %2781 = vmatpush1.msra.mxu0 0.0
    %2782 = vmatprep.subr.mxu0 0.0
    %2783 = vmatpush1.msra.mxu0 0.0
    %2784 = vmatprep.subr.mxu0 0.0
    %2785 = vmatpush1.msra.mxu0 0.0
    %2786 = vmatprep.subr.mxu0 0.0
    %2787 = vmatpush1.msra.mxu0 0.0
    %2788 = vmatprep.mubr.f32.mxu0 0.0
    %2789 = vmatmul.mubr.f32.gmra.mrb[0].mxu0 %v2722
    %v2790 = vpop.f32.mrb[0].mxu0
    %v2791 = vadd.f32 %v925, %v2790
    %v2792 = vpop.f32.mrb[0].mxu0
    %v2793 = vadd.f32 %v929, %v2792
    %2794 = vdwg.mxu0
    %2795 = vmatprep.subr.mxu0 %v2700
    %2796 = vmatpush1.msra.mxu0 %v2699
    %2797 = vmatprep.subr.mxu0 %v2706
    %2798 = vmatpush1.msra.mxu0 %v2705
    %2799 = vmatprep.subr.mxu0 %v2712
    %2800 = vmatpush1.msra.mxu0 %v2711
    %2801 = vmatprep.subr.mxu0 %v2718
    %2802 = vmatpush1.msra.mxu0 %v2717
    %2803 = vmatprep.subr.mxu0 0.0
    %2804 = vmatpush1.msra.mxu0 0.0
    %2805 = vmatprep.subr.mxu0 0.0
    %2806 = vmatpush1.msra.mxu0 0.0
    %2807 = vmatprep.subr.mxu0 0.0
    %2808 = vmatpush1.msra.mxu0 0.0
    %2809 = vmatprep.subr.mxu0 0.0
    %2810 = vmatpush1.msra.mxu0 0.0
    %2811 = vmatprep.subr.mxu0 0.0
    %2812 = vmatpush1.msra.mxu0 0.0
    %2813 = vmatprep.subr.mxu0 0.0
    %2814 = vmatpush1.msra.mxu0 0.0
    %2815 = vmatprep.subr.mxu0 0.0
    %2816 = vmatpush1.msra.mxu0 0.0
    %2817 = vmatprep.subr.mxu0 0.0
    %2818 = vmatpush1.msra.mxu0 0.0
    %2819 = vmatprep.subr.mxu0 0.0
    %2820 = vmatpush1.msra.mxu0 0.0
    %2821 = vmatprep.subr.mxu0 0.0
    %2822 = vmatpush1.msra.mxu0 0.0
    %2823 = vmatprep.subr.mxu0 0.0
    %2824 = vmatpush1.msra.mxu0 0.0
    %2825 = vmatprep.subr.mxu0 0.0
    %2826 = vmatpush1.msra.mxu0 0.0
    %2827 = vmatprep.subr.mxu0 0.0
    %2828 = vmatpush1.msra.mxu0 0.0
    %2829 = vmatprep.subr.mxu0 0.0
    %2830 = vmatpush1.msra.mxu0 0.0
    %2831 = vmatprep.subr.mxu0 0.0
    %2832 = vmatpush1.msra.mxu0 0.0
    %2833 = vmatprep.subr.mxu0 0.0
    %2834 = vmatpush1.msra.mxu0 0.0
    %2835 = vmatprep.subr.mxu0 0.0
    %2836 = vmatpush1.msra.mxu0 0.0
    %2837 = vmatprep.subr.mxu0 0.0
    %2838 = vmatpush1.msra.mxu0 0.0
    %2839 = vmatprep.subr.mxu0 0.0
    %2840 = vmatpush1.msra.mxu0 0.0
    %2841 = vmatprep.subr.mxu0 0.0
    %2842 = vmatpush1.msra.mxu0 0.0
    %2843 = vmatprep.subr.mxu0 0.0
    %2844 = vmatpush1.msra.mxu0 0.0
    %2845 = vmatprep.subr.mxu0 0.0
    %2846 = vmatpush1.msra.mxu0 0.0
    %2847 = vmatprep.subr.mxu0 0.0
    %2848 = vmatpush1.msra.mxu0 0.0
    %2849 = vmatprep.subr.mxu0 0.0
    %2850 = vmatpush1.msra.mxu0 0.0
    %2851 = vmatprep.subr.mxu0 0.0
    %2852 = vmatpush1.msra.mxu0 0.0
    %2853 = vmatprep.subr.mxu0 0.0
    %2854 = vmatpush1.msra.mxu0 0.0
    %2855 = vmatprep.subr.mxu0 0.0
    %2856 = vmatpush1.msra.mxu0 0.0
    %2857 = vmatprep.subr.mxu0 0.0
    %2858 = vmatpush1.msra.mxu0 0.0
    %2859 = vmatprep.mubr.f32.mxu0 0.0
    %2860 = vmatmul.mubr.f32.gmra.mrb[0].mxu0 %v2722
    %v2861 = vpop.f32.mrb[0].mxu0
    %v2862 = vadd.f32 %v933, %v2861
    %v2863 = vpop.f32.mrb[0].mxu0
    %v2864 = vadd.f32 %v937, %v2863
    %2865 = vdwg.mxu0
    %2866 = vmatprep.subr.mxu0 %v2702
    %2867 = vmatpush1.msra.mxu0 %v2701
    %2868 = vmatprep.subr.mxu0 %v2708
    %2869 = vmatpush1.msra.mxu0 %v2707
    %2870 = vmatprep.subr.mxu0 %v2714
    %2871 = vmatpush1.msra.mxu0 %v2713
    %2872 = vmatprep.subr.mxu0 %v2720
    %2873 = vmatpush1.msra.mxu0 %v2719
    %2874 = vmatprep.subr.mxu0 0.0
    %2875 = vmatpush1.msra.mxu0 0.0
    %2876 = vmatprep.subr.mxu0 0.0
    %2877 = vmatpush1.msra.mxu0 0.0
    %2878 = vmatprep.subr.mxu0 0.0
    %2879 = vmatpush1.msra.mxu0 0.0
    %2880 = vmatprep.subr.mxu0 0.0
    %2881 = vmatpush1.msra.mxu0 0.0
    %2882 = vmatprep.subr.mxu0 0.0
    %2883 = vmatpush1.msra.mxu0 0.0
    %2884 = vmatprep.subr.mxu0 0.0
    %2885 = vmatpush1.msra.mxu0 0.0
    %2886 = vmatprep.subr.mxu0 0.0
    %2887 = vmatpush1.msra.mxu0 0.0
    %2888 = vmatprep.subr.mxu0 0.0
    %2889 = vmatpush1.msra.mxu0 0.0
    %2890 = vmatprep.subr.mxu0 0.0
    %2891 = vmatpush1.msra.mxu0 0.0
    %2892 = vmatprep.subr.mxu0 0.0
    %2893 = vmatpush1.msra.mxu0 0.0
    %2894 = vmatprep.subr.mxu0 0.0
    %2895 = vmatpush1.msra.mxu0 0.0
    %2896 = vmatprep.subr.mxu0 0.0
    %2897 = vmatpush1.msra.mxu0 0.0
    %2898 = vmatprep.subr.mxu0 0.0
    %2899 = vmatpush1.msra.mxu0 0.0
    %2900 = vmatprep.subr.mxu0 0.0
    %2901 = vmatpush1.msra.mxu0 0.0
    %2902 = vmatprep.subr.mxu0 0.0
    %2903 = vmatpush1.msra.mxu0 0.0
    %2904 = vmatprep.subr.mxu0 0.0
    %2905 = vmatpush1.msra.mxu0 0.0
    %2906 = vmatprep.subr.mxu0 0.0
    %2907 = vmatpush1.msra.mxu0 0.0
    %2908 = vmatprep.subr.mxu0 0.0
    %2909 = vmatpush1.msra.mxu0 0.0
    %2910 = vmatprep.subr.mxu0 0.0
    %2911 = vmatpush1.msra.mxu0 0.0
    %2912 = vmatprep.subr.mxu0 0.0
    %2913 = vmatpush1.msra.mxu0 0.0
    %2914 = vmatprep.subr.mxu0 0.0
    %2915 = vmatpush1.msra.mxu0 0.0
    %2916 = vmatprep.subr.mxu0 0.0
    %2917 = vmatpush1.msra.mxu0 0.0
    %2918 = vmatprep.subr.mxu0 0.0
    %2919 = vmatpush1.msra.mxu0 0.0
    %2920 = vmatprep.subr.mxu0 0.0
    %2921 = vmatpush1.msra.mxu0 0.0
    %2922 = vmatprep.subr.mxu0 0.0
    %2923 = vmatpush1.msra.mxu0 0.0
    %2924 = vmatprep.subr.mxu0 0.0
    %2925 = vmatpush1.msra.mxu0 0.0
    %2926 = vmatprep.subr.mxu0 0.0
    %2927 = vmatpush1.msra.mxu0 0.0
    %2928 = vmatprep.subr.mxu0 0.0
    %2929 = vmatpush1.msra.mxu0 0.0
    %2930 = vmatprep.mubr.f32.mxu0 0.0
    %2931 = vmatmul.mubr.f32.gmra.mrb[0].mxu0 %v2722
    %v2932 = vpop.f32.mrb[0].mxu0
    %v2933 = vadd.f32 %v941, %v2932
    %v2934 = vpop.f32.mrb[0].mxu0
    %v2935 = vadd.f32 %v945, %v2934
    %2936 = vdwg.mxu0
    %v2937 = vadd.f32 %v2791, %v2602
    %v2938 = vadd.f32 %v2793, %v2604
    %v2939 = vxor.u32 %v2937, 2147483648
    %v2940 = vxor.u32 %v2938, 2147483648
    %v2941 = vmul.f32 %v2939, 1.442695
    %v2942 = vpow.pop %v2941
    %v2943 = vmul.f32 %v2940, 1.442695
    %v2944 = vpow.pop %v2943
    %v2945 = vadd.f32 %v2942, 1.0
    %v2946 = vadd.f32 %v2944, 1.0
    %v2947 = vrcp.pop %v2945
    %v2948 = vmul.f32 1.0, %v2947
    %v2949 = vrcp.pop %v2946
    %v2950 = vmul.f32 1.0, %v2949
    %v2951 = vmul.f32 %v2948, %v2673
    %v2952 = vadd.f32 %v2862, %v2951
    %v2953 = vtanh.pop %v2952
    %v2954 = vsub.f32 1.0, %v2950
    %v2955 = vmul.f32 %v2954, %v2953
    %v2956 = vmul.f32 %v2950, %v2515
    %v2957 = vadd.f32 %v2955, %v2956
    %2958 = vst.msk [vmem:[#allocation3 + $0x20] sm:$0x3] %vm1189, %v2957
    %v2959 = vld [vmem:[#allocation2 + $0x78] sm:$0x3]
    %v2960 = vld [vmem:[#allocation2 + $0x80] sm:$0x3]
    %v2961 = vld [vmem:[#allocation2 + $0x88] sm:$0x3]
    %v2962 = vld [vmem:[#allocation7 + $0x30] sm:$0xff]
    %v2963 = vld [vmem:[#allocation7 + $0x38] sm:$0xff]
    %v2964 = vld [vmem:[#allocation7 + $0x40] sm:$0xff]
    %v2965 = vld [vmem:[#allocation7 + $0x80] sm:$0xff]
    %v2966 = vld [vmem:[#allocation7 + $0x88] sm:$0xff]
    %v2967 = vld [vmem:[#allocation7 + $0x90] sm:$0xff]
    %v2968 = vld [vmem:[#allocation7 + $0xd0] sm:$0xff]
    %v2969 = vld [vmem:[#allocation7 + $0xd8] sm:$0xff]
    %v2970 = vld [vmem:[#allocation7 + $0xe0] sm:$0xff]
    %v2971 = vld [vmem:[#allocation7 + $0x120] sm:$0xff]
    %v2972 = vld [vmem:[#allocation7 + $0x128] sm:$0xff]
    %v2973 = vld [vmem:[#allocation7 + $0x130] sm:$0xff]
    %v2975 = vsel %vm548, %v2957, 0
    %2977 = vmatprep.subr.mxu0 %v2963
    %2978 = vmatpush1.msra.mxu0 %v2962
    %2979 = vmatprep.subr.mxu0 %v2966
    %2980 = vmatpush1.msra.mxu0 %v2965
    %2981 = vmatprep.subr.mxu0 %v2969
    %2982 = vmatpush1.msra.mxu0 %v2968
    %2983 = vmatprep.subr.mxu0 %v2972
    %2984 = vmatpush1.msra.mxu0 %v2971
    %2985 = vmatprep.subr.mxu0 0.0
    %2986 = vmatpush1.msra.mxu0 0.0
    %2987 = vmatprep.subr.mxu0 0.0
    %2988 = vmatpush1.msra.mxu0 0.0
    %2989 = vmatprep.subr.mxu0 0.0
    %2990 = vmatpush1.msra.mxu0 0.0
    %2991 = vmatprep.subr.mxu0 0.0
    %2992 = vmatpush1.msra.mxu0 0.0
    %2993 = vmatprep.subr.mxu0 0.0
    %2994 = vmatpush1.msra.mxu0 0.0
    %2995 = vmatprep.subr.mxu0 0.0
    %2996 = vmatpush1.msra.mxu0 0.0
    %2997 = vmatprep.subr.mxu0 0.0
    %2998 = vmatpush1.msra.mxu0 0.0
    %2999 = vmatprep.subr.mxu0 0.0
    %3000 = vmatpush1.msra.mxu0 0.0
    %3001 = vmatprep.subr.mxu0 0.0
    %3002 = vmatpush1.msra.mxu0 0.0
    %3003 = vmatprep.subr.mxu0 0.0
    %3004 = vmatpush1.msra.mxu0 0.0
    %3005 = vmatprep.subr.mxu0 0.0
    %3006 = vmatpush1.msra.mxu0 0.0
    %3007 = vmatprep.subr.mxu0 0.0
    %3008 = vmatpush1.msra.mxu0 0.0
    %3009 = vmatprep.subr.mxu0 0.0
    %3010 = vmatpush1.msra.mxu0 0.0
    %3011 = vmatprep.subr.mxu0 0.0
    %3012 = vmatpush1.msra.mxu0 0.0
    %3013 = vmatprep.subr.mxu0 0.0
    %3014 = vmatpush1.msra.mxu0 0.0
    %3015 = vmatprep.subr.mxu0 0.0
    %3016 = vmatpush1.msra.mxu0 0.0
    %3017 = vmatprep.subr.mxu0 0.0
    %3018 = vmatpush1.msra.mxu0 0.0
    %3019 = vmatprep.subr.mxu0 0.0
    %3020 = vmatpush1.msra.mxu0 0.0
    %3021 = vmatprep.subr.mxu0 0.0
    %3022 = vmatpush1.msra.mxu0 0.0
    %3023 = vmatprep.subr.mxu0 0.0
    %3024 = vmatpush1.msra.mxu0 0.0
    %3025 = vmatprep.subr.mxu0 0.0
    %3026 = vmatpush1.msra.mxu0 0.0
    %3027 = vmatprep.subr.mxu0 0.0
    %3028 = vmatpush1.msra.mxu0 0.0
    %3029 = vmatprep.subr.mxu0 0.0
    %3030 = vmatpush1.msra.mxu0 0.0
    %3031 = vmatprep.subr.mxu0 0.0
    %3032 = vmatpush1.msra.mxu0 0.0
    %3033 = vmatprep.subr.mxu0 0.0
    %3034 = vmatpush1.msra.mxu0 0.0
    %3035 = vmatprep.subr.mxu0 0.0
    %3036 = vmatpush1.msra.mxu0 0.0
    %3037 = vmatprep.subr.mxu0 0.0
    %3038 = vmatpush1.msra.mxu0 0.0
    %3039 = vmatprep.subr.mxu0 0.0
    %3040 = vmatpush1.msra.mxu0 0.0
    %3041 = vmatprep.mubr.f32.mxu0 0.0
    %3042 = vmatmul.mubr.f32.gmra.mrb[0].mxu0 %v2975
    %v3043 = vpop.f32.mrb[0].mxu0
    %v3044 = vadd.f32 %v720, %v3043
    %v3045 = vpop.f32.mrb[0].mxu0
    %v3046 = vadd.f32 %v724, %v3045
    %3047 = vdwg.mxu0
    %3048 = vmatprep.subr.mxu0 0.0
    %3049 = vmatpush1.msra.mxu0 %v2964
    %3050 = vmatprep.subr.mxu0 0.0
    %3051 = vmatpush1.msra.mxu0 %v2967
    %3052 = vmatprep.subr.mxu0 0.0
    %3053 = vmatpush1.msra.mxu0 %v2970
    %3054 = vmatprep.subr.mxu0 0.0
    %3055 = vmatpush1.msra.mxu0 %v2973
    %3056 = vmatprep.subr.mxu0 0.0
    %3057 = vmatpush1.msra.mxu0 0.0
    %3058 = vmatprep.subr.mxu0 0.0
    %3059 = vmatpush1.msra.mxu0 0.0
    %3060 = vmatprep.subr.mxu0 0.0
    %3061 = vmatpush1.msra.mxu0 0.0
    %3062 = vmatprep.subr.mxu0 0.0
    %3063 = vmatpush1.msra.mxu0 0.0
    %3064 = vmatprep.subr.mxu0 0.0
    %3065 = vmatpush1.msra.mxu0 0.0
    %3066 = vmatprep.subr.mxu0 0.0
    %3067 = vmatpush1.msra.mxu0 0.0
    %3068 = vmatprep.subr.mxu0 0.0
    %3069 = vmatpush1.msra.mxu0 0.0
    %3070 = vmatprep.subr.mxu0 0.0
    %3071 = vmatpush1.msra.mxu0 0.0
    %3072 = vmatprep.subr.mxu0 0.0
    %3073 = vmatpush1.msra.mxu0 0.0
    %3074 = vmatprep.subr.mxu0 0.0
    %3075 = vmatpush1.msra.mxu0 0.0
    %3076 = vmatprep.subr.mxu0 0.0
    %3077 = vmatpush1.msra.mxu0 0.0
    %3078 = vmatprep.subr.mxu0 0.0
    %3079 = vmatpush1.msra.mxu0 0.0
    %3080 = vmatprep.subr.mxu0 0.0
    %3081 = vmatpush1.msra.mxu0 0.0
    %3082 = vmatprep.subr.mxu0 0.0
    %3083 = vmatpush1.msra.mxu0 0.0
    %3084 = vmatprep.subr.mxu0 0.0
    %3085 = vmatpush1.msra.mxu0 0.0
    %3086 = vmatprep.subr.mxu0 0.0
    %3087 = vmatpush1.msra.mxu0 0.0
    %3088 = vmatprep.subr.mxu0 0.0
    %3089 = vmatpush1.msra.mxu0 0.0
    %3090 = vmatprep.subr.mxu0 0.0
    %3091 = vmatpush1.msra.mxu0 0.0
    %3092 = vmatprep.subr.mxu0 0.0
    %3093 = vmatpush1.msra.mxu0 0.0
    %3094 = vmatprep.subr.mxu0 0.0
    %3095 = vmatpush1.msra.mxu0 0.0
    %3096 = vmatprep.subr.mxu0 0.0
    %3097 = vmatpush1.msra.mxu0 0.0
    %3098 = vmatprep.subr.mxu0 0.0
    %3099 = vmatpush1.msra.mxu0 0.0
    %3100 = vmatprep.subr.mxu0 0.0
    %3101 = vmatpush1.msra.mxu0 0.0
    %3102 = vmatprep.subr.mxu0 0.0
    %3103 = vmatpush1.msra.mxu0 0.0
    %3104 = vmatprep.subr.mxu0 0.0
    %3105 = vmatpush1.msra.mxu0 0.0
    %3106 = vmatprep.subr.mxu0 0.0
    %3107 = vmatpush1.msra.mxu0 0.0
    %3108 = vmatprep.subr.mxu0 0.0
    %3109 = vmatpush1.msra.mxu0 0.0
    %3110 = vmatprep.subr.mxu0 0.0
    %3111 = vmatpush1.msra.mxu0 0.0
    %3112 = vmatprep.mubr.f32.mxu0 0.0
    %3113 = vmatmul.mubr.f32.gmra.mrb[0].mxu0 %v2975
    %v3114 = vpop.f32.mrb[0].mxu0
    %v3115 = vadd.f32 %v728, %v3114
    %v3116 = vpop.f32.mrb[0].mxu0
    %3117 = vdwg.mxu0
    %v3118 = vadd.f32 %v2959, %v2864
    %v3119 = vadd.f32 %v2960, %v2933
    %v3120 = vxor.u32 %v3118, 2147483648
    %v3121 = vxor.u32 %v3119, 2147483648
    %v3122 = vmul.f32 %v3120, 1.442695
    %v3123 = vpow.pop %v3122
    %v3124 = vmul.f32 %v3121, 1.442695
    %v3125 = vpow.pop %v3124
    %v3126 = vadd.f32 %v3123, 1.0
    %v3127 = vadd.f32 %v3125, 1.0
    %v3128 = vrcp.pop %v3126
    %v3129 = vmul.f32 1.0, %v3128
    %v3130 = vrcp.pop %v3127
    %v3131 = vmul.f32 1.0, %v3130
    %v3132 = vmul.f32 %v3129, %v2935
    %v3133 = vadd.f32 %v2961, %v3132
    %v3134 = vtanh.pop %v3133
    %v3135 = vsub.f32 1.0, %v3131
    %v3136 = vmul.f32 %v3135, %v3134
    %v3137 = vmul.f32 %v3131, %v2696
    %v3138 = vadd.f32 %v3136, %v3137
    %v3139 = vld [vmem:[#allocation7] sm:$0xff]
    %v3140 = vld [vmem:[#allocation7 + $0x8] sm:$0xff]
    %v3141 = vld [vmem:[#allocation7 + $0x10] sm:$0xff]
    %v3142 = vld [vmem:[#allocation7 + $0x18] sm:$0xff]
    %v3143 = vld [vmem:[#allocation7 + $0x20] sm:$0xff]
    %v3144 = vld [vmem:[#allocation7 + $0x28] sm:$0xff]
    %v3145 = vld [vmem:[#allocation7 + $0x50] sm:$0xff]
    %v3146 = vld [vmem:[#allocation7 + $0x58] sm:$0xff]
    %v3147 = vld [vmem:[#allocation7 + $0x60] sm:$0xff]
    %v3148 = vld [vmem:[#allocation7 + $0x68] sm:$0xff]
    %v3149 = vld [vmem:[#allocation7 + $0x70] sm:$0xff]
    %v3150 = vld [vmem:[#allocation7 + $0x78] sm:$0xff]
    %v3151 = vld [vmem:[#allocation7 + $0xa0] sm:$0xff]
    %v3152 = vld [vmem:[#allocation7 + $0xa8] sm:$0xff]
    %v3153 = vld [vmem:[#allocation7 + $0xb0] sm:$0xff]
    %v3154 = vld [vmem:[#allocation7 + $0xb8] sm:$0xff]
    %v3155 = vld [vmem:[#allocation7 + $0xc0] sm:$0xff]
    %v3156 = vld [vmem:[#allocation7 + $0xc8] sm:$0xff]
    %v3157 = vld [vmem:[#allocation7 + $0xf0] sm:$0xff]
    %v3158 = vld [vmem:[#allocation7 + $0xf8] sm:$0xff]
    %v3159 = vld [vmem:[#allocation7 + $0x100] sm:$0xff]
    %v3160 = vld [vmem:[#allocation7 + $0x108] sm:$0xff]
    %v3161 = vld [vmem:[#allocation7 + $0x110] sm:$0xff]
    %v3162 = vld [vmem:[#allocation7 + $0x118] sm:$0xff]
    %v3164 = vsel %vm548, %v3138, 0
    %3166 = vmatprep.subr.mxu0 %v3140
    %3167 = vmatpush1.msra.mxu0 %v3139
    %3168 = vmatprep.subr.mxu0 %v3146
    %3169 = vmatpush1.msra.mxu0 %v3145
    %3170 = vmatprep.subr.mxu0 %v3152
    %3171 = vmatpush1.msra.mxu0 %v3151
    %3172 = vmatprep.subr.mxu0 %v3158
    %3173 = vmatpush1.msra.mxu0 %v3157
    %3174 = vmatprep.subr.mxu0 0.0
    %3175 = vmatpush1.msra.mxu0 0.0
    %3176 = vmatprep.subr.mxu0 0.0
    %3177 = vmatpush1.msra.mxu0 0.0
    %3178 = vmatprep.subr.mxu0 0.0
    %3179 = vmatpush1.msra.mxu0 0.0
    %3180 = vmatprep.subr.mxu0 0.0
    %3181 = vmatpush1.msra.mxu0 0.0
    %3182 = vmatprep.subr.mxu0 0.0
    %3183 = vmatpush1.msra.mxu0 0.0
    %3184 = vmatprep.subr.mxu0 0.0
    %3185 = vmatpush1.msra.mxu0 0.0
    %3186 = vmatprep.subr.mxu0 0.0
    %3187 = vmatpush1.msra.mxu0 0.0
    %3188 = vmatprep.subr.mxu0 0.0
    %3189 = vmatpush1.msra.mxu0 0.0
    %3190 = vmatprep.subr.mxu0 0.0
    %3191 = vmatpush1.msra.mxu0 0.0
    %3192 = vmatprep.subr.mxu0 0.0
    %3193 = vmatpush1.msra.mxu0 0.0
    %3194 = vmatprep.subr.mxu0 0.0
    %3195 = vmatpush1.msra.mxu0 0.0
    %3196 = vmatprep.subr.mxu0 0.0
    %3197 = vmatpush1.msra.mxu0 0.0
    %3198 = vmatprep.subr.mxu0 0.0
    %3199 = vmatpush1.msra.mxu0 0.0
    %3200 = vmatprep.subr.mxu0 0.0
    %3201 = vmatpush1.msra.mxu0 0.0
    %3202 = vmatprep.subr.mxu0 0.0
    %3203 = vmatpush1.msra.mxu0 0.0
    %3204 = vmatprep.subr.mxu0 0.0
    %3205 = vmatpush1.msra.mxu0 0.0
    %3206 = vmatprep.subr.mxu0 0.0
    %3207 = vmatpush1.msra.mxu0 0.0
    %3208 = vmatprep.subr.mxu0 0.0
    %3209 = vmatpush1.msra.mxu0 0.0
    %3210 = vmatprep.subr.mxu0 0.0
    %3211 = vmatpush1.msra.mxu0 0.0
    %3212 = vmatprep.subr.mxu0 0.0
    %3213 = vmatpush1.msra.mxu0 0.0
    %3214 = vmatprep.subr.mxu0 0.0
    %3215 = vmatpush1.msra.mxu0 0.0
    %3216 = vmatprep.subr.mxu0 0.0
    %3217 = vmatpush1.msra.mxu0 0.0
    %3218 = vmatprep.subr.mxu0 0.0
    %3219 = vmatpush1.msra.mxu0 0.0
    %3220 = vmatprep.subr.mxu0 0.0
    %3221 = vmatpush1.msra.mxu0 0.0
    %3222 = vmatprep.subr.mxu0 0.0
    %3223 = vmatpush1.msra.mxu0 0.0
    %3224 = vmatprep.subr.mxu0 0.0
    %3225 = vmatpush1.msra.mxu0 0.0
    %3226 = vmatprep.subr.mxu0 0.0
    %3227 = vmatpush1.msra.mxu0 0.0
    %3228 = vmatprep.subr.mxu0 0.0
    %3229 = vmatpush1.msra.mxu0 0.0
    %3230 = vmatprep.mubr.f32.mxu0 0.0
    %3231 = vmatmul.mubr.f32.gmra.mrb[0].mxu0 %v3164
    %v3232 = vpop.f32.mrb[0].mxu0
    %v3233 = vadd.f32 %v925, %v3232
    %v3234 = vpop.f32.mrb[0].mxu0
    %v3235 = vadd.f32 %v929, %v3234
    %3236 = vdwg.mxu0
    %3237 = vmatprep.subr.mxu0 %v3142
    %3238 = vmatpush1.msra.mxu0 %v3141
    %3239 = vmatprep.subr.mxu0 %v3148
    %3240 = vmatpush1.msra.mxu0 %v3147
    %3241 = vmatprep.subr.mxu0 %v3154
    %3242 = vmatpush1.msra.mxu0 %v3153
    %3243 = vmatprep.subr.mxu0 %v3160
    %3244 = vmatpush1.msra.mxu0 %v3159
    %3245 = vmatprep.subr.mxu0 0.0
    %3246 = vmatpush1.msra.mxu0 0.0
    %3247 = vmatprep.subr.mxu0 0.0
    %3248 = vmatpush1.msra.mxu0 0.0
    %3249 = vmatprep.subr.mxu0 0.0
    %3250 = vmatpush1.msra.mxu0 0.0
    %3251 = vmatprep.subr.mxu0 0.0
    %3252 = vmatpush1.msra.mxu0 0.0
    %3253 = vmatprep.subr.mxu0 0.0
    %3254 = vmatpush1.msra.mxu0 0.0
    %3255 = vmatprep.subr.mxu0 0.0
    %3256 = vmatpush1.msra.mxu0 0.0
    %3257 = vmatprep.subr.mxu0 0.0
    %3258 = vmatpush1.msra.mxu0 0.0
    %3259 = vmatprep.subr.mxu0 0.0
    %3260 = vmatpush1.msra.mxu0 0.0
    %3261 = vmatprep.subr.mxu0 0.0
    %3262 = vmatpush1.msra.mxu0 0.0
    %3263 = vmatprep.subr.mxu0 0.0
    %3264 = vmatpush1.msra.mxu0 0.0
    %3265 = vmatprep.subr.mxu0 0.0
    %3266 = vmatpush1.msra.mxu0 0.0
    %3267 = vmatprep.subr.mxu0 0.0
    %3268 = vmatpush1.msra.mxu0 0.0
    %3269 = vmatprep.subr.mxu0 0.0
    %3270 = vmatpush1.msra.mxu0 0.0
    %3271 = vmatprep.subr.mxu0 0.0
    %3272 = vmatpush1.msra.mxu0 0.0
    %3273 = vmatprep.subr.mxu0 0.0
    %3274 = vmatpush1.msra.mxu0 0.0
    %3275 = vmatprep.subr.mxu0 0.0
    %3276 = vmatpush1.msra.mxu0 0.0
    %3277 = vmatprep.subr.mxu0 0.0
    %3278 = vmatpush1.msra.mxu0 0.0
    %3279 = vmatprep.subr.mxu0 0.0
    %3280 = vmatpush1.msra.mxu0 0.0
    %3281 = vmatprep.subr.mxu0 0.0
    %3282 = vmatpush1.msra.mxu0 0.0
    %3283 = vmatprep.subr.mxu0 0.0
    %3284 = vmatpush1.msra.mxu0 0.0
    %3285 = vmatprep.subr.mxu0 0.0
    %3286 = vmatpush1.msra.mxu0 0.0
    %3287 = vmatprep.subr.mxu0 0.0
    %3288 = vmatpush1.msra.mxu0 0.0
    %3289 = vmatprep.subr.mxu0 0.0
    %3290 = vmatpush1.msra.mxu0 0.0
    %3291 = vmatprep.subr.mxu0 0.0
    %3292 = vmatpush1.msra.mxu0 0.0
    %3293 = vmatprep.subr.mxu0 0.0
    %3294 = vmatpush1.msra.mxu0 0.0
    %3295 = vmatprep.subr.mxu0 0.0
    %3296 = vmatpush1.msra.mxu0 0.0
    %3297 = vmatprep.subr.mxu0 0.0
    %3298 = vmatpush1.msra.mxu0 0.0
    %3299 = vmatprep.subr.mxu0 0.0
    %3300 = vmatpush1.msra.mxu0 0.0
    %3301 = vmatprep.mubr.f32.mxu0 0.0
    %3302 = vmatmul.mubr.f32.gmra.mrb[0].mxu0 %v3164
    %v3303 = vpop.f32.mrb[0].mxu0
    %v3304 = vadd.f32 %v933, %v3303
    %v3305 = vpop.f32.mrb[0].mxu0
    %v3306 = vadd.f32 %v937, %v3305
    %3307 = vdwg.mxu0
    %3308 = vmatprep.subr.mxu0 %v3144
    %3309 = vmatpush1.msra.mxu0 %v3143
    %3310 = vmatprep.subr.mxu0 %v3150
    %3311 = vmatpush1.msra.mxu0 %v3149
    %3312 = vmatprep.subr.mxu0 %v3156
    %3313 = vmatpush1.msra.mxu0 %v3155
    %3314 = vmatprep.subr.mxu0 %v3162
    %3315 = vmatpush1.msra.mxu0 %v3161
    %3316 = vmatprep.subr.mxu0 0.0
    %3317 = vmatpush1.msra.mxu0 0.0
    %3318 = vmatprep.subr.mxu0 0.0
    %3319 = vmatpush1.msra.mxu0 0.0
    %3320 = vmatprep.subr.mxu0 0.0
    %3321 = vmatpush1.msra.mxu0 0.0
    %3322 = vmatprep.subr.mxu0 0.0
    %3323 = vmatpush1.msra.mxu0 0.0
    %3324 = vmatprep.subr.mxu0 0.0
    %3325 = vmatpush1.msra.mxu0 0.0
    %3326 = vmatprep.subr.mxu0 0.0
    %3327 = vmatpush1.msra.mxu0 0.0
    %3328 = vmatprep.subr.mxu0 0.0
    %3329 = vmatpush1.msra.mxu0 0.0
    %3330 = vmatprep.subr.mxu0 0.0
    %3331 = vmatpush1.msra.mxu0 0.0
    %3332 = vmatprep.subr.mxu0 0.0
    %3333 = vmatpush1.msra.mxu0 0.0
    %3334 = vmatprep.subr.mxu0 0.0
    %3335 = vmatpush1.msra.mxu0 0.0
    %3336 = vmatprep.subr.mxu0 0.0
    %3337 = vmatpush1.msra.mxu0 0.0
    %3338 = vmatprep.subr.mxu0 0.0
    %3339 = vmatpush1.msra.mxu0 0.0
    %3340 = vmatprep.subr.mxu0 0.0
    %3341 = vmatpush1.msra.mxu0 0.0
    %3342 = vmatprep.subr.mxu0 0.0
    %3343 = vmatpush1.msra.mxu0 0.0
    %3344 = vmatprep.subr.mxu0 0.0
    %3345 = vmatpush1.msra.mxu0 0.0
    %3346 = vmatprep.subr.mxu0 0.0
    %3347 = vmatpush1.msra.mxu0 0.0
    %3348 = vmatprep.subr.mxu0 0.0
    %3349 = vmatpush1.msra.mxu0 0.0
    %3350 = vmatprep.subr.mxu0 0.0
    %3351 = vmatpush1.msra.mxu0 0.0
    %3352 = vmatprep.subr.mxu0 0.0
    %3353 = vmatpush1.msra.mxu0 0.0
    %3354 = vmatprep.subr.mxu0 0.0
    %3355 = vmatpush1.msra.mxu0 0.0
    %3356 = vmatprep.subr.mxu0 0.0
    %3357 = vmatpush1.msra.mxu0 0.0
    %3358 = vmatprep.subr.mxu0 0.0
    %3359 = vmatpush1.msra.mxu0 0.0
    %3360 = vmatprep.subr.mxu0 0.0
    %3361 = vmatpush1.msra.mxu0 0.0
    %3362 = vmatprep.subr.mxu0 0.0
    %3363 = vmatpush1.msra.mxu0 0.0
    %3364 = vmatprep.subr.mxu0 0.0
    %3365 = vmatpush1.msra.mxu0 0.0
    %3366 = vmatprep.subr.mxu0 0.0
    %3367 = vmatpush1.msra.mxu0 0.0
    %3368 = vmatprep.subr.mxu0 0.0
    %3369 = vmatpush1.msra.mxu0 0.0
    %3370 = vmatprep.subr.mxu0 0.0
    %3371 = vmatpush1.msra.mxu0 0.0
    %3372 = vmatprep.mubr.f32.mxu0 0.0
    %3373 = vmatmul.mubr.f32.gmra.mrb[0].mxu0 %v3164
    %v3374 = vpop.f32.mrb[0].mxu0
    %v3375 = vadd.f32 %v941, %v3374
    %v3376 = vpop.f32.mrb[0].mxu0
    %v3377 = vadd.f32 %v945, %v3376
    %3378 = vdwg.mxu0
    %v3379 = vadd.f32 %v3233, %v3044
    %v3380 = vadd.f32 %v3235, %v3046
    %v3381 = vxor.u32 %v3379, 2147483648
    %v3382 = vxor.u32 %v3380, 2147483648
    %v3383 = vmul.f32 %v3381, 1.442695
    %v3384 = vpow.pop %v3383
    %v3385 = vmul.f32 %v3382, 1.442695
    %v3386 = vpow.pop %v3385
    %v3387 = vadd.f32 %v3384, 1.0
    %v3388 = vadd.f32 %v3386, 1.0
    %v3389 = vrcp.pop %v3387
    %v3390 = vmul.f32 1.0, %v3389
    %v3391 = vrcp.pop %v3388
    %v3392 = vmul.f32 1.0, %v3391
    %v3393 = vmul.f32 %v3390, %v3115
    %v3394 = vadd.f32 %v3304, %v3393
    %v3395 = vtanh.pop %v3394
    %v3396 = vsub.f32 1.0, %v3392
    %v3397 = vmul.f32 %v3396, %v3395
    %v3398 = vmul.f32 %v3392, %v2957
    %v3399 = vadd.f32 %v3397, %v3398
    %3400 = vst.msk [vmem:[#allocation3 + $0x28] sm:$0x3] %vm1189, %v3399
    %v3401 = vld [vmem:[#allocation2 + $0x90] sm:$0x3]
    %v3402 = vld [vmem:[#allocation2 + $0x98] sm:$0x3]
    %v3403 = vld [vmem:[#allocation2 + $0xa0] sm:$0x3]
    %v3404 = vld [vmem:[#allocation7 + $0x30] sm:$0xff]
    %v3405 = vld [vmem:[#allocation7 + $0x38] sm:$0xff]
    %v3406 = vld [vmem:[#allocation7 + $0x40] sm:$0xff]
    %v3407 = vld [vmem:[#allocation7 + $0x80] sm:$0xff]
    %v3408 = vld [vmem:[#allocation7 + $0x88] sm:$0xff]
    %v3409 = vld [vmem:[#allocation7 + $0x90] sm:$0xff]
    %v3410 = vld [vmem:[#allocation7 + $0xd0] sm:$0xff]
    %v3411 = vld [vmem:[#allocation7 + $0xd8] sm:$0xff]
    %v3412 = vld [vmem:[#allocation7 + $0xe0] sm:$0xff]
    %v3413 = vld [vmem:[#allocation7 + $0x120] sm:$0xff]
    %v3414 = vld [vmem:[#allocation7 + $0x128] sm:$0xff]
    %v3415 = vld [vmem:[#allocation7 + $0x130] sm:$0xff]
    %v3417 = vsel %vm548, %v3399, 0
    %3419 = vmatprep.subr.mxu0 %v3405
    %3420 = vmatpush1.msra.mxu0 %v3404
    %3421 = vmatprep.subr.mxu0 %v3408
    %3422 = vmatpush1.msra.mxu0 %v3407
    %3423 = vmatprep.subr.mxu0 %v3411
    %3424 = vmatpush1.msra.mxu0 %v3410
    %3425 = vmatprep.subr.mxu0 %v3414
    %3426 = vmatpush1.msra.mxu0 %v3413
    %3427 = vmatprep.subr.mxu0 0.0
    %3428 = vmatpush1.msra.mxu0 0.0
    %3429 = vmatprep.subr.mxu0 0.0
    %3430 = vmatpush1.msra.mxu0 0.0
    %3431 = vmatprep.subr.mxu0 0.0
    %3432 = vmatpush1.msra.mxu0 0.0
    %3433 = vmatprep.subr.mxu0 0.0
    %3434 = vmatpush1.msra.mxu0 0.0
    %3435 = vmatprep.subr.mxu0 0.0
    %3436 = vmatpush1.msra.mxu0 0.0
    %3437 = vmatprep.subr.mxu0 0.0
    %3438 = vmatpush1.msra.mxu0 0.0
    %3439 = vmatprep.subr.mxu0 0.0
    %3440 = vmatpush1.msra.mxu0 0.0
    %3441 = vmatprep.subr.mxu0 0.0
    %3442 = vmatpush1.msra.mxu0 0.0
    %3443 = vmatprep.subr.mxu0 0.0
    %3444 = vmatpush1.msra.mxu0 0.0
    %3445 = vmatprep.subr.mxu0 0.0
    %3446 = vmatpush1.msra.mxu0 0.0
    %3447 = vmatprep.subr.mxu0 0.0
    %3448 = vmatpush1.msra.mxu0 0.0
    %3449 = vmatprep.subr.mxu0 0.0
    %3450 = vmatpush1.msra.mxu0 0.0
    %3451 = vmatprep.subr.mxu0 0.0
    %3452 = vmatpush1.msra.mxu0 0.0
    %3453 = vmatprep.subr.mxu0 0.0
    %3454 = vmatpush1.msra.mxu0 0.0
    %3455 = vmatprep.subr.mxu0 0.0
    %3456 = vmatpush1.msra.mxu0 0.0
    %3457 = vmatprep.subr.mxu0 0.0
    %3458 = vmatpush1.msra.mxu0 0.0
    %3459 = vmatprep.subr.mxu0 0.0
    %3460 = vmatpush1.msra.mxu0 0.0
    %3461 = vmatprep.subr.mxu0 0.0
    %3462 = vmatpush1.msra.mxu0 0.0
    %3463 = vmatprep.subr.mxu0 0.0
    %3464 = vmatpush1.msra.mxu0 0.0
    %3465 = vmatprep.subr.mxu0 0.0
    %3466 = vmatpush1.msra.mxu0 0.0
    %3467 = vmatprep.subr.mxu0 0.0
    %3468 = vmatpush1.msra.mxu0 0.0
    %3469 = vmatprep.subr.mxu0 0.0
    %3470 = vmatpush1.msra.mxu0 0.0
    %3471 = vmatprep.subr.mxu0 0.0
    %3472 = vmatpush1.msra.mxu0 0.0
    %3473 = vmatprep.subr.mxu0 0.0
    %3474 = vmatpush1.msra.mxu0 0.0
    %3475 = vmatprep.subr.mxu0 0.0
    %3476 = vmatpush1.msra.mxu0 0.0
    %3477 = vmatprep.subr.mxu0 0.0
    %3478 = vmatpush1.msra.mxu0 0.0
    %3479 = vmatprep.subr.mxu0 0.0
    %3480 = vmatpush1.msra.mxu0 0.0
    %3481 = vmatprep.subr.mxu0 0.0
    %3482 = vmatpush1.msra.mxu0 0.0
    %3483 = vmatprep.mubr.f32.mxu0 0.0
    %3484 = vmatmul.mubr.f32.gmra.mrb[0].mxu0 %v3417
    %v3485 = vpop.f32.mrb[0].mxu0
    %v3486 = vadd.f32 %v720, %v3485
    %v3487 = vpop.f32.mrb[0].mxu0
    %v3488 = vadd.f32 %v724, %v3487
    %3489 = vdwg.mxu0
    %3490 = vmatprep.subr.mxu0 0.0
    %3491 = vmatpush1.msra.mxu0 %v3406
    %3492 = vmatprep.subr.mxu0 0.0
    %3493 = vmatpush1.msra.mxu0 %v3409
    %3494 = vmatprep.subr.mxu0 0.0
    %3495 = vmatpush1.msra.mxu0 %v3412
    %3496 = vmatprep.subr.mxu0 0.0
    %3497 = vmatpush1.msra.mxu0 %v3415
    %3498 = vmatprep.subr.mxu0 0.0
    %3499 = vmatpush1.msra.mxu0 0.0
    %3500 = vmatprep.subr.mxu0 0.0
    %3501 = vmatpush1.msra.mxu0 0.0
    %3502 = vmatprep.subr.mxu0 0.0
    %3503 = vmatpush1.msra.mxu0 0.0
    %3504 = vmatprep.subr.mxu0 0.0
    %3505 = vmatpush1.msra.mxu0 0.0
    %3506 = vmatprep.subr.mxu0 0.0
    %3507 = vmatpush1.msra.mxu0 0.0
    %3508 = vmatprep.subr.mxu0 0.0
    %3509 = vmatpush1.msra.mxu0 0.0
    %3510 = vmatprep.subr.mxu0 0.0
    %3511 = vmatpush1.msra.mxu0 0.0
    %3512 = vmatprep.subr.mxu0 0.0
    %3513 = vmatpush1.msra.mxu0 0.0
    %3514 = vmatprep.subr.mxu0 0.0
    %3515 = vmatpush1.msra.mxu0 0.0
    %3516 = vmatprep.subr.mxu0 0.0
    %3517 = vmatpush1.msra.mxu0 0.0
    %3518 = vmatprep.subr.mxu0 0.0
    %3519 = vmatpush1.msra.mxu0 0.0
    %3520 = vmatprep.subr.mxu0 0.0
    %3521 = vmatpush1.msra.mxu0 0.0
    %3522 = vmatprep.subr.mxu0 0.0
    %3523 = vmatpush1.msra.mxu0 0.0
    %3524 = vmatprep.subr.mxu0 0.0
    %3525 = vmatpush1.msra.mxu0 0.0
    %3526 = vmatprep.subr.mxu0 0.0
    %3527 = vmatpush1.msra.mxu0 0.0
    %3528 = vmatprep.subr.mxu0 0.0
    %3529 = vmatpush1.msra.mxu0 0.0
    %3530 = vmatprep.subr.mxu0 0.0
    %3531 = vmatpush1.msra.mxu0 0.0
    %3532 = vmatprep.subr.mxu0 0.0
    %3533 = vmatpush1.msra.mxu0 0.0
    %3534 = vmatprep.subr.mxu0 0.0
    %3535 = vmatpush1.msra.mxu0 0.0
    %3536 = vmatprep.subr.mxu0 0.0
    %3537 = vmatpush1.msra.mxu0 0.0
    %3538 = vmatprep.subr.mxu0 0.0
    %3539 = vmatpush1.msra.mxu0 0.0
    %3540 = vmatprep.subr.mxu0 0.0
    %3541 = vmatpush1.msra.mxu0 0.0
    %3542 = vmatprep.subr.mxu0 0.0
    %3543 = vmatpush1.msra.mxu0 0.0
    %3544 = vmatprep.subr.mxu0 0.0
    %3545 = vmatpush1.msra.mxu0 0.0
    %3546 = vmatprep.subr.mxu0 0.0
    %3547 = vmatpush1.msra.mxu0 0.0
    %3548 = vmatprep.subr.mxu0 0.0
    %3549 = vmatpush1.msra.mxu0 0.0
    %3550 = vmatprep.subr.mxu0 0.0
    %3551 = vmatpush1.msra.mxu0 0.0
    %3552 = vmatprep.subr.mxu0 0.0
    %3553 = vmatpush1.msra.mxu0 0.0
    %3554 = vmatprep.mubr.f32.mxu0 0.0
    %3555 = vmatmul.mubr.f32.gmra.mrb[0].mxu0 %v3417
    %v3556 = vpop.f32.mrb[0].mxu0
    %v3557 = vadd.f32 %v728, %v3556
    %v3558 = vpop.f32.mrb[0].mxu0
    %3559 = vdwg.mxu0
    %v3560 = vadd.f32 %v3401, %v3306
    %v3561 = vadd.f32 %v3402, %v3375
    %v3562 = vxor.u32 %v3560, 2147483648
    %v3563 = vxor.u32 %v3561, 2147483648
    %v3564 = vmul.f32 %v3562, 1.442695
    %v3565 = vpow.pop %v3564
    %v3566 = vmul.f32 %v3563, 1.442695
    %v3567 = vpow.pop %v3566
    %v3568 = vadd.f32 %v3565, 1.0
    %v3569 = vadd.f32 %v3567, 1.0
    %v3570 = vrcp.pop %v3568
    %v3571 = vmul.f32 1.0, %v3570
    %v3572 = vrcp.pop %v3569
    %v3573 = vmul.f32 1.0, %v3572
    %v3574 = vmul.f32 %v3571, %v3377
    %v3575 = vadd.f32 %v3403, %v3574
    %v3576 = vtanh.pop %v3575
    %v3577 = vsub.f32 1.0, %v3573
    %v3578 = vmul.f32 %v3577, %v3576
    %v3579 = vmul.f32 %v3573, %v3138
    %v3580 = vadd.f32 %v3578, %v3579
    %v3581 = vld [vmem:[#allocation7] sm:$0xff]
    %v3582 = vld [vmem:[#allocation7 + $0x8] sm:$0xff]
    %v3583 = vld [vmem:[#allocation7 + $0x10] sm:$0xff]
    %v3584 = vld [vmem:[#allocation7 + $0x18] sm:$0xff]
    %v3585 = vld [vmem:[#allocation7 + $0x20] sm:$0xff]
    %v3586 = vld [vmem:[#allocation7 + $0x28] sm:$0xff]
    %v3587 = vld [vmem:[#allocation7 + $0x50] sm:$0xff]
    %v3588 = vld [vmem:[#allocation7 + $0x58] sm:$0xff]
    %v3589 = vld [vmem:[#allocation7 + $0x60] sm:$0xff]
    %v3590 = vld [vmem:[#allocation7 + $0x68] sm:$0xff]
    %v3591 = vld [vmem:[#allocation7 + $0x70] sm:$0xff]
    %v3592 = vld [vmem:[#allocation7 + $0x78] sm:$0xff]
    %v3593 = vld [vmem:[#allocation7 + $0xa0] sm:$0xff]
    %v3594 = vld [vmem:[#allocation7 + $0xa8] sm:$0xff]
    %v3595 = vld [vmem:[#allocation7 + $0xb0] sm:$0xff]
    %v3596 = vld [vmem:[#allocation7 + $0xb8] sm:$0xff]
    %v3597 = vld [vmem:[#allocation7 + $0xc0] sm:$0xff]
    %v3598 = vld [vmem:[#allocation7 + $0xc8] sm:$0xff]
    %v3599 = vld [vmem:[#allocation7 + $0xf0] sm:$0xff]
    %v3600 = vld [vmem:[#allocation7 + $0xf8] sm:$0xff]
    %v3601 = vld [vmem:[#allocation7 + $0x100] sm:$0xff]
    %v3602 = vld [vmem:[#allocation7 + $0x108] sm:$0xff]
    %v3603 = vld [vmem:[#allocation7 + $0x110] sm:$0xff]
    %v3604 = vld [vmem:[#allocation7 + $0x118] sm:$0xff]
    %v3606 = vsel %vm548, %v3580, 0
    %3608 = vmatprep.subr.mxu0 %v3582
    %3609 = vmatpush1.msra.mxu0 %v3581
    %3610 = vmatprep.subr.mxu0 %v3588
    %3611 = vmatpush1.msra.mxu0 %v3587
    %3612 = vmatprep.subr.mxu0 %v3594
    %3613 = vmatpush1.msra.mxu0 %v3593
    %3614 = vmatprep.subr.mxu0 %v3600
    %3615 = vmatpush1.msra.mxu0 %v3599
    %3616 = vmatprep.subr.mxu0 0.0
    %3617 = vmatpush1.msra.mxu0 0.0
    %3618 = vmatprep.subr.mxu0 0.0
    %3619 = vmatpush1.msra.mxu0 0.0
    %3620 = vmatprep.subr.mxu0 0.0
    %3621 = vmatpush1.msra.mxu0 0.0
    %3622 = vmatprep.subr.mxu0 0.0
    %3623 = vmatpush1.msra.mxu0 0.0
    %3624 = vmatprep.subr.mxu0 0.0
    %3625 = vmatpush1.msra.mxu0 0.0
    %3626 = vmatprep.subr.mxu0 0.0
    %3627 = vmatpush1.msra.mxu0 0.0
    %3628 = vmatprep.subr.mxu0 0.0
    %3629 = vmatpush1.msra.mxu0 0.0
    %3630 = vmatprep.subr.mxu0 0.0
    %3631 = vmatpush1.msra.mxu0 0.0
    %3632 = vmatprep.subr.mxu0 0.0
    %3633 = vmatpush1.msra.mxu0 0.0
    %3634 = vmatprep.subr.mxu0 0.0
    %3635 = vmatpush1.msra.mxu0 0.0
    %3636 = vmatprep.subr.mxu0 0.0
    %3637 = vmatpush1.msra.mxu0 0.0
    %3638 = vmatprep.subr.mxu0 0.0
    %3639 = vmatpush1.msra.mxu0 0.0
    %3640 = vmatprep.subr.mxu0 0.0
    %3641 = vmatpush1.msra.mxu0 0.0
    %3642 = vmatprep.subr.mxu0 0.0
    %3643 = vmatpush1.msra.mxu0 0.0
    %3644 = vmatprep.subr.mxu0 0.0
    %3645 = vmatpush1.msra.mxu0 0.0
    %3646 = vmatprep.subr.mxu0 0.0
    %3647 = vmatpush1.msra.mxu0 0.0
    %3648 = vmatprep.subr.mxu0 0.0
    %3649 = vmatpush1.msra.mxu0 0.0
    %3650 = vmatprep.subr.mxu0 0.0
    %3651 = vmatpush1.msra.mxu0 0.0
    %3652 = vmatprep.subr.mxu0 0.0
    %3653 = vmatpush1.msra.mxu0 0.0
    %3654 = vmatprep.subr.mxu0 0.0
    %3655 = vmatpush1.msra.mxu0 0.0
    %3656 = vmatprep.subr.mxu0 0.0
    %3657 = vmatpush1.msra.mxu0 0.0
    %3658 = vmatprep.subr.mxu0 0.0
    %3659 = vmatpush1.msra.mxu0 0.0
    %3660 = vmatprep.subr.mxu0 0.0
    %3661 = vmatpush1.msra.mxu0 0.0
    %3662 = vmatprep.subr.mxu0 0.0
    %3663 = vmatpush1.msra.mxu0 0.0
    %3664 = vmatprep.subr.mxu0 0.0
    %3665 = vmatpush1.msra.mxu0 0.0
    %3666 = vmatprep.subr.mxu0 0.0
    %3667 = vmatpush1.msra.mxu0 0.0
    %3668 = vmatprep.subr.mxu0 0.0
    %3669 = vmatpush1.msra.mxu0 0.0
    %3670 = vmatprep.subr.mxu0 0.0
    %3671 = vmatpush1.msra.mxu0 0.0
    %3672 = vmatprep.mubr.f32.mxu0 0.0
    %3673 = vmatmul.mubr.f32.gmra.mrb[0].mxu0 %v3606
    %v3674 = vpop.f32.mrb[0].mxu0
    %v3675 = vadd.f32 %v925, %v3674
    %v3676 = vpop.f32.mrb[0].mxu0
    %v3677 = vadd.f32 %v929, %v3676
    %3678 = vdwg.mxu0
    %3679 = vmatprep.subr.mxu0 %v3584
    %3680 = vmatpush1.msra.mxu0 %v3583
    %3681 = vmatprep.subr.mxu0 %v3590
    %3682 = vmatpush1.msra.mxu0 %v3589
    %3683 = vmatprep.subr.mxu0 %v3596
    %3684 = vmatpush1.msra.mxu0 %v3595
    %3685 = vmatprep.subr.mxu0 %v3602
    %3686 = vmatpush1.msra.mxu0 %v3601
    %3687 = vmatprep.subr.mxu0 0.0
    %3688 = vmatpush1.msra.mxu0 0.0
    %3689 = vmatprep.subr.mxu0 0.0
    %3690 = vmatpush1.msra.mxu0 0.0
    %3691 = vmatprep.subr.mxu0 0.0
    %3692 = vmatpush1.msra.mxu0 0.0
    %3693 = vmatprep.subr.mxu0 0.0
    %3694 = vmatpush1.msra.mxu0 0.0
    %3695 = vmatprep.subr.mxu0 0.0
    %3696 = vmatpush1.msra.mxu0 0.0
    %3697 = vmatprep.subr.mxu0 0.0
    %3698 = vmatpush1.msra.mxu0 0.0
    %3699 = vmatprep.subr.mxu0 0.0
    %3700 = vmatpush1.msra.mxu0 0.0
    %3701 = vmatprep.subr.mxu0 0.0
    %3702 = vmatpush1.msra.mxu0 0.0
    %3703 = vmatprep.subr.mxu0 0.0
    %3704 = vmatpush1.msra.mxu0 0.0
    %3705 = vmatprep.subr.mxu0 0.0
    %3706 = vmatpush1.msra.mxu0 0.0
    %3707 = vmatprep.subr.mxu0 0.0
    %3708 = vmatpush1.msra.mxu0 0.0
    %3709 = vmatprep.subr.mxu0 0.0
    %3710 = vmatpush1.msra.mxu0 0.0
    %3711 = vmatprep.subr.mxu0 0.0
    %3712 = vmatpush1.msra.mxu0 0.0
    %3713 = vmatprep.subr.mxu0 0.0
    %3714 = vmatpush1.msra.mxu0 0.0
    %3715 = vmatprep.subr.mxu0 0.0
    %3716 = vmatpush1.msra.mxu0 0.0
    %3717 = vmatprep.subr.mxu0 0.0
    %3718 = vmatpush1.msra.mxu0 0.0
    %3719 = vmatprep.subr.mxu0 0.0
    %3720 = vmatpush1.msra.mxu0 0.0
    %3721 = vmatprep.subr.mxu0 0.0
    %3722 = vmatpush1.msra.mxu0 0.0
    %3723 = vmatprep.subr.mxu0 0.0
    %3724 = vmatpush1.msra.mxu0 0.0
    %3725 = vmatprep.subr.mxu0 0.0
    %3726 = vmatpush1.msra.mxu0 0.0
    %3727 = vmatprep.subr.mxu0 0.0
    %3728 = vmatpush1.msra.mxu0 0.0
    %3729 = vmatprep.subr.mxu0 0.0
    %3730 = vmatpush1.msra.mxu0 0.0
    %3731 = vmatprep.subr.mxu0 0.0
    %3732 = vmatpush1.msra.mxu0 0.0
    %3733 = vmatprep.subr.mxu0 0.0
    %3734 = vmatpush1.msra.mxu0 0.0
    %3735 = vmatprep.subr.mxu0 0.0
    %3736 = vmatpush1.msra.mxu0 0.0
    %3737 = vmatprep.subr.mxu0 0.0
    %3738 = vmatpush1.msra.mxu0 0.0
    %3739 = vmatprep.subr.mxu0 0.0
    %3740 = vmatpush1.msra.mxu0 0.0
    %3741 = vmatprep.subr.mxu0 0.0
    %3742 = vmatpush1.msra.mxu0 0.0
    %3743 = vmatprep.mubr.f32.mxu0 0.0
    %3744 = vmatmul.mubr.f32.gmra.mrb[0].mxu0 %v3606
    %v3745 = vpop.f32.mrb[0].mxu0
    %v3746 = vadd.f32 %v933, %v3745
    %v3747 = vpop.f32.mrb[0].mxu0
    %v3748 = vadd.f32 %v937, %v3747
    %3749 = vdwg.mxu0
    %3750 = vmatprep.subr.mxu0 %v3586
    %3751 = vmatpush1.msra.mxu0 %v3585
    %3752 = vmatprep.subr.mxu0 %v3592
    %3753 = vmatpush1.msra.mxu0 %v3591
    %3754 = vmatprep.subr.mxu0 %v3598
    %3755 = vmatpush1.msra.mxu0 %v3597
    %3756 = vmatprep.subr.mxu0 %v3604
    %3757 = vmatpush1.msra.mxu0 %v3603
    %3758 = vmatprep.subr.mxu0 0.0
    %3759 = vmatpush1.msra.mxu0 0.0
    %3760 = vmatprep.subr.mxu0 0.0
    %3761 = vmatpush1.msra.mxu0 0.0
    %3762 = vmatprep.subr.mxu0 0.0
    %3763 = vmatpush1.msra.mxu0 0.0
    %3764 = vmatprep.subr.mxu0 0.0
    %3765 = vmatpush1.msra.mxu0 0.0
    %3766 = vmatprep.subr.mxu0 0.0
    %3767 = vmatpush1.msra.mxu0 0.0
    %3768 = vmatprep.subr.mxu0 0.0
    %3769 = vmatpush1.msra.mxu0 0.0
    %3770 = vmatprep.subr.mxu0 0.0
    %3771 = vmatpush1.msra.mxu0 0.0
    %3772 = vmatprep.subr.mxu0 0.0
    %3773 = vmatpush1.msra.mxu0 0.0
    %3774 = vmatprep.subr.mxu0 0.0
    %3775 = vmatpush1.msra.mxu0 0.0
    %3776 = vmatprep.subr.mxu0 0.0
    %3777 = vmatpush1.msra.mxu0 0.0
    %3778 = vmatprep.subr.mxu0 0.0
    %3779 = vmatpush1.msra.mxu0 0.0
    %3780 = vmatprep.subr.mxu0 0.0
    %3781 = vmatpush1.msra.mxu0 0.0
    %3782 = vmatprep.subr.mxu0 0.0
    %3783 = vmatpush1.msra.mxu0 0.0
    %3784 = vmatprep.subr.mxu0 0.0
    %3785 = vmatpush1.msra.mxu0 0.0
    %3786 = vmatprep.subr.mxu0 0.0
    %3787 = vmatpush1.msra.mxu0 0.0
    %3788 = vmatprep.subr.mxu0 0.0
    %3789 = vmatpush1.msra.mxu0 0.0
    %3790 = vmatprep.subr.mxu0 0.0
    %3791 = vmatpush1.msra.mxu0 0.0
    %3792 = vmatprep.subr.mxu0 0.0
    %3793 = vmatpush1.msra.mxu0 0.0
    %3794 = vmatprep.subr.mxu0 0.0
    %3795 = vmatpush1.msra.mxu0 0.0
    %3796 = vmatprep.subr.mxu0 0.0
    %3797 = vmatpush1.msra.mxu0 0.0
    %3798 = vmatprep.subr.mxu0 0.0
    %3799 = vmatpush1.msra.mxu0 0.0
    %3800 = vmatprep.subr.mxu0 0.0
    %3801 = vmatpush1.msra.mxu0 0.0
    %3802 = vmatprep.subr.mxu0 0.0
    %3803 = vmatpush1.msra.mxu0 0.0
    %3804 = vmatprep.subr.mxu0 0.0
    %3805 = vmatpush1.msra.mxu0 0.0
    %3806 = vmatprep.subr.mxu0 0.0
    %3807 = vmatpush1.msra.mxu0 0.0
    %3808 = vmatprep.subr.mxu0 0.0
    %3809 = vmatpush1.msra.mxu0 0.0
    %3810 = vmatprep.subr.mxu0 0.0
    %3811 = vmatpush1.msra.mxu0 0.0
    %3812 = vmatprep.subr.mxu0 0.0
    %3813 = vmatpush1.msra.mxu0 0.0
    %3814 = vmatprep.mubr.f32.mxu0 0.0
    %3815 = vmatmul.mubr.f32.gmra.mrb[0].mxu0 %v3606
    %v3816 = vpop.f32.mrb[0].mxu0
    %v3817 = vadd.f32 %v941, %v3816
    %v3818 = vpop.f32.mrb[0].mxu0
    %v3819 = vadd.f32 %v945, %v3818
    %3820 = vdwg.mxu0
    %v3821 = vadd.f32 %v3675, %v3486
    %v3822 = vadd.f32 %v3677, %v3488
    %v3823 = vxor.u32 %v3821, 2147483648
    %v3824 = vxor.u32 %v3822, 2147483648
    %v3825 = vmul.f32 %v3823, 1.442695
    %v3826 = vpow.pop %v3825
    %v3827 = vmul.f32 %v3824, 1.442695
    %v3828 = vpow.pop %v3827
    %v3829 = vadd.f32 %v3826, 1.0
    %v3830 = vadd.f32 %v3828, 1.0
    %v3831 = vrcp.pop %v3829
    %v3832 = vmul.f32 1.0, %v3831
    %v3833 = vrcp.pop %v3830
    %v3834 = vmul.f32 1.0, %v3833
    %v3835 = vmul.f32 %v3832, %v3557
    %v3836 = vadd.f32 %v3746, %v3835
    %v3837 = vtanh.pop %v3836
    %v3838 = vsub.f32 1.0, %v3834
    %v3839 = vmul.f32 %v3838, %v3837
    %v3840 = vmul.f32 %v3834, %v3399
    %v3841 = vadd.f32 %v3839, %v3840
    %3842 = vst.msk [vmem:[#allocation3 + $0x30] sm:$0x3] %vm1189, %v3841
    %v3843 = vld [vmem:[#allocation2 + $0xa8] sm:$0x3]
    %v3844 = vld [vmem:[#allocation2 + $0xb0] sm:$0x3]
    %v3845 = vld [vmem:[#allocation2 + $0xb8] sm:$0x3]
    %v3846 = vld [vmem:[#allocation7 + $0x30] sm:$0xff]
    %v3847 = vld [vmem:[#allocation7 + $0x38] sm:$0xff]
    %v3848 = vld [vmem:[#allocation7 + $0x40] sm:$0xff]
    %v3849 = vld [vmem:[#allocation7 + $0x80] sm:$0xff]
    %v3850 = vld [vmem:[#allocation7 + $0x88] sm:$0xff]
    %v3851 = vld [vmem:[#allocation7 + $0x90] sm:$0xff]
    %v3852 = vld [vmem:[#allocation7 + $0xd0] sm:$0xff]
    %v3853 = vld [vmem:[#allocation7 + $0xd8] sm:$0xff]
    %v3854 = vld [vmem:[#allocation7 + $0xe0] sm:$0xff]
    %v3855 = vld [vmem:[#allocation7 + $0x120] sm:$0xff]
    %v3856 = vld [vmem:[#allocation7 + $0x128] sm:$0xff]
    %v3857 = vld [vmem:[#allocation7 + $0x130] sm:$0xff]
    %v3859 = vsel %vm548, %v3841, 0
    %3861 = vmatprep.subr.mxu0 %v3847
    %3862 = vmatpush1.msra.mxu0 %v3846
    %3863 = vmatprep.subr.mxu0 %v3850
    %3864 = vmatpush1.msra.mxu0 %v3849
    %3865 = vmatprep.subr.mxu0 %v3853
    %3866 = vmatpush1.msra.mxu0 %v3852
    %3867 = vmatprep.subr.mxu0 %v3856
    %3868 = vmatpush1.msra.mxu0 %v3855
    %3869 = vmatprep.subr.mxu0 0.0
    %3870 = vmatpush1.msra.mxu0 0.0
    %3871 = vmatprep.subr.mxu0 0.0
    %3872 = vmatpush1.msra.mxu0 0.0
    %3873 = vmatprep.subr.mxu0 0.0
    %3874 = vmatpush1.msra.mxu0 0.0
    %3875 = vmatprep.subr.mxu0 0.0
    %3876 = vmatpush1.msra.mxu0 0.0
    %3877 = vmatprep.subr.mxu0 0.0
    %3878 = vmatpush1.msra.mxu0 0.0
    %3879 = vmatprep.subr.mxu0 0.0
    %3880 = vmatpush1.msra.mxu0 0.0
    %3881 = vmatprep.subr.mxu0 0.0
    %3882 = vmatpush1.msra.mxu0 0.0
    %3883 = vmatprep.subr.mxu0 0.0
    %3884 = vmatpush1.msra.mxu0 0.0
    %3885 = vmatprep.subr.mxu0 0.0
    %3886 = vmatpush1.msra.mxu0 0.0
    %3887 = vmatprep.subr.mxu0 0.0
    %3888 = vmatpush1.msra.mxu0 0.0
    %3889 = vmatprep.subr.mxu0 0.0
    %3890 = vmatpush1.msra.mxu0 0.0
    %3891 = vmatprep.subr.mxu0 0.0
    %3892 = vmatpush1.msra.mxu0 0.0
    %3893 = vmatprep.subr.mxu0 0.0
    %3894 = vmatpush1.msra.mxu0 0.0
    %3895 = vmatprep.subr.mxu0 0.0
    %3896 = vmatpush1.msra.mxu0 0.0
    %3897 = vmatprep.subr.mxu0 0.0
    %3898 = vmatpush1.msra.mxu0 0.0
    %3899 = vmatprep.subr.mxu0 0.0
    %3900 = vmatpush1.msra.mxu0 0.0
    %3901 = vmatprep.subr.mxu0 0.0
    %3902 = vmatpush1.msra.mxu0 0.0
    %3903 = vmatprep.subr.mxu0 0.0
    %3904 = vmatpush1.msra.mxu0 0.0
    %3905 = vmatprep.subr.mxu0 0.0
    %3906 = vmatpush1.msra.mxu0 0.0
    %3907 = vmatprep.subr.mxu0 0.0
    %3908 = vmatpush1.msra.mxu0 0.0
    %3909 = vmatprep.subr.mxu0 0.0
    %3910 = vmatpush1.msra.mxu0 0.0
    %3911 = vmatprep.subr.mxu0 0.0
    %3912 = vmatpush1.msra.mxu0 0.0
    %3913 = vmatprep.subr.mxu0 0.0
    %3914 = vmatpush1.msra.mxu0 0.0
    %3915 = vmatprep.subr.mxu0 0.0
    %3916 = vmatpush1.msra.mxu0 0.0
    %3917 = vmatprep.subr.mxu0 0.0
    %3918 = vmatpush1.msra.mxu0 0.0
    %3919 = vmatprep.subr.mxu0 0.0
    %3920 = vmatpush1.msra.mxu0 0.0
    %3921 = vmatprep.subr.mxu0 0.0
    %3922 = vmatpush1.msra.mxu0 0.0
    %3923 = vmatprep.subr.mxu0 0.0
    %3924 = vmatpush1.msra.mxu0 0.0
    %3925 = vmatprep.mubr.f32.mxu0 0.0
    %3926 = vmatmul.mubr.f32.gmra.mrb[0].mxu0 %v3859
    %v3927 = vpop.f32.mrb[0].mxu0
    %v3928 = vadd.f32 %v720, %v3927
    %v3929 = vpop.f32.mrb[0].mxu0
    %v3930 = vadd.f32 %v724, %v3929
    %3931 = vdwg.mxu0
    %3932 = vmatprep.subr.mxu0 0.0
    %3933 = vmatpush1.msra.mxu0 %v3848
    %3934 = vmatprep.subr.mxu0 0.0
    %3935 = vmatpush1.msra.mxu0 %v3851
    %3936 = vmatprep.subr.mxu0 0.0
    %3937 = vmatpush1.msra.mxu0 %v3854
    %3938 = vmatprep.subr.mxu0 0.0
    %3939 = vmatpush1.msra.mxu0 %v3857
    %3940 = vmatprep.subr.mxu0 0.0
    %3941 = vmatpush1.msra.mxu0 0.0
    %3942 = vmatprep.subr.mxu0 0.0
    %3943 = vmatpush1.msra.mxu0 0.0
    %3944 = vmatprep.subr.mxu0 0.0
    %3945 = vmatpush1.msra.mxu0 0.0
    %3946 = vmatprep.subr.mxu0 0.0
    %3947 = vmatpush1.msra.mxu0 0.0
    %3948 = vmatprep.subr.mxu0 0.0
    %3949 = vmatpush1.msra.mxu0 0.0
    %3950 = vmatprep.subr.mxu0 0.0
    %3951 = vmatpush1.msra.mxu0 0.0
    %3952 = vmatprep.subr.mxu0 0.0
    %3953 = vmatpush1.msra.mxu0 0.0
    %3954 = vmatprep.subr.mxu0 0.0
    %3955 = vmatpush1.msra.mxu0 0.0
    %3956 = vmatprep.subr.mxu0 0.0
    %3957 = vmatpush1.msra.mxu0 0.0
    %3958 = vmatprep.subr.mxu0 0.0
    %3959 = vmatpush1.msra.mxu0 0.0
    %3960 = vmatprep.subr.mxu0 0.0
    %3961 = vmatpush1.msra.mxu0 0.0
    %3962 = vmatprep.subr.mxu0 0.0
    %3963 = vmatpush1.msra.mxu0 0.0
    %3964 = vmatprep.subr.mxu0 0.0
    %3965 = vmatpush1.msra.mxu0 0.0
    %3966 = vmatprep.subr.mxu0 0.0
    %3967 = vmatpush1.msra.mxu0 0.0
    %3968 = vmatprep.subr.mxu0 0.0
    %3969 = vmatpush1.msra.mxu0 0.0
    %3970 = vmatprep.subr.mxu0 0.0
    %3971 = vmatpush1.msra.mxu0 0.0
    %3972 = vmatprep.subr.mxu0 0.0
    %3973 = vmatpush1.msra.mxu0 0.0
    %3974 = vmatprep.subr.mxu0 0.0
    %3975 = vmatpush1.msra.mxu0 0.0
    %3976 = vmatprep.subr.mxu0 0.0
    %3977 = vmatpush1.msra.mxu0 0.0
    %3978 = vmatprep.subr.mxu0 0.0
    %3979 = vmatpush1.msra.mxu0 0.0
    %3980 = vmatprep.subr.mxu0 0.0
    %3981 = vmatpush1.msra.mxu0 0.0
    %3982 = vmatprep.subr.mxu0 0.0
    %3983 = vmatpush1.msra.mxu0 0.0
    %3984 = vmatprep.subr.mxu0 0.0
    %3985 = vmatpush1.msra.mxu0 0.0
    %3986 = vmatprep.subr.mxu0 0.0
    %3987 = vmatpush1.msra.mxu0 0.0
    %3988 = vmatprep.subr.mxu0 0.0
    %3989 = vmatpush1.msra.mxu0 0.0
    %3990 = vmatprep.subr.mxu0 0.0
    %3991 = vmatpush1.msra.mxu0 0.0
    %3992 = vmatprep.subr.mxu0 0.0
    %3993 = vmatpush1.msra.mxu0 0.0
    %3994 = vmatprep.subr.mxu0 0.0
    %3995 = vmatpush1.msra.mxu0 0.0
    %3996 = vmatprep.mubr.f32.mxu0 0.0
    %3997 = vmatmul.mubr.f32.gmra.mrb[0].mxu0 %v3859
    %v3998 = vpop.f32.mrb[0].mxu0
    %v3999 = vadd.f32 %v728, %v3998
    %v4000 = vpop.f32.mrb[0].mxu0
    %4001 = vdwg.mxu0
    %v4002 = vadd.f32 %v3843, %v3748
    %v4003 = vadd.f32 %v3844, %v3817
    %v4004 = vxor.u32 %v4002, 2147483648
    %v4005 = vxor.u32 %v4003, 2147483648
    %v4006 = vmul.f32 %v4004, 1.442695
    %v4007 = vpow.pop %v4006
    %v4008 = vmul.f32 %v4005, 1.442695
    %v4009 = vpow.pop %v4008
    %v4010 = vadd.f32 %v4007, 1.0
    %v4011 = vadd.f32 %v4009, 1.0
    %v4012 = vrcp.pop %v4010
    %v4013 = vmul.f32 1.0, %v4012
    %v4014 = vrcp.pop %v4011
    %v4015 = vmul.f32 1.0, %v4014
    %v4016 = vmul.f32 %v4013, %v3819
    %v4017 = vadd.f32 %v3845, %v4016
    %v4018 = vtanh.pop %v4017
    %v4019 = vsub.f32 1.0, %v4015
    %v4020 = vmul.f32 %v4019, %v4018
    %v4021 = vmul.f32 %v4015, %v3580
    %v4022 = vadd.f32 %v4020, %v4021
    %v4023 = vld [vmem:[#allocation7] sm:$0xff]
    %v4024 = vld [vmem:[#allocation7 + $0x8] sm:$0xff]
    %v4025 = vld [vmem:[#allocation7 + $0x10] sm:$0xff]
    %v4026 = vld [vmem:[#allocation7 + $0x18] sm:$0xff]
    %v4027 = vld [vmem:[#allocation7 + $0x50] sm:$0xff]
    %v4028 = vld [vmem:[#allocation7 + $0x58] sm:$0xff]
    %v4029 = vld [vmem:[#allocation7 + $0x60] sm:$0xff]
    %v4030 = vld [vmem:[#allocation7 + $0x68] sm:$0xff]
    %v4031 = vld [vmem:[#allocation7 + $0xa0] sm:$0xff]
    %v4032 = vld [vmem:[#allocation7 + $0xa8] sm:$0xff]
    %v4033 = vld [vmem:[#allocation7 + $0xb0] sm:$0xff]
    %v4034 = vld [vmem:[#allocation7 + $0xb8] sm:$0xff]
    %v4035 = vld [vmem:[#allocation7 + $0xf0] sm:$0xff]
    %v4036 = vld [vmem:[#allocation7 + $0xf8] sm:$0xff]
    %v4037 = vld [vmem:[#allocation7 + $0x100] sm:$0xff]
    %v4038 = vld [vmem:[#allocation7 + $0x108] sm:$0xff]
    %v4040 = vsel %vm548, %v4022, 0
    %4042 = vmatprep.subr.mxu0 %v4024
    %4043 = vmatpush1.msra.mxu0 %v4023
    %4044 = vmatprep.subr.mxu0 %v4028
    %4045 = vmatpush1.msra.mxu0 %v4027
    %4046 = vmatprep.subr.mxu0 %v4032
    %4047 = vmatpush1.msra.mxu0 %v4031
    %4048 = vmatprep.subr.mxu0 %v4036
    %4049 = vmatpush1.msra.mxu0 %v4035
    %4050 = vmatprep.subr.mxu0 0.0
    %4051 = vmatpush1.msra.mxu0 0.0
    %4052 = vmatprep.subr.mxu0 0.0
    %4053 = vmatpush1.msra.mxu0 0.0
    %4054 = vmatprep.subr.mxu0 0.0
    %4055 = vmatpush1.msra.mxu0 0.0
    %4056 = vmatprep.subr.mxu0 0.0
    %4057 = vmatpush1.msra.mxu0 0.0
    %4058 = vmatprep.subr.mxu0 0.0
    %4059 = vmatpush1.msra.mxu0 0.0
    %4060 = vmatprep.subr.mxu0 0.0
    %4061 = vmatpush1.msra.mxu0 0.0
    %4062 = vmatprep.subr.mxu0 0.0
    %4063 = vmatpush1.msra.mxu0 0.0
    %4064 = vmatprep.subr.mxu0 0.0
    %4065 = vmatpush1.msra.mxu0 0.0
    %4066 = vmatprep.subr.mxu0 0.0
    %4067 = vmatpush1.msra.mxu0 0.0
    %4068 = vmatprep.subr.mxu0 0.0
    %4069 = vmatpush1.msra.mxu0 0.0
    %4070 = vmatprep.subr.mxu0 0.0
    %4071 = vmatpush1.msra.mxu0 0.0
    %4072 = vmatprep.subr.mxu0 0.0
    %4073 = vmatpush1.msra.mxu0 0.0
    %4074 = vmatprep.subr.mxu0 0.0
    %4075 = vmatpush1.msra.mxu0 0.0
    %4076 = vmatprep.subr.mxu0 0.0
    %4077 = vmatpush1.msra.mxu0 0.0
    %4078 = vmatprep.subr.mxu0 0.0
    %4079 = vmatpush1.msra.mxu0 0.0
    %4080 = vmatprep.subr.mxu0 0.0
    %4081 = vmatpush1.msra.mxu0 0.0
    %4082 = vmatprep.subr.mxu0 0.0
    %4083 = vmatpush1.msra.mxu0 0.0
    %4084 = vmatprep.subr.mxu0 0.0
    %4085 = vmatpush1.msra.mxu0 0.0
    %4086 = vmatprep.subr.mxu0 0.0
    %4087 = vmatpush1.msra.mxu0 0.0
    %4088 = vmatprep.subr.mxu0 0.0
    %4089 = vmatpush1.msra.mxu0 0.0
    %4090 = vmatprep.subr.mxu0 0.0
    %4091 = vmatpush1.msra.mxu0 0.0
    %4092 = vmatprep.subr.mxu0 0.0
    %4093 = vmatpush1.msra.mxu0 0.0
    %4094 = vmatprep.subr.mxu0 0.0
    %4095 = vmatpush1.msra.mxu0 0.0
    %4096 = vmatprep.subr.mxu0 0.0
    %4097 = vmatpush1.msra.mxu0 0.0
    %4098 = vmatprep.subr.mxu0 0.0
    %4099 = vmatpush1.msra.mxu0 0.0
    %4100 = vmatprep.subr.mxu0 0.0
    %4101 = vmatpush1.msra.mxu0 0.0
    %4102 = vmatprep.subr.mxu0 0.0
    %4103 = vmatpush1.msra.mxu0 0.0
    %4104 = vmatprep.subr.mxu0 0.0
    %4105 = vmatpush1.msra.mxu0 0.0
    %4106 = vmatprep.mubr.f32.mxu0 0.0
    %4107 = vmatmul.mubr.f32.gmra.mrb[0].mxu0 %v4040
    %v4108 = vpop.f32.mrb[0].mxu0
    %v4109 = vadd.f32 %v925, %v4108
    %v4110 = vpop.f32.mrb[0].mxu0
    %v4111 = vadd.f32 %v929, %v4110
    %4112 = vdwg.mxu0
    %4113 = vmatprep.subr.mxu0 %v4026
    %4114 = vmatpush1.msra.mxu0 %v4025
    %4115 = vmatprep.subr.mxu0 %v4030
    %4116 = vmatpush1.msra.mxu0 %v4029
    %4117 = vmatprep.subr.mxu0 %v4034
    %4118 = vmatpush1.msra.mxu0 %v4033
    %4119 = vmatprep.subr.mxu0 %v4038
    %4120 = vmatpush1.msra.mxu0 %v4037
    %4121 = vmatprep.subr.mxu0 0.0
    %4122 = vmatpush1.msra.mxu0 0.0
    %4123 = vmatprep.subr.mxu0 0.0
    %4124 = vmatpush1.msra.mxu0 0.0
    %4125 = vmatprep.subr.mxu0 0.0
    %4126 = vmatpush1.msra.mxu0 0.0
    %4127 = vmatprep.subr.mxu0 0.0
    %4128 = vmatpush1.msra.mxu0 0.0
    %4129 = vmatprep.subr.mxu0 0.0
    %4130 = vmatpush1.msra.mxu0 0.0
    %4131 = vmatprep.subr.mxu0 0.0
    %4132 = vmatpush1.msra.mxu0 0.0
    %4133 = vmatprep.subr.mxu0 0.0
    %4134 = vmatpush1.msra.mxu0 0.0
    %4135 = vmatprep.subr.mxu0 0.0
    %4136 = vmatpush1.msra.mxu0 0.0
    %4137 = vmatprep.subr.mxu0 0.0
    %4138 = vmatpush1.msra.mxu0 0.0
    %4139 = vmatprep.subr.mxu0 0.0
    %4140 = vmatpush1.msra.mxu0 0.0
    %4141 = vmatprep.subr.mxu0 0.0
    %4142 = vmatpush1.msra.mxu0 0.0
    %4143 = vmatprep.subr.mxu0 0.0
    %4144 = vmatpush1.msra.mxu0 0.0
    %4145 = vmatprep.subr.mxu0 0.0
    %4146 = vmatpush1.msra.mxu0 0.0
    %4147 = vmatprep.subr.mxu0 0.0
    %4148 = vmatpush1.msra.mxu0 0.0
    %4149 = vmatprep.subr.mxu0 0.0
    %4150 = vmatpush1.msra.mxu0 0.0
    %4151 = vmatprep.subr.mxu0 0.0
    %4152 = vmatpush1.msra.mxu0 0.0
    %4153 = vmatprep.subr.mxu0 0.0
    %4154 = vmatpush1.msra.mxu0 0.0
    %4155 = vmatprep.subr.mxu0 0.0
    %4156 = vmatpush1.msra.mxu0 0.0
    %4157 = vmatprep.subr.mxu0 0.0
    %4158 = vmatpush1.msra.mxu0 0.0
    %4159 = vmatprep.subr.mxu0 0.0
    %4160 = vmatpush1.msra.mxu0 0.0
    %4161 = vmatprep.subr.mxu0 0.0
    %4162 = vmatpush1.msra.mxu0 0.0
    %4163 = vmatprep.subr.mxu0 0.0
    %4164 = vmatpush1.msra.mxu0 0.0
    %4165 = vmatprep.subr.mxu0 0.0
    %4166 = vmatpush1.msra.mxu0 0.0
    %4167 = vmatprep.subr.mxu0 0.0
    %4168 = vmatpush1.msra.mxu0 0.0
    %4169 = vmatprep.subr.mxu0 0.0
    %4170 = vmatpush1.msra.mxu0 0.0
    %4171 = vmatprep.subr.mxu0 0.0
    %4172 = vmatpush1.msra.mxu0 0.0
    %4173 = vmatprep.subr.mxu0 0.0
    %4174 = vmatpush1.msra.mxu0 0.0
    %4175 = vmatprep.subr.mxu0 0.0
    %4176 = vmatpush1.msra.mxu0 0.0
    %4177 = vmatprep.mubr.f32.mxu0 0.0
    %4178 = vmatmul.mubr.f32.gmra.mrb[0].mxu0 %v4040
    %v4179 = vpop.f32.mrb[0].mxu0
    %v4180 = vadd.f32 %v933, %v4179
    %v4181 = vpop.f32.mrb[0].mxu0
    %4182 = vdwg.mxu0
    %v4183 = vadd.f32 %v4109, %v3928
    %v4184 = vadd.f32 %v4111, %v3930
    %v4185 = vxor.u32 %v4183, 2147483648
    %v4186 = vxor.u32 %v4184, 2147483648
    %v4187 = vmul.f32 %v4185, 1.442695
    %v4188 = vpow.pop %v4187
    %v4189 = vmul.f32 %v4186, 1.442695
    %v4190 = vpow.pop %v4189
    %v4191 = vadd.f32 %v4188, 1.0
    %v4192 = vadd.f32 %v4190, 1.0
    %v4193 = vrcp.pop %v4191
    %v4194 = vmul.f32 1.0, %v4193
    %v4195 = vrcp.pop %v4192
    %v4196 = vmul.f32 1.0, %v4195
    %v4197 = vmul.f32 %v4194, %v3999
    %v4198 = vadd.f32 %v4180, %v4197
    %v4199 = vtanh.pop %v4198
    %v4200 = vsub.f32 1.0, %v4196
    %v4201 = vmul.f32 %v4200, %v4199
    %v4202 = vmul.f32 %v4196, %v3841
    %v4203 = vadd.f32 %v4201, %v4202
    %4204 = vst.msk [vmem:[#allocation3 + $0x38] sm:$0x3] %vm1189, %v4203
    %v4205 = vld [vmem:[#allocation3] sm:$0xff]
    %v4206 = vld [vmem:[#allocation3 + $0x8] sm:$0xff]
    %v4207 = vld [vmem:[#allocation3 + $0x10] sm:$0xff]
    %v4208 = vld [vmem:[#allocation3 + $0x18] sm:$0xff]
    %v4209 = vld [vmem:[#allocation3 + $0x20] sm:$0xff]
    %v4210 = vld [vmem:[#allocation3 + $0x28] sm:$0xff]
    %v4211 = vld [vmem:[#allocation3 + $0x30] sm:$0xff]
    %v4212 = vld [vmem:[#allocation3 + $0x38] sm:$0xff]
    %v4213 = vld [vmem:[#allocation7 + $0x48] sm:$0xff]
    %v4214 = vld [vmem:[#allocation7 + $0x98] sm:$0xff]
    %v4215 = vld [vmem:[#allocation7 + $0xe8] sm:$0xff]
    %v4216 = vld [vmem:[#allocation7 + $0x138] sm:$0xff]
    %v4217 = vld [vmem:[%s4 + $0x4] ss:$0 sm:$0xff]
    %v4219 = vsel %vm548, %v4205, 0
    %v4222 = vsel %vm548, %v4206, 0
    %v4225 = vsel %vm548, %v4207, 0
    %v4228 = vsel %vm548, %v4208, 0
    %v4231 = vsel %vm548, %v4209, 0
    %v4234 = vsel %vm548, %v4210, 0
    %v4237 = vsel %vm548, %v4211, 0
    %v4240 = vsel %vm548, %v4212, 0
    %4242 = vmatprep.subr.mxu0 0.0
    %4243 = vmatpush1.msra.mxu0 %v4213
    %4244 = vmatprep.subr.mxu0 0.0
    %4245 = vmatpush1.msra.mxu0 %v4214
    %4246 = vmatprep.subr.mxu0 0.0
    %4247 = vmatpush1.msra.mxu0 %v4215
    %4248 = vmatprep.subr.mxu0 0.0
    %4249 = vmatpush1.msra.mxu0 %v4216
    %4250 = vmatprep.subr.mxu0 0.0
    %4251 = vmatpush1.msra.mxu0 0.0
    %4252 = vmatprep.subr.mxu0 0.0
    %4253 = vmatpush1.msra.mxu0 0.0
    %4254 = vmatprep.subr.mxu0 0.0
    %4255 = vmatpush1.msra.mxu0 0.0
    %4256 = vmatprep.subr.mxu0 0.0
    %4257 = vmatpush1.msra.mxu0 0.0
    %4258 = vmatprep.subr.mxu0 0.0
    %4259 = vmatpush1.msra.mxu0 0.0
    %4260 = vmatprep.subr.mxu0 0.0
    %4261 = vmatpush1.msra.mxu0 0.0
    %4262 = vmatprep.subr.mxu0 0.0
    %4263 = vmatpush1.msra.mxu0 0.0
    %4264 = vmatprep.subr.mxu0 0.0
    %4265 = vmatpush1.msra.mxu0 0.0
    %4266 = vmatprep.subr.mxu0 0.0
    %4267 = vmatpush1.msra.mxu0 0.0
    %4268 = vmatprep.subr.mxu0 0.0
    %4269 = vmatpush1.msra.mxu0 0.0
    %4270 = vmatprep.subr.mxu0 0.0
    %4271 = vmatpush1.msra.mxu0 0.0
    %4272 = vmatprep.subr.mxu0 0.0
    %4273 = vmatpush1.msra.mxu0 0.0
    %4274 = vmatprep.subr.mxu0 0.0
    %4275 = vmatpush1.msra.mxu0 0.0
    %4276 = vmatprep.subr.mxu0 0.0
    %4277 = vmatpush1.msra.mxu0 0.0
    %4278 = vmatprep.subr.mxu0 0.0
    %4279 = vmatpush1.msra.mxu0 0.0
    %4280 = vmatprep.subr.mxu0 0.0
    %4281 = vmatpush1.msra.mxu0 0.0
    %4282 = vmatprep.subr.mxu0 0.0
    %4283 = vmatpush1.msra.mxu0 0.0
    %4284 = vmatprep.subr.mxu0 0.0
    %4285 = vmatpush1.msra.mxu0 0.0
    %4286 = vmatprep.subr.mxu0 0.0
    %4287 = vmatpush1.msra.mxu0 0.0
    %4288 = vmatprep.subr.mxu0 0.0
    %4289 = vmatpush1.msra.mxu0 0.0
    %4290 = vmatprep.subr.mxu0 0.0
    %4291 = vmatpush1.msra.mxu0 0.0
    %4292 = vmatprep.subr.mxu0 0.0
    %4293 = vmatpush1.msra.mxu0 0.0
    %4294 = vmatprep.subr.mxu0 0.0
    %4295 = vmatpush1.msra.mxu0 0.0
    %4296 = vmatprep.subr.mxu0 0.0
    %4297 = vmatpush1.msra.mxu0 0.0
    %4298 = vmatprep.subr.mxu0 0.0
    %4299 = vmatpush1.msra.mxu0 0.0
    %4300 = vmatprep.subr.mxu0 0.0
    %4301 = vmatpush1.msra.mxu0 0.0
    %4302 = vmatprep.subr.mxu0 0.0
    %4303 = vmatpush1.msra.mxu0 0.0
    %4304 = vmatprep.subr.mxu0 0.0
    %4305 = vmatpush1.msra.mxu0 0.0
    %4306 = vmatprep.mubr.f32.mxu0 0.0
    %4307 = vmatmul.mubr.f32.gmra.mrb[0].mxu0 %v4219
    %v4308 = vpop.f32.mrb[0].mxu0
    %v4309 = vadd.f32 %v4217, %v4308
    %v4310 = vpop.f32.mrb[0].mxu0
    %4311 = vmatprep.mubr.f32.mxu0 0.0
    %4312 = vmatmul.mubr.f32.gmra.mrb[0].mxu0 %v4222
    %v4313 = vpop.f32.mrb[0].mxu0
    %v4314 = vadd.f32 %v4217, %v4313
    %v4315 = vpop.f32.mrb[0].mxu0
    %4316 = vmatprep.mubr.f32.mxu0 0.0
    %4317 = vmatmul.mubr.f32.gmra.mrb[0].mxu0 %v4225
    %v4318 = vpop.f32.mrb[0].mxu0
    %v4319 = vadd.f32 %v4217, %v4318
    %v4320 = vpop.f32.mrb[0].mxu0
    %4321 = vmatprep.mubr.f32.mxu0 0.0
    %4322 = vmatmul.mubr.f32.gmra.mrb[0].mxu0 %v4228
    %v4323 = vpop.f32.mrb[0].mxu0
    %v4324 = vadd.f32 %v4217, %v4323
    %v4325 = vpop.f32.mrb[0].mxu0
    %4326 = vmatprep.mubr.f32.mxu0 0.0
    %4327 = vmatmul.mubr.f32.gmra.mrb[0].mxu0 %v4231
    %v4328 = vpop.f32.mrb[0].mxu0
    %v4329 = vadd.f32 %v4217, %v4328
    %v4330 = vpop.f32.mrb[0].mxu0
    %4331 = vmatprep.mubr.f32.mxu0 0.0
    %4332 = vmatmul.mubr.f32.gmra.mrb[0].mxu0 %v4234
    %v4333 = vpop.f32.mrb[0].mxu0
    %v4334 = vadd.f32 %v4217, %v4333
    %v4335 = vpop.f32.mrb[0].mxu0
    %4336 = vmatprep.mubr.f32.mxu0 0.0
    %4337 = vmatmul.mubr.f32.gmra.mrb[0].mxu0 %v4237
    %v4338 = vpop.f32.mrb[0].mxu0
    %v4339 = vadd.f32 %v4217, %v4338
    %v4340 = vpop.f32.mrb[0].mxu0
    %4341 = vmatprep.mubr.f32.mxu0 0.0
    %4342 = vmatmul.mubr.f32.gmra.mrb[0].mxu0 %v4240
    %v4343 = vpop.f32.mrb[0].mxu0
    %v4344 = vadd.f32 %v4217, %v4343
    %v4345 = vpop.f32.mrb[0].mxu0
    %4346 = vdwg.mxu0
    %vm4347 = vcmask 31744
    %4348 = vst.msk [vmem:[%s5] sm:$0xff] %vm4347, %v4309
    %4349 = vst.msk [vmem:[%s5 + $0x8] sm:$0xff] %vm4347, %v4314
    %4350 = vst.msk [vmem:[%s5 + $0x10] sm:$0xff] %vm4347, %v4319
    %4351 = vst.msk [vmem:[%s5 + $0x18] sm:$0xff] %vm4347, %v4324
    %4352 = vst.msk [vmem:[%s5 + $0x20] sm:$0xff] %vm4347, %v4329
    %4353 = vst.msk [vmem:[%s5 + $0x28] sm:$0xff] %vm4347, %v4334
    %4354 = vst.msk [vmem:[%s5 + $0x30] sm:$0xff] %vm4347, %v4339
    %4355 = vst.msk [vmem:[%s5 + $0x38] sm:$0xff] %vm4347, %v4344
    %4356 = vst.msk [vmem:[#allocation9] sm:$0x3] %vm1189, %v4022
    %s4357 = scalar_lea.vmem [#allocation9], 2
    %4358 = vst.msk [vmem:[%s4357] sm:$0x3] %vm1189, %v4203
    // Predicated region
    $region30: #{gru_q_net_forward.1} parent=1 // pred_check
      _
    $region31: #{gru_q_net_forward.1} parent=1 // pred_check_branch
      %4360 = sbr.rel (0) target = $region33
    $region32: #{gru_q_net_forward.1} parent=1 // pred_region
      _
    $region33: #{gru_q_net_forward.1} parent=1 // pred_fallthru
      _
    // Predicated region
    $region34: #{gru_q_net_forward.1} parent=1 // pred_check
      _
    $region35: #{gru_q_net_forward.1} parent=1 // pred_check_branch
      %4362 = sbr.rel (0) target = $region37
    $region36: #{gru_q_net_forward.1} parent=1 // pred_region
      %s4364 = ssub.s32 64, 64
      %4365 = vsyncadd [#allocation6], %s4364
      %s4366 = sshll.u32 [#allocation9], 4
      %s4367 = int_to_ptr.vmem [resolvable:$true] %s4366
      %4372 = dma.vmem_to_hbm [thread:$0]  %s4367, 64, %s6, [#allocation6], 32, 32, 2
    $region37: #{gru_q_net_forward.1} parent=1 // pred_fallthru
      _
    // Predicated region
    $region38: #{gru_q_net_forward.1} parent=1 // pred_check
      _
    $region39: #{gru_q_net_forward.1} parent=1 // pred_check_branch
      %4374 = sbr.rel (0) target = $region41
    $region40: #{gru_q_net_forward.1} parent=1 // pred_region
      _
    $region41: #{gru_q_net_forward.1} parent=1 // pred_fallthru
      _
    // Predicated region
    $region42: #{gru_q_net_forward.1} parent=1 // pred_check
      _
    $region43: #{gru_q_net_forward.1} parent=1 // pred_check_branch
      %4376 = sbr.rel (0) target = $region45
    $region44: #{gru_q_net_forward.1} parent=1 // pred_region
      %4377 = dma.done [#allocation6], 64
    $region45: #{gru_q_net_forward.1} parent=1 // pred_fallthru
      _
    %4378 = vsyncpa [#allocation5], 1
    %4379 = vsyncpa [#allocation8], 1
    %4380 = vsyncpa [#allocation6], 1

</llo_original>
